<compile_context>
chip_gen: v7x
topology: tpu7x:2x2x1
jax: 0.10.0
libtpu: 0.0.40
codegen_flags: <defaults>
</compile_context>

<pallas_src>
import math

import jax
import jax.numpy as jnp
from jax import lax
from jax.experimental import pallas as pl
from jax.experimental.pallas import tpu as pltpu

_BF16 = jnp.bfloat16


def _parallel(n=1):
    return pltpu.CompilerParams(dimension_semantics=("parallel",) * n)


def _ceil_log2(n):
    return max(1, (n - 1).bit_length())


# --------------------------- in-kernel helpers ---------------------------

def _shift_edge(x, off):
    """y[t] = x[clip(t + off, 0, L-1)] along the time (sublane) axis; `off` is static."""
    L = x.shape[0]
    off = max(-(L - 1), min(off, L - 1))
    if off == 0:
        return x
    if off > 0:
        return jnp.concatenate([x[off:, :]] + [x[L - 1:, :]] * off, axis=0)
    off = -off
    return jnp.concatenate([x[:1, :]] * off + [x[:L - off, :]], axis=0)


def _moving_mean(x, k_size):
    """Edge-replicated moving average along time (== AvgPool1d on the padded series)."""
    L, D = x.shape
    p = (k_size - 1) // 2
    if p == 0:
        return x
    if k_size <= _ceil_log2(L) + 4:
        # small window: direct k-term sum (cheapest at these sizes)
        acc = _shift_edge(x, -p)
        for off in range(-p + 1, p + 1):
            acc = acc + _shift_edge(x, off)
        return acc * (1.0 / k_size)
    # large window (e.g. Autoformer default moving_avg=25): O(log L) prefix sum
    pref = x
    step = 1
    while step < L:
        pref = pref + jnp.concatenate(
            [jnp.zeros((step, D), pref.dtype), pref[:L - step, :]], axis=0)
        step *= 2
    hi = _shift_edge(pref, p)                       # P[min(t+p, L-1)]
    if p + 1 >= L:
        lo = jnp.zeros_like(pref)
    else:                                           # P[t-p-1] (0 when t-p-1 < 0)
        lo = jnp.concatenate(
            [jnp.zeros((p + 1, D), pref.dtype), pref[:L - (p + 1), :]], axis=0)
    t_idx = lax.broadcasted_iota(jnp.int32, (L, 1), 0)
    c_lo = jnp.maximum(p - t_idx, 0).astype(jnp.float32)          # clipped-to-front taps
    c_hi = jnp.maximum(t_idx + p - (L - 1), 0).astype(jnp.float32)  # clipped-to-back taps
    acc = hi - lo + c_lo * x[:1, :] + c_hi * x[L - 1:, :]
    return acc * (1.0 / k_size)


def _corr_mean(q, k):
    """mean over d_model channels of the circular auto-correlation:
       out[tau] = (1/D) * sum_{t,c} q[t,c] * k[(t - tau) mod L, c]
       (matches irfft(rfft(q) * conj(rfft(k))) averaged over heads & channels)."""
    L, D = q.shape
    # s[u, t] = k[u] . q[t]  -> single MXU matmul, bf16 operands, f32 accumulation
    s = lax.dot_general(k.astype(_BF16), q.astype(_BF16),
                        (((1,), (1,)), ((), ())),
                        preferred_element_type=jnp.float32)
    # Barrel-shift rows so r[u, j] = s[u, (j + u) % L]; the column sum then gives the
    # mean correlation directly (no index flip needed on the XLA side).
    # TODO(synk): use pltpu.roll for the rotations when L is lane-aligned (multiple of 128);
    # at Autoformer sequence lengths the concatenate-based rotate is used for robustness.
    row = lax.broadcasted_iota(jnp.int32, (L, L), 0)
    a = 1
    while a < L:
        rotated = jnp.concatenate([s[:, a:], s[:, :a]], axis=1)   # left-rotate by a
        s = jnp.where((row & a) != 0, rotated, s)
        a *= 2
    return jnp.sum(s, axis=0, keepdims=True) * (1.0 / D)          # (1, L)


# --------------------------- series decomposition (standalone) ---------------------------

def _make_decomp_kernel(k_size):
    def kernel(x_ref, res_ref, trend_ref):
        x = x_ref[0].astype(jnp.float32)
        mean = _moving_mean(x, k_size)
        res_ref[0] = (x - mean).astype(res_ref.dtype)
        trend_ref[0] = mean.astype(trend_ref.dtype)
    return kernel


def series_decomp(x, k_size):
    B, L, D = x.shape
    spec = pl.BlockSpec((1, L, D), lambda b: (b, 0, 0))
    return pl.pallas_call(
        _make_decomp_kernel(k_size),
        out_shape=(jax.ShapeDtypeStruct((B, L, D), jnp.float32),) * 2,
        grid=(B,),
        in_specs=[spec],
        out_specs=(spec, spec),
        compiler_params=_parallel(),
    )(x)


# --------------------------- my_Layernorm ---------------------------

def _my_layernorm_kernel(x_ref, g_ref, b_ref, o_ref):
    x = x_ref[0].astype(jnp.float32)                      # (L, D)
    mu = jnp.mean(x, axis=-1, keepdims=True)
    var = jnp.mean(jnp.square(x - mu), axis=-1, keepdims=True)
    xhat = (x - mu) * lax.rsqrt(var + 1e-5) * g_ref[...] + b_ref[...]
    bias = jnp.mean(xhat, axis=0, keepdims=True)          # my_Layernorm time-mean removal
    o_ref[0] = (xhat - bias).astype(o_ref.dtype)


def my_layernorm(x, gamma_2d, beta_2d):
    B, L, D = x.shape
    return pl.pallas_call(
        _my_layernorm_kernel,
        out_shape=jax.ShapeDtypeStruct((B, L, D), jnp.float32),
        grid=(B,),
        in_specs=[pl.BlockSpec((1, L, D), lambda b: (b, 0, 0)),
                  pl.BlockSpec((1, D), lambda b: (0, 0)),
                  pl.BlockSpec((1, D), lambda b: (0, 0))],
        out_specs=pl.BlockSpec((1, L, D), lambda b: (b, 0, 0)),
        compiler_params=_parallel(),
    )(x, gamma_2d, beta_2d)


# --------------------------- DataEmbedding_wo_pos ---------------------------

def _embed_kernel(x_ref, mark_ref, w_ref, o_ref):
    x = x_ref[0].astype(jnp.float32)                      # (L, Cin)
    L = x.shape[0]
    xm1 = jnp.concatenate([x[L - 1:, :], x[:L - 1, :]], axis=0)   # x[t-1] circular
    xp1 = jnp.concatenate([x[1:, :], x[:1, :]], axis=0)           # x[t+1] circular
    feat = jnp.concatenate([xm1, x, xp1, mark_ref[0].astype(jnp.float32)],
                           axis=1).astype(_BF16)          # (L, 3*Cin + Mk)
    o_ref[0] = jnp.dot(feat, w_ref[...],
                       preferred_element_type=jnp.float32).astype(o_ref.dtype)


def data_embedding(x, x_mark, w_emb):
    """TokenEmbedding (circular conv3, bias-free) + TimeFeatureEmbedding (bias-free linear)
    as one fused MXU matmul against the stacked weight."""
    B, L, Cin = x.shape
    Mk = x_mark.shape[2]
    dm = w_emb.shape[1]
    return pl.pallas_call(
        _embed_kernel,
        out_shape=jax.ShapeDtypeStruct((B, L, dm), jnp.float32),
        grid=(B,),
        in_specs=[pl.BlockSpec((1, L, Cin), lambda b: (b, 0, 0)),
                  pl.BlockSpec((1, L, Mk), lambda b: (b, 0, 0)),
                  pl.BlockSpec((3 * Cin + Mk, dm), lambda b: (0, 0))],
        out_specs=pl.BlockSpec((1, L, dm), lambda b: (b, 0, 0)),
        compiler_params=_parallel(),
    )(x, x_mark, w_emb)


# --------------------------- AutoCorrelation: projections + correlation ---------------------------

def _make_self_corr_kernel(Dm):
    def kernel(x_ref, wqkv_ref, bqkv_ref, mv_ref, v_ref):
        x = x_ref[0].astype(_BF16)                        # (L, Dm)
        qkv = jnp.dot(x, wqkv_ref[...],
                      preferred_element_type=jnp.float32) + bqkv_ref[...]
        q = qkv[:, :Dm]
        k = qkv[:, Dm:2 * Dm]
        v = qkv[:, 2 * Dm:]
        v_ref[0] = v.astype(v_ref.dtype)
        mv_ref[0] = _corr_mean(q, k).astype(mv_ref.dtype)
    return kernel


def _make_cross_corr_kernel(L, S, Dm):
    def kernel(x_ref, cross_ref, wq_ref, bq_ref, wkv_ref, bkv_ref, mv_ref, v_ref):
        q = jnp.dot(x_ref[0].astype(_BF16), wq_ref[...],
                    preferred_element_type=jnp.float32) + bq_ref[...]
        kv = jnp.dot(cross_ref[0].astype(_BF16), wkv_ref[...],
                     preferred_element_type=jnp.float32) + bkv_ref[...]
        k = kv[:, :Dm]
        v = kv[:, Dm:]
        # L vs S resolved in-kernel (PyTorch zero-pads / truncates keys and values)
        if L > S:
            pad = jnp.zeros((L - S, Dm), jnp.float32)
            k = jnp.concatenate([k, pad], axis=0)
            v = jnp.concatenate([v, pad], axis=0)
        elif L < S:
            k = k[:L, :]
            v = v[:L, :]
        v_ref[0] = v.astype(v_ref.dtype)
        mv_ref[0] = _corr_mean(q, k).astype(mv_ref.dtype)
    return kernel


def self_corr(x, p):
    B, L, Dm = x.shape
    mv, v = pl.pallas_call(
        _make_self_corr_kernel(Dm),
        out_shape=(jax.ShapeDtypeStruct((B, 1, L), jnp.float32),
                   jax.ShapeDtypeStruct((B, L, Dm), jnp.float32)),
        grid=(B,),
        in_specs=[pl.BlockSpec((1, L, Dm), lambda b: (b, 0, 0)),
                  pl.BlockSpec((Dm, 3 * Dm), lambda b: (0, 0)),
                  pl.BlockSpec((1, 3 * Dm), lambda b: (0, 0))],
        out_specs=(pl.BlockSpec((1, 1, L), lambda b: (b, 0, 0)),
                   pl.BlockSpec((1, L, Dm), lambda b: (b, 0, 0))),
        compiler_params=_parallel(),
    )(x, p['Wqkv'], p['bqkv'])
    return mv[:, 0, :], v


def cross_corr(x, cross, p):
    B, L, Dm = x.shape
    S = cross.shape[1]
    mv, v = pl.pallas_call(
        _make_cross_corr_kernel(L, S, Dm),
        out_shape=(jax.ShapeDtypeStruct((B, 1, L), jnp.float32),
                   jax.ShapeDtypeStruct((B, L, Dm), jnp.float32)),
        grid=(B,),
        in_specs=[pl.BlockSpec((1, L, Dm), lambda b: (b, 0, 0)),
                  pl.BlockSpec((1, S, Dm), lambda b: (b, 0, 0)),
                  pl.BlockSpec((Dm, Dm), lambda b: (0, 0)),
                  pl.BlockSpec((1, Dm), lambda b: (0, 0)),
                  pl.BlockSpec((Dm, 2 * Dm), lambda b: (0, 0)),
                  pl.BlockSpec((1, 2 * Dm), lambda b: (0, 0))],
        out_specs=(pl.BlockSpec((1, 1, L), lambda b: (b, 0, 0)),
                   pl.BlockSpec((1, L, Dm), lambda b: (b, 0, 0))),
        compiler_params=_parallel(),
    )(x, cross, p['Wq'], p['bq'], p['Wkv'], p['bkv'])
    return mv[:, 0, :], v


def _topk_softmax(mean_value, L, factor):
    # TODO(synk): top-k delay selection (sort) stays in plain XLA; only (B, L) scalars.
    top_k = int(factor * math.log(L))
    weights, delay = lax.top_k(mean_value, top_k)
    return jax.nn.softmax(weights, axis=-1), delay.astype(jnp.int32)


# -------- delay aggregation + out-projection + residual + decomp (scalar prefetch) --------

def _make_agg_decomp_kernel(L, Dm, top_k, k_size, has_prev, want_trend):
    def kernel(*refs):
        delay_ref, corr_ref = refs[0], refs[1]            # SMEM scalar-prefetch
        v_ref, x_ref, wo_ref, bo_ref = refs[2], refs[3], refs[4], refs[5]
        idx = 6
        prev = None
        if has_prev:
            prev = refs[idx][0].astype(jnp.float32)
            idx += 1
        res_ref = refs[idx]
        idx += 1
        trend_ref = None
        if want_trend:
            trend_ref = refs[idx]
            idx += 1
        v2_ref = refs[idx]                                # VMEM (2L, Dm) scratch

        b = pl.program_id(0)
        v = v_ref[0]
        v2_ref[pl.ds(0, L), :] = v                        # time-doubled V, VMEM only
        v2_ref[pl.ds(L, L), :] = v

        # out[t] = sum_i tmp_corr[b,i] * V[b, (t + delay[b,i]) mod L]
        acc = jnp.zeros((L, Dm), jnp.float32)
        for i in range(top_k):
            d = delay_ref[b, i]
            acc = acc + v2_ref[pl.ds(d, L), :] * corr_ref[b, i]

        # fused out-projection + residual + series decomposition (+ trend accumulation)
        y = jnp.dot(acc.astype(_BF16), wo_ref[...],
                    preferred_element_type=jnp.float32) + bo_ref[...]
        s = x_ref[0].astype(jnp.float32) + y
        mean = _moving_mean(s, k_size)
        res_ref[0] = (s - mean).astype(res_ref.dtype)
        if want_trend:
            trend = mean if prev is None else mean + prev
            trend_ref[0] = trend.astype(trend_ref.dtype)
    return kernel


def attn_agg_decomp(v, x, delay, tmp_corr, p, k_size, prev_trend=None, want_trend=True):
    B, L, Dm = x.shape
    top_k = delay.shape[1]
    spec = pl.BlockSpec((1, L, Dm), lambda b, d, c: (b, 0, 0))
    in_specs = [spec, spec,
                pl.BlockSpec((Dm, Dm), lambda b, d, c: (0, 0)),
                pl.BlockSpec((1, Dm), lambda b, d, c: (0, 0))]
    args = [delay, tmp_corr, v, x, p['Wo'], p['bo']]
    if prev_trend is not None:
        in_specs.append(spec)
        args.append(prev_trend)
    out_shape = [jax.ShapeDtypeStruct((B, L, Dm), jnp.float32)]
    out_specs = [spec]
    if want_trend:
        out_shape.append(jax.ShapeDtypeStruct((B, L, Dm), jnp.float32))
        out_specs.append(spec)
    outs = pl.pallas_call(
        _make_agg_decomp_kernel(L, Dm, top_k, k_size, prev_trend is not None, want_trend),
        out_shape=tuple(out_shape),
        grid_spec=pltpu.PrefetchScalarGridSpec(
            num_scalar_prefetch=2,
            grid=(B,),
            in_specs=in_specs,
            out_specs=tuple(out_specs),
            scratch_shapes=[pltpu.VMEM((2 * L, Dm), jnp.float32)]),
        compiler_params=_parallel(),
    )(*args)
    if want_trend:
        return outs[0], outs[1]
    return outs[0], None


# --------------------------- FFN + residual + decomp ---------------------------

def _make_ffn_decomp_kernel(k_size, has_prev, want_trend):
    def kernel(*refs):
        x_ref, w1_ref, w2_ref = refs[0], refs[1], refs[2]
        idx = 3
        prev = None
        if has_prev:
            prev = refs[idx][0].astype(jnp.float32)
            idx += 1
        res_ref = refs[idx]
        idx += 1
        trend_ref = refs[idx] if want_trend else None

        x = x_ref[0].astype(jnp.float32)
        h = jnp.dot(x.astype(_BF16), w1_ref[...], preferred_element_type=jnp.float32)
        h = jnp.maximum(h, 0.0)                           # relu
        y = jnp.dot(h.astype(_BF16), w2_ref[...], preferred_element_type=jnp.float32)
        s = x + y
        mean = _moving_mean(s, k_size)
        res_ref[0] = (s - mean).astype(res_ref.dtype)
        if want_trend:
            trend = mean if prev is None else mean + prev
            trend_ref[0] = trend.astype(trend_ref.dtype)
    return kernel


def ffn_decomp(x, w1, w2, k_size, prev_trend=None, want_trend=True):
    B, L, Dm = x.shape
    dff = w1.shape[1]
    spec = pl.BlockSpec((1, L, Dm), lambda b: (b, 0, 0))
    in_specs = [spec,
                pl.BlockSpec((Dm, dff), lambda b: (0, 0)),
                pl.BlockSpec((dff, Dm), lambda b: (0, 0))]
    args = [x, w1, w2]
    if prev_trend is not None:
        in_specs.append(spec)
        args.append(prev_trend)
    out_shape = [jax.ShapeDtypeStruct((B, L, Dm), jnp.float32)]
    out_specs = [spec]
    if want_trend:
        out_shape.append(jax.ShapeDtypeStruct((B, L, Dm), jnp.float32))
        out_specs.append(spec)
    outs = pl.pallas_call(
        _make_ffn_decomp_kernel(k_size, prev_trend is not None, want_trend),
        out_shape=tuple(out_shape),
        grid=(B,),
        in_specs=in_specs,
        out_specs=tuple(out_specs),
        compiler_params=_parallel(),
    )(*args)
    if want_trend:
        return outs[0], outs[1]
    return outs[0], None


# --------------------------- tiny-output ops kept in XLA ---------------------------

def circular_conv3_xla(x, w):
    """Conv1d(d_model -> c_out, k=3, circular, bias=False).  c_out is tiny (4), so this is
    left to XLA instead of Pallas to avoid masked lane-4 partial stores."""
    W = jnp.transpose(w, (2, 1, 0))                       # (3, Cin, Cout)
    xm1 = jnp.roll(x, 1, axis=1)
    xp1 = jnp.roll(x, -1, axis=1)
    return xm1 @ W[0] + x @ W[1] + xp1 @ W[2]


# --------------------------- attention blocks / layers ---------------------------

def self_attention_block(p, x, factor, k_size, prev_trend=None, want_trend=True):
    mv, v = self_corr(x, p)
    tmp_corr, delay = _topk_softmax(mv, x.shape[1], factor)
    return attn_agg_decomp(v, x, delay, tmp_corr, p, k_size, prev_trend, want_trend)


def cross_attention_block(p, x, cross, factor, k_size, prev_trend=None, want_trend=True):
    mv, v = cross_corr(x, cross, p)
    tmp_corr, delay = _topk_softmax(mv, x.shape[1], factor)
    return attn_agg_decomp(v, x, delay, tmp_corr, p, k_size, prev_trend, want_trend)


def encoder_layer(p, x, moving_avg, factor):
    x, _ = self_attention_block(p['attn'], x, factor, moving_avg, want_trend=False)
    x, _ = ffn_decomp(x, p['W1'], p['W2'], moving_avg, want_trend=False)
    return x


def decoder_layer(p, x, cross, moving_avg, factor):
    x, t1 = self_attention_block(p['self_attn'], x, factor, moving_avg)
    x, t2 = cross_attention_block(p['cross_attn'], x, cross, factor, moving_avg,
                                  prev_trend=t1)
    x, t3 = ffn_decomp(x, p['W1'], p['W2'], moving_avg, prev_trend=t2)  # t3 = t1+t2+t3
    residual_trend = circular_conv3_xla(t3, p['proj_w'])
    return x, residual_trend


def autoformer_forward(params, cfg, x_enc, x_mark_enc, x_dec, x_mark_dec):
    pred_len, label_len = cfg['pred_len'], cfg['label_len']
    moving_avg, factor = cfg['moving_avg'], cfg['factor']

    seasonal_init, trend_init = series_decomp(x_enc, moving_avg)
    mean = jnp.mean(x_enc, axis=1, keepdims=True)
    mean = jnp.broadcast_to(mean, (x_enc.shape[0], pred_len, x_enc.shape[2]))
    zeros = jnp.zeros((x_dec.shape[0], pred_len, x_dec.shape[2]), jnp.float32)
    trend_init = jnp.concatenate([trend_init[:, -label_len:, :], mean], axis=1)
    seasonal_init = jnp.concatenate([seasonal_init[:, -label_len:, :], zeros], axis=1)

    enc_out = data_embedding(x_enc, x_mark_enc, params['enc_emb'])
    for lp in params['enc_layers']:
        enc_out = encoder_layer(lp, enc_out, moving_avg, factor)
    enc_out = my_layernorm(enc_out, params['enc_norm_g'], params['enc_norm_b'])

    x = data_embedding(seasonal_init, x_mark_dec, params['dec_emb'])
    trend = trend_init
    for lp in params['dec_layers']:
        x, residual_trend = decoder_layer(lp, x, enc_out, moving_avg, factor)
        trend = trend + residual_trend
    x = my_layernorm(x, params['dec_norm_g'], params['dec_norm_b'])
    # final Linear(d_model -> c_out=4, bias=True): tiny lane width -> plain XLA matmul
    seasonal_part = jnp.einsum('bld,dc->blc', x, params['proj_w']) + params['proj_b']
    dec_out = trend + seasonal_part
    return dec_out[:, -pred_len:, :]


# --------------------------- parameters ---------------------------

def init_params(key, cfg):
    state = {'key': key}

    def normal(shape, scale=0.1):
        state['key'], sub = jax.random.split(state['key'])
        return scale * jax.random.normal(sub, shape, jnp.float32)

    dm, dff = cfg['d_model'], cfg['d_ff']
    ein, din, cout = cfg['enc_in'], cfg['dec_in'], cfg['c_out']
    mark_dim = cfg['mark_dim']

    def self_attn_params():
        Wq, Wk, Wv = normal((dm, dm)), normal((dm, dm)), normal((dm, dm))
        bq, bk, bv = normal((dm,)), normal((dm,)), normal((dm,))
        return dict(Wqkv=jnp.concatenate([Wq, Wk, Wv], axis=1).astype(_BF16),
                    bqkv=jnp.concatenate([bq, bk, bv]).reshape(1, 3 * dm),
                    Wo=normal((dm, dm)).astype(_BF16),
                    bo=normal((dm,)).reshape(1, dm))

    def cross_attn_params():
        Wk, Wv = normal((dm, dm)), normal((dm, dm))
        bk, bv = normal((dm,)), normal((dm,))
        return dict(Wq=normal((dm, dm)).astype(_BF16),
                    bq=normal((dm,)).reshape(1, dm),
                    Wkv=jnp.concatenate([Wk, Wv], axis=1).astype(_BF16),
                    bkv=jnp.concatenate([bk, bv]).reshape(1, 2 * dm),
                    Wo=normal((dm, dm)).astype(_BF16),
                    bo=normal((dm,)).reshape(1, dm))

    def embed_params(cin):
        conv_w = normal((dm, cin, 3))                      # PyTorch Conv1d weight (out,in,k)
        w_tok = jnp.transpose(conv_w, (2, 1, 0))           # (3, cin, dm): taps t-1, t, t+1
        w_mark = normal((mark_dim, dm))
        return jnp.concatenate([w_tok[0], w_tok[1], w_tok[2], w_mark],
                               axis=0).astype(_BF16)       # (3*cin + mark, dm)

    params = dict(
        enc_emb=embed_params(ein),
        dec_emb=embed_params(din),
        enc_layers=[dict(attn=self_attn_params(),
                         W1=normal((dm, dff)).astype(_BF16),
                         W2=normal((dff, dm)).astype(_BF16))
                    for _ in range(cfg['e_layers'])],
        enc_norm_g=jnp.ones((1, dm), jnp.float32),
        enc_norm_b=jnp.zeros((1, dm), jnp.float32),
        dec_layers=[dict(self_attn=self_attn_params(),
                         cross_attn=cross_attn_params(),
                         W1=normal((dm, dff)).astype(_BF16),
                         W2=normal((dff, dm)).astype(_BF16),
                         proj_w=normal((cout, dm, 3)))
                    for _ in range(cfg['d_layers'])],
        dec_norm_g=jnp.ones((1, dm), jnp.float32),
        dec_norm_b=jnp.zeros((1, dm), jnp.float32),
        proj_w=normal((dm, cout)), proj_b=normal((cout,)),
    )
    return params


# --------------------------- main ---------------------------

if __name__ == "__main__":
    cfg = dict(seq_len=16, label_len=8, pred_len=8,
               enc_in=4, dec_in=4, c_out=4,
               d_model=32, n_heads=4, e_layers=1, d_layers=1, d_ff=64,
               moving_avg=5, factor=1, mark_dim=4)

    key = jax.random.PRNGKey(0)
    kp, kd = jax.random.split(key)
    params = init_params(kp, cfg)

    B = 2
    k1, k2, k3, k4 = jax.random.split(kd, 4)
    x_enc = jax.random.normal(k1, (B, cfg['seq_len'], cfg['enc_in']), jnp.float32)
    x_mark_enc = jax.random.normal(k2, (B, cfg['seq_len'], cfg['mark_dim']), jnp.float32)
    Ldec = cfg['label_len'] + cfg['pred_len']
    x_dec = jax.random.normal(k3, (B, Ldec, cfg['dec_in']), jnp.float32)
    x_mark_dec = jax.random.normal(k4, (B, Ldec, cfg['mark_dim']), jnp.float32)

    fwd = jax.jit(lambda prm, a, b, c, d: autoformer_forward(prm, cfg, a, b, c, d))
    out = fwd(params, x_enc, x_mark_enc, x_dec, x_mark_dec)
    out = jax.block_until_ready(out)
    assert out.shape == (B, cfg['pred_len'], cfg['c_out'])
    print("KERNEL_OK")
</pallas_src>

<mosaic_0001>
module attributes {stable_mosaic.version = 11 : i64} {
  func.func @kernel(%arg0: i32, %arg1: memref<1x16x4xf32, #tpu.memory_space<vmem>>, %arg2: memref<1x16x4xf32, #tpu.memory_space<vmem>>, %arg3: memref<1x16x4xf32, #tpu.memory_space<vmem>>) attributes {dimension_semantics = [#tpu.dimension_semantics<parallel>], iteration_bounds = array<i64: 2>, scalar_prefetch = 0 : i64, scratch_operands = 0 : i64, tpu.core_type = #tpu.core_type<tc>, window_params = [{transform_indices = @transform_0, window_bounds = array<i64: 1, 16, 4>}, {transform_indices = @transform_1, window_bounds = array<i64: 1, 16, 4>}, {transform_indices = @transform_2, window_bounds = array<i64: 1, 16, 4>}]} {
    %c0 = arith.constant 0 : index
    %c0_0 = arith.constant 0 : index
    %c0_1 = arith.constant 0 : index
    %0 = vector.load %arg1[%c0, %c0_0, %c0_1] : memref<1x16x4xf32, #tpu.memory_space<vmem>>, vector<1x16x4xf32>
    %1 = vector.shape_cast %0 : vector<1x16x4xf32> to vector<16x4xf32>
    %2 = vector.extract_strided_slice %1 {offsets = [0, 0], sizes = [1, 4], strides = [1, 1]} : vector<16x4xf32> to vector<1x4xf32>
    %3 = vector.extract_strided_slice %1 {offsets = [0, 0], sizes = [14, 4], strides = [1, 1]} : vector<16x4xf32> to vector<14x4xf32>
    %4 = tpu.concatenate %2, %2, %3 in 0 : vector<1x4xf32>, vector<1x4xf32>, vector<14x4xf32> -> vector<16x4xf32>
    %5 = vector.extract_strided_slice %1 {offsets = [0, 0], sizes = [1, 4], strides = [1, 1]} : vector<16x4xf32> to vector<1x4xf32>
    %6 = vector.extract_strided_slice %1 {offsets = [0, 0], sizes = [15, 4], strides = [1, 1]} : vector<16x4xf32> to vector<15x4xf32>
    %7 = tpu.concatenate %5, %6 in 0 : vector<1x4xf32>, vector<15x4xf32> -> vector<16x4xf32>
    %8 = arith.addf %4, %7 : vector<16x4xf32>
    %9 = arith.addf %8, %1 : vector<16x4xf32>
    %10 = vector.extract_strided_slice %1 {offsets = [1, 0], sizes = [15, 4], strides = [1, 1]} : vector<16x4xf32> to vector<15x4xf32>
    %11 = vector.extract_strided_slice %1 {offsets = [15, 0], sizes = [1, 4], strides = [1, 1]} : vector<16x4xf32> to vector<1x4xf32>
    %12 = tpu.concatenate %10, %11 in 0 : vector<15x4xf32>, vector<1x4xf32> -> vector<16x4xf32>
    %13 = arith.addf %9, %12 : vector<16x4xf32>
    %14 = vector.extract_strided_slice %1 {offsets = [2, 0], sizes = [14, 4], strides = [1, 1]} : vector<16x4xf32> to vector<14x4xf32>
    %15 = vector.extract_strided_slice %1 {offsets = [15, 0], sizes = [1, 4], strides = [1, 1]} : vector<16x4xf32> to vector<1x4xf32>
    %16 = tpu.concatenate %14, %15, %15 in 0 : vector<14x4xf32>, vector<1x4xf32>, vector<1x4xf32> -> vector<16x4xf32>
    %17 = arith.addf %13, %16 : vector<16x4xf32>
    %cst = arith.constant 2.000000e-01 : f32
    %18 = vector.broadcast %cst : f32 to vector<16x4xf32>
    %19 = arith.mulf %17, %18 : vector<16x4xf32>
    %20 = arith.subf %1, %19 : vector<16x4xf32>
    %c0_2 = arith.constant 0 : index
    %c0_3 = arith.constant 0 : index
    %c0_4 = arith.constant 0 : index
    %21 = vector.load %arg2[%c0_2, %c0_3, %c0_4] : memref<1x16x4xf32, #tpu.memory_space<vmem>>, vector<1x16x4xf32>
    %22 = vector.shape_cast %21 : vector<1x16x4xf32> to vector<16x4xf32>
    %23 = vector.shape_cast %20 : vector<16x4xf32> to vector<1x16x4xf32>
    tpu.vector_store %arg2[%c0_2, %c0_3, %c0_4], %23 {strides = array<i32>} : memref<1x16x4xf32, #tpu.memory_space<vmem>>, vector<1x16x4xf32>,
    %c0_5 = arith.constant 0 : index
    %c0_6 = arith.constant 0 : index
    %c0_7 = arith.constant 0 : index
    %24 = vector.load %arg3[%c0_5, %c0_6, %c0_7] : memref<1x16x4xf32, #tpu.memory_space<vmem>>, vector<1x16x4xf32>
    %25 = vector.shape_cast %24 : vector<1x16x4xf32> to vector<16x4xf32>
    %26 = vector.shape_cast %19 : vector<16x4xf32> to vector<1x16x4xf32>
    tpu.vector_store %arg3[%c0_5, %c0_6, %c0_7], %26 {strides = array<i32>} : memref<1x16x4xf32, #tpu.memory_space<vmem>>, vector<1x16x4xf32>,
    return
  }
  func.func @transform_0(%arg0: i32) -> (i32, i32, i32) {
    %c0_i32 = arith.constant 0 : i32
    %c0_i32_0 = arith.constant 0 : i32
    %c0_i32_1 = arith.constant 0 : i32
    return %arg0, %c0_i32, %c0_i32_0 : i32, i32, i32
  }
  func.func @transform_1(%arg0: i32) -> (i32, i32, i32) {
    %c0_i32 = arith.constant 0 : i32
    %c0_i32_0 = arith.constant 0 : i32
    %c0_i32_1 = arith.constant 0 : i32
    return %arg0, %c0_i32, %c0_i32_0 : i32, i32, i32
  }
  func.func @transform_2(%arg0: i32) -> (i32, i32, i32) {
    %c0_i32 = arith.constant 0 : i32
    %c0_i32_0 = arith.constant 0 : i32
    %c0_i32_1 = arith.constant 0 : i32
    return %arg0, %c0_i32, %c0_i32_0 : i32, i32, i32
  }
}

module attributes {stable_mosaic.version = 11 : i64} {
  func.func @_embed_kernel(%arg0: i32, %arg1: memref<1x16x4xf32, #tpu.memory_space<vmem>>, %arg2: memref<1x16x4xf32, #tpu.memory_space<vmem>>, %arg3: memref<16x32xbf16, #tpu.memory_space<vmem>>, %arg4: memref<1x16x32xf32, #tpu.memory_space<vmem>>) attributes {dimension_semantics = [#tpu.dimension_semantics<parallel>], iteration_bounds = array<i64: 2>, scalar_prefetch = 0 : i64, scratch_operands = 0 : i64, tpu.core_type = #tpu.core_type<tc>, window_params = [{transform_indices = @transform_0, window_bounds = array<i64: 1, 16, 4>}, {transform_indices = @transform_1, window_bounds = array<i64: 1, 16, 4>}, {pipeline_mode = #tpu.pipeline_mode<synchronous>, transform_indices = @transform_2, window_bounds = array<i64: 16, 32>}, {transform_indices = @transform_3, window_bounds = array<i64: 1, 16, 32>}]} {
    %c0 = arith.constant 0 : index
    %c0_0 = arith.constant 0 : index
    %c0_1 = arith.constant 0 : index
    %0 = vector.load %arg1[%c0, %c0_0, %c0_1] : memref<1x16x4xf32, #tpu.memory_space<vmem>>, vector<1x16x4xf32>
    %1 = vector.shape_cast %0 : vector<1x16x4xf32> to vector<16x4xf32>
    %2 = vector.extract_strided_slice %1 {offsets = [15, 0], sizes = [1, 4], strides = [1, 1]} : vector<16x4xf32> to vector<1x4xf32>
    %3 = vector.extract_strided_slice %1 {offsets = [0, 0], sizes = [15, 4], strides = [1, 1]} : vector<16x4xf32> to vector<15x4xf32>
    %4 = tpu.concatenate %2, %3 in 0 : vector<1x4xf32>, vector<15x4xf32> -> vector<16x4xf32>
    %5 = vector.extract_strided_slice %1 {offsets = [1, 0], sizes = [15, 4], strides = [1, 1]} : vector<16x4xf32> to vector<15x4xf32>
    %6 = vector.extract_strided_slice %1 {offsets = [0, 0], sizes = [1, 4], strides = [1, 1]} : vector<16x4xf32> to vector<1x4xf32>
    %7 = tpu.concatenate %5, %6 in 0 : vector<15x4xf32>, vector<1x4xf32> -> vector<16x4xf32>
    %c0_2 = arith.constant 0 : index
    %c0_3 = arith.constant 0 : index
    %c0_4 = arith.constant 0 : index
    %8 = vector.load %arg2[%c0_2, %c0_3, %c0_4] : memref<1x16x4xf32, #tpu.memory_space<vmem>>, vector<1x16x4xf32>
    %9 = vector.shape_cast %8 : vector<1x16x4xf32> to vector<16x4xf32>
    %10 = tpu.concatenate %4, %1, %7, %9 in 1 : vector<16x4xf32>, vector<16x4xf32>, vector<16x4xf32>, vector<16x4xf32> -> vector<16x16xf32>
    %11 = arith.truncf %10 : vector<16x16xf32> to vector<16x16xbf16>
    %c0_5 = arith.constant 0 : index
    %c0_6 = arith.constant 0 : index
    %12 = vector.load %arg3[%c0_5, %c0_6] : memref<16x32xbf16, #tpu.memory_space<vmem>>, vector<16x32xbf16>
    %cst = arith.constant dense<0.000000e+00> : vector<16x32xf32>
    %13 = tpu.matmul %11, %12, %cst {dimension_numbers = #tpu.dot_dimension_numbers<[1], [0], [0], [1], [0, 0, 1, 1], [], []>} : vector<16x16xbf16>, vector<16x32xbf16>, vector<16x32xf32> -> vector<16x32xf32>
    %c0_7 = arith.constant 0 : index
    %c0_8 = arith.constant 0 : index
    %c0_9 = arith.constant 0 : index
    %14 = vector.load %arg4[%c0_7, %c0_8, %c0_9] : memref<1x16x32xf32, #tpu.memory_space<vmem>>, vector<1x16x32xf32>
    %15 = vector.shape_cast %14 : vector<1x16x32xf32> to vector<16x32xf32>
    %16 = vector.shape_cast %13 : vector<16x32xf32> to vector<1x16x32xf32>
    tpu.vector_store %arg4[%c0_7, %c0_8, %c0_9], %16 {strides = array<i32>} : memref<1x16x32xf32, #tpu.memory_space<vmem>>, vector<1x16x32xf32>,
    return
  }
  func.func @transform_0(%arg0: i32) -> (i32, i32, i32) {
    %c0_i32 = arith.constant 0 : i32
    %c0_i32_0 = arith.constant 0 : i32
    %c0_i32_1 = arith.constant 0 : i32
    return %arg0, %c0_i32, %c0_i32_0 : i32, i32, i32
  }
  func.func @transform_1(%arg0: i32) -> (i32, i32, i32) {
    %c0_i32 = arith.constant 0 : i32
    %c0_i32_0 = arith.constant 0 : i32
    %c0_i32_1 = arith.constant 0 : i32
    return %arg0, %c0_i32, %c0_i32_0 : i32, i32, i32
  }
  func.func @transform_2(%arg0: i32) -> (i32, i32) {
    %c0_i32 = arith.constant 0 : i32
    %c0_i32_0 = arith.constant 0 : i32
    %c0_i32_1 = arith.constant 0 : i32
    return %c0_i32, %c0_i32_0 : i32, i32
  }
  func.func @transform_3(%arg0: i32) -> (i32, i32, i32) {
    %c0_i32 = arith.constant 0 : i32
    %c0_i32_0 = arith.constant 0 : i32
    %c0_i32_1 = arith.constant 0 : i32
    return %arg0, %c0_i32, %c0_i32_0 : i32, i32, i32
  }
}

module attributes {stable_mosaic.version = 11 : i64} {
  func.func @kernel(%arg0: i32, %arg1: memref<1x16x32xf32, #tpu.memory_space<vmem>>, %arg2: memref<32x96xbf16, #tpu.memory_space<vmem>>, %arg3: memref<1x96xf32, #tpu.memory_space<vmem>>, %arg4: memref<1x1x16xf32, #tpu.memory_space<vmem>>, %arg5: memref<1x16x32xf32, #tpu.memory_space<vmem>>) attributes {dimension_semantics = [#tpu.dimension_semantics<parallel>], iteration_bounds = array<i64: 2>, scalar_prefetch = 0 : i64, scratch_operands = 0 : i64, tpu.core_type = #tpu.core_type<tc>, window_params = [{transform_indices = @transform_0, window_bounds = array<i64: 1, 16, 32>}, {pipeline_mode = #tpu.pipeline_mode<synchronous>, transform_indices = @transform_1, window_bounds = array<i64: 32, 96>}, {pipeline_mode = #tpu.pipeline_mode<synchronous>, transform_indices = @transform_2, window_bounds = array<i64: 1, 96>}, {transform_indices = @transform_3, window_bounds = array<i64: 1, 1, 16>}, {transform_indices = @transform_4, window_bounds = array<i64: 1, 16, 32>}]} {
    %c0 = arith.constant 0 : index
    %c0_0 = arith.constant 0 : index
    %c0_1 = arith.constant 0 : index
    %0 = vector.load %arg1[%c0, %c0_0, %c0_1] : memref<1x16x32xf32, #tpu.memory_space<vmem>>, vector<1x16x32xf32>
    %1 = vector.shape_cast %0 : vector<1x16x32xf32> to vector<16x32xf32>
    %2 = arith.truncf %1 : vector<16x32xf32> to vector<16x32xbf16>
    %c0_2 = arith.constant 0 : index
    %c0_3 = arith.constant 0 : index
    %3 = vector.load %arg2[%c0_2, %c0_3] : memref<32x96xbf16, #tpu.memory_space<vmem>>, vector<32x96xbf16>
    %cst = arith.constant dense<0.000000e+00> : vector<16x96xf32>
    %4 = tpu.matmul %2, %3, %cst {dimension_numbers = #tpu.dot_dimension_numbers<[1], [0], [0], [1], [0, 0, 1, 1], [], []>} : vector<16x32xbf16>, vector<32x96xbf16>, vector<16x96xf32> -> vector<16x96xf32>
    %c0_4 = arith.constant 0 : index
    %c0_5 = arith.constant 0 : index
    %5 = vector.load %arg3[%c0_4, %c0_5] : memref<1x96xf32, #tpu.memory_space<vmem>>, vector<1x96xf32>
    %6 = vector.broadcast %5 : vector<1x96xf32> to vector<16x96xf32>
    %7 = arith.addf %4, %6 : vector<16x96xf32>
    %8 = vector.extract_strided_slice %7 {offsets = [0, 0], sizes = [16, 32], strides = [1, 1]} : vector<16x96xf32> to vector<16x32xf32>
    %9 = vector.extract_strided_slice %7 {offsets = [0, 32], sizes = [16, 32], strides = [1, 1]} : vector<16x96xf32> to vector<16x32xf32>
    %10 = vector.extract_strided_slice %7 {offsets = [0, 64], sizes = [16, 32], strides = [1, 1]} : vector<16x96xf32> to vector<16x32xf32>
    %c0_6 = arith.constant 0 : index
    %c0_7 = arith.constant 0 : index
    %c0_8 = arith.constant 0 : index
    %11 = vector.load %arg5[%c0_6, %c0_7, %c0_8] : memref<1x16x32xf32, #tpu.memory_space<vmem>>, vector<1x16x32xf32>
    %12 = vector.shape_cast %11 : vector<1x16x32xf32> to vector<16x32xf32>
    %13 = vector.shape_cast %10 : vector<16x32xf32> to vector<1x16x32xf32>
    tpu.vector_store %arg5[%c0_6, %c0_7, %c0_8], %13 {strides = array<i32>} : memref<1x16x32xf32, #tpu.memory_space<vmem>>, vector<1x16x32xf32>,
    %14 = arith.truncf %9 : vector<16x32xf32> to vector<16x32xbf16>
    %15 = arith.truncf %8 : vector<16x32xf32> to vector<16x32xbf16>
    %cst_9 = arith.constant dense<0.000000e+00> : vector<16x16xf32>
    %16 = tpu.matmul %14, %15, %cst_9 {dimension_numbers = #tpu.dot_dimension_numbers<[1], [1], [0], [0], [0, 0, 1, 0], [], []>} : vector<16x32xbf16>, vector<16x32xbf16>, vector<16x16xf32> -> vector<16x16xf32>
    %17 = tpu.iota {dimensions = array<i32: 0>} : vector<16x16xi32>
    %18 = vector.extract_strided_slice %16 {offsets = [0, 1], sizes = [16, 15], strides = [1, 1]} : vector<16x16xf32> to vector<16x15xf32>
    %19 = vector.extract_strided_slice %16 {offsets = [0, 0], sizes = [16, 1], strides = [1, 1]} : vector<16x16xf32> to vector<16x1xf32>
    %20 = tpu.concatenate %18, %19 in 1 : vector<16x15xf32>, vector<16x1xf32> -> vector<16x16xf32>
    %c1_i32 = arith.constant 1 : i32
    %21 = vector.broadcast %c1_i32 : i32 to vector<16x16xi32>
    %22 = arith.andi %17, %21 : vector<16x16xi32>
    %c0_i32 = arith.constant 0 : i32
    %23 = vector.broadcast %c0_i32 : i32 to vector<16x16xi32>
    %24 = arith.cmpi ne, %22, %23 : vector<16x16xi32>
    %25 = arith.select %24, %20, %16 : vector<16x16xi1>, vector<16x16xf32>
    %26 = vector.extract_strided_slice %25 {offsets = [0, 2], sizes = [16, 14], strides = [1, 1]} : vector<16x16xf32> to vector<16x14xf32>
    %27 = vector.extract_strided_slice %25 {offsets = [0, 0], sizes = [16, 2], strides = [1, 1]} : vector<16x16xf32> to vector<16x2xf32>
    %28 = tpu.concatenate %26, %27 in 1 : vector<16x14xf32>, vector<16x2xf32> -> vector<16x16xf32>
    %c2_i32 = arith.constant 2 : i32
    %29 = vector.broadcast %c2_i32 : i32 to vector<16x16xi32>
    %30 = arith.andi %17, %29 : vector<16x16xi32>
    %c0_i32_10 = arith.constant 0 : i32
    %31 = vector.broadcast %c0_i32_10 : i32 to vector<16x16xi32>
    %32 = arith.cmpi ne, %30, %31 : vector<16x16xi32>
    %33 = arith.select %32, %28, %25 : vector<16x16xi1>, vector<16x16xf32>
    %34 = vector.extract_strided_slice %33 {offsets = [0, 4], sizes = [16, 12], strides = [1, 1]} : vector<16x16xf32> to vector<16x12xf32>
    %35 = vector.extract_strided_slice %33 {offsets = [0, 0], sizes = [16, 4], strides = [1, 1]} : vector<16x16xf32> to vector<16x4xf32>
    %36 = tpu.concatenate %34, %35 in 1 : vector<16x12xf32>, vector<16x4xf32> -> vector<16x16xf32>
    %c4_i32 = arith.constant 4 : i32
    %37 = vector.broadcast %c4_i32 : i32 to vector<16x16xi32>
    %38 = arith.andi %17, %37 : vector<16x16xi32>
    %c0_i32_11 = arith.constant 0 : i32
    %39 = vector.broadcast %c0_i32_11 : i32 to vector<16x16xi32>
    %40 = arith.cmpi ne, %38, %39 : vector<16x16xi32>
    %41 = arith.select %40, %36, %33 : vector<16x16xi1>, vector<16x16xf32>
    %42 = vector.extract_strided_slice %41 {offsets = [0, 8], sizes = [16, 8], strides = [1, 1]} : vector<16x16xf32> to vector<16x8xf32>
    %43 = vector.extract_strided_slice %41 {offsets = [0, 0], sizes = [16, 8], strides = [1, 1]} : vector<16x16xf32> to vector<16x8xf32>
    %44 = tpu.concatenate %42, %43 in 1 : vector<16x8xf32>, vector<16x8xf32> -> vector<16x16xf32>
    %c8_i32 = arith.constant 8 : i32
    %45 = vector.broadcast %c8_i32 : i32 to vector<16x16xi32>
    %46 = arith.andi %17, %45 : vector<16x16xi32>
    %c0_i32_12 = arith.constant 0 : i32
    %47 = vector.broadcast %c0_i32_12 : i32 to vector<16x16xi32>
    %48 = arith.cmpi ne, %46, %47 : vector<16x16xi32>
    %49 = arith.select %48, %44, %41 : vector<16x16xi1>, vector<16x16xf32>
    %cst_13 = arith.constant dense<0.000000e+00> : vector<16xf32>
    %50 = vector.multi_reduction <add>, %49, %cst_13 [0] : vector<16x16xf32> to vector<16xf32>
    %51 = vector.shape_cast %50 : vector<16xf32> to vector<1x16xf32>
    %cst_14 = arith.constant 3.125000e-02 : f32
    %52 = vector.broadcast %cst_14 : f32 to vector<1x16xf32>
    %53 = arith.mulf %51, %52 : vector<1x16xf32>
    %c0_15 = arith.constant 0 : index
    %c0_16 = arith.constant 0 : index
    %c0_17 = arith.constant 0 : index
    %54 = vector.load %arg4[%c0_15, %c0_16, %c0_17] : memref<1x1x16xf32, #tpu.memory_space<vmem>>, vector<1x1x16xf32>
    %55 = vector.shape_cast %54 : vector<1x1x16xf32> to vector<1x16xf32>
    %56 = vector.shape_cast %53 : vector<1x16xf32> to vector<1x1x16xf32>
    tpu.vector_store %arg4[%c0_15, %c0_16, %c0_17], %56 {strides = array<i32>} : memref<1x1x16xf32, #tpu.memory_space<vmem>>, vector<1x1x16xf32>,
    return
  }
  func.func @transform_0(%arg0: i32) -> (i32, i32, i32) {
    %c0_i32 = arith.constant 0 : i32
    %c0_i32_0 = arith.constant 0 : i32
    %c0_i32_1 = arith.constant 0 : i32
    return %arg0, %c0_i32, %c0_i32_0 : i32, i32, i32
  }
  func.func @transform_1(%arg0: i32) -> (i32, i32) {
    %c0_i32 = arith.constant 0 : i32
    %c0_i32_0 = arith.constant 0 : i32
    %c0_i32_1 = arith.constant 0 : i32
    return %c0_i32, %c0_i32_0 : i32, i32
  }
  func.func @transform_2(%arg0: i32) -> (i32, i32) {
    %c0_i32 = arith.constant 0 : i32
    %c0_i32_0 = arith.constant 0 : i32
    %c0_i32_1 = arith.constant 0 : i32
    return %c0_i32, %c0_i32_0 : i32, i32
  }
  func.func @transform_3(%arg0: i32) -> (i32, i32, i32) {
    %c0_i32 = arith.constant 0 : i32
    %c0_i32_0 = arith.constant 0 : i32
    %c0_i32_1 = arith.constant 0 : i32
    return %arg0, %c0_i32, %c0_i32_0 : i32, i32, i32
  }
  func.func @transform_4(%arg0: i32) -> (i32, i32, i32) {
    %c0_i32 = arith.constant 0 : i32
    %c0_i32_0 = arith.constant 0 : i32
    %c0_i32_1 = arith.constant 0 : i32
    return %arg0, %c0_i32, %c0_i32_0 : i32, i32, i32
  }
}

module attributes {stable_mosaic.version = 11 : i64} {
  func.func @kernel(%arg0: i32, %arg1: memref<2x2xi32, #tpu.memory_space<smem>>, %arg2: memref<2x2xf32, #tpu.memory_space<smem>>, %arg3: memref<1x16x32xf32, #tpu.memory_space<vmem>>, %arg4: memref<1x16x32xf32, #tpu.memory_space<vmem>>, %arg5: memref<32x32xbf16, #tpu.memory_space<vmem>>, %arg6: memref<1x32xf32, #tpu.memory_space<vmem>>, %arg7: memref<1x16x32xf32, #tpu.memory_space<vmem>>, %arg8: memref<32x32xf32, #tpu.memory_space<vmem>>) attributes {dimension_semantics = [#tpu.dimension_semantics<parallel>], iteration_bounds = array<i64: 2>, scalar_prefetch = 2 : i64, scratch_operands = 1 : i64, tpu.core_type = #tpu.core_type<tc>, window_params = [{transform_indices = @transform_0, window_bounds = array<i64: 1, 16, 32>}, {transform_indices = @transform_1, window_bounds = array<i64: 1, 16, 32>}, {pipeline_mode = #tpu.pipeline_mode<synchronous>, transform_indices = @transform_2, window_bounds = array<i64: 32, 32>}, {pipeline_mode = #tpu.pipeline_mode<synchronous>, transform_indices = @transform_3, window_bounds = array<i64: 1, 32>}, {transform_indices = @transform_4, window_bounds = array<i64: 1, 16, 32>}]} {
    %c0 = arith.constant 0 : index
    %c0_0 = arith.constant 0 : index
    %c0_1 = arith.constant 0 : index
    %0 = vector.load %arg3[%c0, %c0_0, %c0_1] : memref<1x16x32xf32, #tpu.memory_space<vmem>>, vector<1x16x32xf32>
    %1 = vector.shape_cast %0 : vector<1x16x32xf32> to vector<16x32xf32>
    %c0_2 = arith.constant 0 : index
    %c0_3 = arith.constant 0 : index
    %2 = vector.load %arg8[%c0_2, %c0_3] : memref<32x32xf32, #tpu.memory_space<vmem>>, vector<16x32xf32>
    tpu.vector_store %arg8[%c0_2, %c0_3], %1 {strides = array<i32>} : memref<32x32xf32, #tpu.memory_space<vmem>>, vector<16x32xf32>,
    %c16 = arith.constant 16 : index
    %c0_4 = arith.constant 0 : index
    %3 = vector.load %arg8[%c16, %c0_4] : memref<32x32xf32, #tpu.memory_space<vmem>>, vector<16x32xf32>
    tpu.vector_store %arg8[%c16, %c0_4], %1 {strides = array<i32>} : memref<32x32xf32, #tpu.memory_space<vmem>>, vector<16x32xf32>,
    %cst = arith.constant 0.000000e+00 : f32
    %4 = vector.broadcast %cst : f32 to vector<16x32xf32>
    %5 = arith.index_cast %arg0 : i32 to index
    %c0_5 = arith.constant 0 : index
    %6 = memref.load %arg1[%5, %c0_5] : memref<2x2xi32, #tpu.memory_space<smem>>
    %7 = arith.index_cast %6 : i32 to index
    %c0_6 = arith.constant 0 : index
    %8 = vector.load %arg8[%7, %c0_6] : memref<32x32xf32, #tpu.memory_space<vmem>>, vector<16x32xf32>
    %9 = arith.index_cast %arg0 : i32 to index
    %c0_7 = arith.constant 0 : index
    %10 = memref.load %arg2[%9, %c0_7] : memref<2x2xf32, #tpu.memory_space<smem>>
    %11 = vector.broadcast %10 : f32 to vector<16x32xf32>
    %12 = arith.mulf %8, %11 : vector<16x32xf32>
    %13 = arith.addf %4, %12 : vector<16x32xf32>
    %14 = arith.index_cast %arg0 : i32 to index
    %c1 = arith.constant 1 : index
    %15 = memref.load %arg1[%14, %c1] : memref<2x2xi32, #tpu.memory_space<smem>>
    %16 = arith.index_cast %15 : i32 to index
    %c0_8 = arith.constant 0 : index
    %17 = vector.load %arg8[%16, %c0_8] : memref<32x32xf32, #tpu.memory_space<vmem>>, vector<16x32xf32>
    %18 = arith.index_cast %arg0 : i32 to index
    %c1_9 = arith.constant 1 : index
    %19 = memref.load %arg2[%18, %c1_9] : memref<2x2xf32, #tpu.memory_space<smem>>
    %20 = vector.broadcast %19 : f32 to vector<16x32xf32>
    %21 = arith.mulf %17, %20 : vector<16x32xf32>
    %22 = arith.addf %13, %21 : vector<16x32xf32>
    %23 = arith.truncf %22 : vector<16x32xf32> to vector<16x32xbf16>
    %c0_10 = arith.constant 0 : index
    %c0_11 = arith.constant 0 : index
    %24 = vector.load %arg5[%c0_10, %c0_11] : memref<32x32xbf16, #tpu.memory_space<vmem>>, vector<32x32xbf16>
    %cst_12 = arith.constant dense<0.000000e+00> : vector<16x32xf32>
    %25 = tpu.matmul %23, %24, %cst_12 {dimension_numbers = #tpu.dot_dimension_numbers<[1], [0], [0], [1], [0, 0, 1, 1], [], []>} : vector<16x32xbf16>, vector<32x32xbf16>, vector<16x32xf32> -> vector<16x32xf32>
    %c0_13 = arith.constant 0 : index
    %c0_14 = arith.constant 0 : index
    %26 = vector.load %arg6[%c0_13, %c0_14] : memref<1x32xf32, #tpu.memory_space<vmem>>, vector<1x32xf32>
    %27 = vector.broadcast %26 : vector<1x32xf32> to vector<16x32xf32>
    %28 = arith.addf %25, %27 : vector<16x32xf32>
    %c0_15 = arith.constant 0 : index
    %c0_16 = arith.constant 0 : index
    %c0_17 = arith.constant 0 : index
    %29 = vector.load %arg4[%c0_15, %c0_16, %c0_17] : memref<1x16x32xf32, #tpu.memory_space<vmem>>, vector<1x16x32xf32>
    %30 = vector.shape_cast %29 : vector<1x16x32xf32> to vector<16x32xf32>
    %31 = arith.addf %30, %28 : vector<16x32xf32>
    %32 = vector.extract_strided_slice %31 {offsets = [0, 0], sizes = [1, 32], strides = [1, 1]} : vector<16x32xf32> to vector<1x32xf32>
    %33 = vector.extract_strided_slice %31 {offsets = [0, 0], sizes = [14, 32], strides = [1, 1]} : vector<16x32xf32> to vector<14x32xf32>
    %34 = tpu.concatenate %32, %32, %33 in 0 : vector<1x32xf32>, vector<1x32xf32>, vector<14x32xf32> -> vector<16x32xf32>
    %35 = vector.extract_strided_slice %31 {offsets = [0, 0], sizes = [1, 32], strides = [1, 1]} : vector<16x32xf32> to vector<1x32xf32>
    %36 = vector.extract_strided_slice %31 {offsets = [0, 0], sizes = [15, 32], strides = [1, 1]} : vector<16x32xf32> to vector<15x32xf32>
    %37 = tpu.concatenate %35, %36 in 0 : vector<1x32xf32>, vector<15x32xf32> -> vector<16x32xf32>
    %38 = arith.addf %34, %37 : vector<16x32xf32>
    %39 = arith.addf %38, %31 : vector<16x32xf32>
    %40 = vector.extract_strided_slice %31 {offsets = [1, 0], sizes = [15, 32], strides = [1, 1]} : vector<16x32xf32> to vector<15x32xf32>
    %41 = vector.extract_strided_slice %31 {offsets = [15, 0], sizes = [1, 32], strides = [1, 1]} : vector<16x32xf32> to vector<1x32xf32>
    %42 = tpu.concatenate %40, %41 in 0 : vector<15x32xf32>, vector<1x32xf32> -> vector<16x32xf32>
    %43 = arith.addf %39, %42 : vector<16x32xf32>
    %44 = vector.extract_strided_slice %31 {offsets = [2, 0], sizes = [14, 32], strides = [1, 1]} : vector<16x32xf32> to vector<14x32xf32>
    %45 = vector.extract_strided_slice %31 {offsets = [15, 0], sizes = [1, 32], strides = [1, 1]} : vector<16x32xf32> to vector<1x32xf32>
    %46 = tpu.concatenate %44, %45, %45 in 0 : vector<14x32xf32>, vector<1x32xf32>, vector<1x32xf32> -> vector<16x32xf32>
    %47 = arith.addf %43, %46 : vector<16x32xf32>
    %cst_18 = arith.constant 2.000000e-01 : f32
    %48 = vector.broadcast %cst_18 : f32 to vector<16x32xf32>
    %49 = arith.mulf %47, %48 : vector<16x32xf32>
    %50 = arith.subf %31, %49 : vector<16x32xf32>
    %c0_19 = arith.constant 0 : index
    %c0_20 = arith.constant 0 : index
    %c0_21 = arith.constant 0 : index
    %51 = vector.load %arg7[%c0_19, %c0_20, %c0_21] : memref<1x16x32xf32, #tpu.memory_space<vmem>>, vector<1x16x32xf32>
    %52 = vector.shape_cast %51 : vector<1x16x32xf32> to vector<16x32xf32>
    %53 = vector.shape_cast %50 : vector<16x32xf32> to vector<1x16x32xf32>
    tpu.vector_store %arg7[%c0_19, %c0_20, %c0_21], %53 {strides = array<i32>} : memref<1x16x32xf32, #tpu.memory_space<vmem>>, vector<1x16x32xf32>,
    return
  }
  func.func @transform_0(%arg0: i32, %arg1: memref<2x2xi32, #tpu.memory_space<smem>>, %arg2: memref<2x2xf32, #tpu.memory_space<smem>>) -> (i32, i32, i32) {
    %c0_i32 = arith.constant 0 : i32
    %c0_i32_0 = arith.constant 0 : i32
    %c0_i32_1 = arith.constant 0 : i32
    return %arg0, %c0_i32, %c0_i32_0 : i32, i32, i32
  }
  func.func @transform_1(%arg0: i32, %arg1: memref<2x2xi32, #tpu.memory_space<smem>>, %arg2: memref<2x2xf32, #tpu.memory_space<smem>>) -> (i32, i32, i32) {
    %c0_i32 = arith.constant 0 : i32
    %c0_i32_0 = arith.constant 0 : i32
    %c0_i32_1 = arith.constant 0 : i32
    return %arg0, %c0_i32, %c0_i32_0 : i32, i32, i32
  }
  func.func @transform_2(%arg0: i32, %arg1: memref<2x2xi32, #tpu.memory_space<smem>>, %arg2: memref<2x2xf32, #tpu.memory_space<smem>>) -> (i32, i32) {
    %c0_i32 = arith.constant 0 : i32
    %c0_i32_0 = arith.constant 0 : i32
    %c0_i32_1 = arith.constant 0 : i32
    return %c0_i32, %c0_i32_0 : i32, i32
  }
  func.func @transform_3(%arg0: i32, %arg1: memref<2x2xi32, #tpu.memory_space<smem>>, %arg2: memref<2x2xf32, #tpu.memory_space<smem>>) -> (i32, i32) {
    %c0_i32 = arith.constant 0 : i32
    %c0_i32_0 = arith.constant 0 : i32
    %c0_i32_1 = arith.constant 0 : i32
    return %c0_i32, %c0_i32_0 : i32, i32
  }
  func.func @transform_4(%arg0: i32, %arg1: memref<2x2xi32, #tpu.memory_space<smem>>, %arg2: memref<2x2xf32, #tpu.memory_space<smem>>) -> (i32, i32, i32) {
    %c0_i32 = arith.constant 0 : i32
    %c0_i32_0 = arith.constant 0 : i32
    %c0_i32_1 = arith.constant 0 : i32
    return %arg0, %c0_i32, %c0_i32_0 : i32, i32, i32
  }
}

module attributes {stable_mosaic.version = 11 : i64} {
  func.func @kernel(%arg0: i32, %arg1: memref<2x2xi32, #tpu.memory_space<smem>>, %arg2: memref<2x2xf32, #tpu.memory_space<smem>>, %arg3: memref<1x16x32xf32, #tpu.memory_space<vmem>>, %arg4: memref<1x16x32xf32, #tpu.memory_space<vmem>>, %arg5: memref<32x32xbf16, #tpu.memory_space<vmem>>, %arg6: memref<1x32xf32, #tpu.memory_space<vmem>>, %arg7: memref<1x16x32xf32, #tpu.memory_space<vmem>>, %arg8: memref<1x16x32xf32, #tpu.memory_space<vmem>>, %arg9: memref<32x32xf32, #tpu.memory_space<vmem>>) attributes {dimension_semantics = [#tpu.dimension_semantics<parallel>], iteration_bounds = array<i64: 2>, scalar_prefetch = 2 : i64, scratch_operands = 1 : i64, tpu.core_type = #tpu.core_type<tc>, window_params = [{transform_indices = @transform_0, window_bounds = array<i64: 1, 16, 32>}, {transform_indices = @transform_1, window_bounds = array<i64: 1, 16, 32>}, {pipeline_mode = #tpu.pipeline_mode<synchronous>, transform_indices = @transform_2, window_bounds = array<i64: 32, 32>}, {pipeline_mode = #tpu.pipeline_mode<synchronous>, transform_indices = @transform_3, window_bounds = array<i64: 1, 32>}, {transform_indices = @transform_4, window_bounds = array<i64: 1, 16, 32>}, {transform_indices = @transform_5, window_bounds = array<i64: 1, 16, 32>}]} {
    %c0 = arith.constant 0 : index
    %c0_0 = arith.constant 0 : index
    %c0_1 = arith.constant 0 : index
    %0 = vector.load %arg3[%c0, %c0_0, %c0_1] : memref<1x16x32xf32, #tpu.memory_space<vmem>>, vector<1x16x32xf32>
    %1 = vector.shape_cast %0 : vector<1x16x32xf32> to vector<16x32xf32>
    %c0_2 = arith.constant 0 : index
    %c0_3 = arith.constant 0 : index
    %2 = vector.load %arg9[%c0_2, %c0_3] : memref<32x32xf32, #tpu.memory_space<vmem>>, vector<16x32xf32>
    tpu.vector_store %arg9[%c0_2, %c0_3], %1 {strides = array<i32>} : memref<32x32xf32, #tpu.memory_space<vmem>>, vector<16x32xf32>,
    %c16 = arith.constant 16 : index
    %c0_4 = arith.constant 0 : index
    %3 = vector.load %arg9[%c16, %c0_4] : memref<32x32xf32, #tpu.memory_space<vmem>>, vector<16x32xf32>
    tpu.vector_store %arg9[%c16, %c0_4], %1 {strides = array<i32>} : memref<32x32xf32, #tpu.memory_space<vmem>>, vector<16x32xf32>,
    %cst = arith.constant 0.000000e+00 : f32
    %4 = vector.broadcast %cst : f32 to vector<16x32xf32>
    %5 = arith.index_cast %arg0 : i32 to index
    %c0_5 = arith.constant 0 : index
    %6 = memref.load %arg1[%5, %c0_5] : memref<2x2xi32, #tpu.memory_space<smem>>
    %7 = arith.index_cast %6 : i32 to index
    %c0_6 = arith.constant 0 : index
    %8 = vector.load %arg9[%7, %c0_6] : memref<32x32xf32, #tpu.memory_space<vmem>>, vector<16x32xf32>
    %9 = arith.index_cast %arg0 : i32 to index
    %c0_7 = arith.constant 0 : index
    %10 = memref.load %arg2[%9, %c0_7] : memref<2x2xf32, #tpu.memory_space<smem>>
    %11 = vector.broadcast %10 : f32 to vector<16x32xf32>
    %12 = arith.mulf %8, %11 : vector<16x32xf32>
    %13 = arith.addf %4, %12 : vector<16x32xf32>
    %14 = arith.index_cast %arg0 : i32 to index
    %c1 = arith.constant 1 : index
    %15 = memref.load %arg1[%14, %c1] : memref<2x2xi32, #tpu.memory_space<smem>>
    %16 = arith.index_cast %15 : i32 to index
    %c0_8 = arith.constant 0 : index
    %17 = vector.load %arg9[%16, %c0_8] : memref<32x32xf32, #tpu.memory_space<vmem>>, vector<16x32xf32>
    %18 = arith.index_cast %arg0 : i32 to index
    %c1_9 = arith.constant 1 : index
    %19 = memref.load %arg2[%18, %c1_9] : memref<2x2xf32, #tpu.memory_space<smem>>
    %20 = vector.broadcast %19 : f32 to vector<16x32xf32>
    %21 = arith.mulf %17, %20 : vector<16x32xf32>
    %22 = arith.addf %13, %21 : vector<16x32xf32>
    %23 = arith.truncf %22 : vector<16x32xf32> to vector<16x32xbf16>
    %c0_10 = arith.constant 0 : index
    %c0_11 = arith.constant 0 : index
    %24 = vector.load %arg5[%c0_10, %c0_11] : memref<32x32xbf16, #tpu.memory_space<vmem>>, vector<32x32xbf16>
    %cst_12 = arith.constant dense<0.000000e+00> : vector<16x32xf32>
    %25 = tpu.matmul %23, %24, %cst_12 {dimension_numbers = #tpu.dot_dimension_numbers<[1], [0], [0], [1], [0, 0, 1, 1], [], []>} : vector<16x32xbf16>, vector<32x32xbf16>, vector<16x32xf32> -> vector<16x32xf32>
    %c0_13 = arith.constant 0 : index
    %c0_14 = arith.constant 0 : index
    %26 = vector.load %arg6[%c0_13, %c0_14] : memref<1x32xf32, #tpu.memory_space<vmem>>, vector<1x32xf32>
    %27 = vector.broadcast %26 : vector<1x32xf32> to vector<16x32xf32>
    %28 = arith.addf %25, %27 : vector<16x32xf32>
    %c0_15 = arith.constant 0 : index
    %c0_16 = arith.constant 0 : index
    %c0_17 = arith.constant 0 : index
    %29 = vector.load %arg4[%c0_15, %c0_16, %c0_17] : memref<1x16x32xf32, #tpu.memory_space<vmem>>, vector<1x16x32xf32>
    %30 = vector.shape_cast %29 : vector<1x16x32xf32> to vector<16x32xf32>
    %31 = arith.addf %30, %28 : vector<16x32xf32>
    %32 = vector.extract_strided_slice %31 {offsets = [0, 0], sizes = [1, 32], strides = [1, 1]} : vector<16x32xf32> to vector<1x32xf32>
    %33 = vector.extract_strided_slice %31 {offsets = [0, 0], sizes = [14, 32], strides = [1, 1]} : vector<16x32xf32> to vector<14x32xf32>
    %34 = tpu.concatenate %32, %32, %33 in 0 : vector<1x32xf32>, vector<1x32xf32>, vector<14x32xf32> -> vector<16x32xf32>
    %35 = vector.extract_strided_slice %31 {offsets = [0, 0], sizes = [1, 32], strides = [1, 1]} : vector<16x32xf32> to vector<1x32xf32>
    %36 = vector.extract_strided_slice %31 {offsets = [0, 0], sizes = [15, 32], strides = [1, 1]} : vector<16x32xf32> to vector<15x32xf32>
    %37 = tpu.concatenate %35, %36 in 0 : vector<1x32xf32>, vector<15x32xf32> -> vector<16x32xf32>
    %38 = arith.addf %34, %37 : vector<16x32xf32>
    %39 = arith.addf %38, %31 : vector<16x32xf32>
    %40 = vector.extract_strided_slice %31 {offsets = [1, 0], sizes = [15, 32], strides = [1, 1]} : vector<16x32xf32> to vector<15x32xf32>
    %41 = vector.extract_strided_slice %31 {offsets = [15, 0], sizes = [1, 32], strides = [1, 1]} : vector<16x32xf32> to vector<1x32xf32>
    %42 = tpu.concatenate %40, %41 in 0 : vector<15x32xf32>, vector<1x32xf32> -> vector<16x32xf32>
    %43 = arith.addf %39, %42 : vector<16x32xf32>
    %44 = vector.extract_strided_slice %31 {offsets = [2, 0], sizes = [14, 32], strides = [1, 1]} : vector<16x32xf32> to vector<14x32xf32>
    %45 = vector.extract_strided_slice %31 {offsets = [15, 0], sizes = [1, 32], strides = [1, 1]} : vector<16x32xf32> to vector<1x32xf32>
    %46 = tpu.concatenate %44, %45, %45 in 0 : vector<14x32xf32>, vector<1x32xf32>, vector<1x32xf32> -> vector<16x32xf32>
    %47 = arith.addf %43, %46 : vector<16x32xf32>
    %cst_18 = arith.constant 2.000000e-01 : f32
    %48 = vector.broadcast %cst_18 : f32 to vector<16x32xf32>
    %49 = arith.mulf %47, %48 : vector<16x32xf32>
    %50 = arith.subf %31, %49 : vector<16x32xf32>
    %c0_19 = arith.constant 0 : index
    %c0_20 = arith.constant 0 : index
    %c0_21 = arith.constant 0 : index
    %51 = vector.load %arg7[%c0_19, %c0_20, %c0_21] : memref<1x16x32xf32, #tpu.memory_space<vmem>>, vector<1x16x32xf32>
    %52 = vector.shape_cast %51 : vector<1x16x32xf32> to vector<16x32xf32>
    %53 = vector.shape_cast %50 : vector<16x32xf32> to vector<1x16x32xf32>
    tpu.vector_store %arg7[%c0_19, %c0_20, %c0_21], %53 {strides = array<i32>} : memref<1x16x32xf32, #tpu.memory_space<vmem>>, vector<1x16x32xf32>,
    %c0_22 = arith.constant 0 : index
    %c0_23 = arith.constant 0 : index
    %c0_24 = arith.constant 0 : index
    %54 = vector.load %arg8[%c0_22, %c0_23, %c0_24] : memref<1x16x32xf32, #tpu.memory_space<vmem>>, vector<1x16x32xf32>
    %55 = vector.shape_cast %54 : vector<1x16x32xf32> to vector<16x32xf32>
    %56 = vector.shape_cast %49 : vector<16x32xf32> to vector<1x16x32xf32>
    tpu.vector_store %arg8[%c0_22, %c0_23, %c0_24], %56 {strides = array<i32>} : memref<1x16x32xf32, #tpu.memory_space<vmem>>, vector<1x16x32xf32>,
    return
  }
  func.func @transform_0(%arg0: i32, %arg1: memref<2x2xi32, #tpu.memory_space<smem>>, %arg2: memref<2x2xf32, #tpu.memory_space<smem>>) -> (i32, i32, i32) {
    %c0_i32 = arith.constant 0 : i32
    %c0_i32_0 = arith.constant 0 : i32
    %c0_i32_1 = arith.constant 0 : i32
    return %arg0, %c0_i32, %c0_i32_0 : i32, i32, i32
  }
  func.func @transform_1(%arg0: i32, %arg1: memref<2x2xi32, #tpu.memory_space<smem>>, %arg2: memref<2x2xf32, #tpu.memory_space<smem>>) -> (i32, i32, i32) {
    %c0_i32 = arith.constant 0 : i32
    %c0_i32_0 = arith.constant 0 : i32
    %c0_i32_1 = arith.constant 0 : i32
    return %arg0, %c0_i32, %c0_i32_0 : i32, i32, i32
  }
  func.func @transform_2(%arg0: i32, %arg1: memref<2x2xi32, #tpu.memory_space<smem>>, %arg2: memref<2x2xf32, #tpu.memory_space<smem>>) -> (i32, i32) {
    %c0_i32 = arith.constant 0 : i32
    %c0_i32_0 = arith.constant 0 : i32
    %c0_i32_1 = arith.constant 0 : i32
    return %c0_i32, %c0_i32_0 : i32, i32
  }
  func.func @transform_3(%arg0: i32, %arg1: memref<2x2xi32, #tpu.memory_space<smem>>, %arg2: memref<2x2xf32, #tpu.memory_space<smem>>) -> (i32, i32) {
    %c0_i32 = arith.constant 0 : i32
    %c0_i32_0 = arith.constant 0 : i32
    %c0_i32_1 = arith.constant 0 : i32
    return %c0_i32, %c0_i32_0 : i32, i32
  }
  func.func @transform_4(%arg0: i32, %arg1: memref<2x2xi32, #tpu.memory_space<smem>>, %arg2: memref<2x2xf32, #tpu.memory_space<smem>>) -> (i32, i32, i32) {
    %c0_i32 = arith.constant 0 : i32
    %c0_i32_0 = arith.constant 0 : i32
    %c0_i32_1 = arith.constant 0 : i32
    return %arg0, %c0_i32, %c0_i32_0 : i32, i32, i32
  }
  func.func @transform_5(%arg0: i32, %arg1: memref<2x2xi32, #tpu.memory_space<smem>>, %arg2: memref<2x2xf32, #tpu.memory_space<smem>>) -> (i32, i32, i32) {
    %c0_i32 = arith.constant 0 : i32
    %c0_i32_0 = arith.constant 0 : i32
    %c0_i32_1 = arith.constant 0 : i32
    return %arg0, %c0_i32, %c0_i32_0 : i32, i32, i32
  }
}

module attributes {stable_mosaic.version = 11 : i64} {
  func.func @kernel(%arg0: i32, %arg1: memref<1x16x32xf32, #tpu.memory_space<vmem>>, %arg2: memref<32x64xbf16, #tpu.memory_space<vmem>>, %arg3: memref<64x32xbf16, #tpu.memory_space<vmem>>, %arg4: memref<1x16x32xf32, #tpu.memory_space<vmem>>) attributes {dimension_semantics = [#tpu.dimension_semantics<parallel>], iteration_bounds = array<i64: 2>, scalar_prefetch = 0 : i64, scratch_operands = 0 : i64, tpu.core_type = #tpu.core_type<tc>, window_params = [{transform_indices = @transform_0, window_bounds = array<i64: 1, 16, 32>}, {pipeline_mode = #tpu.pipeline_mode<synchronous>, transform_indices = @transform_1, window_bounds = array<i64: 32, 64>}, {pipeline_mode = #tpu.pipeline_mode<synchronous>, transform_indices = @transform_2, window_bounds = array<i64: 64, 32>}, {transform_indices = @transform_3, window_bounds = array<i64: 1, 16, 32>}]} {
    %c0 = arith.constant 0 : index
    %c0_0 = arith.constant 0 : index
    %c0_1 = arith.constant 0 : index
    %0 = vector.load %arg1[%c0, %c0_0, %c0_1] : memref<1x16x32xf32, #tpu.memory_space<vmem>>, vector<1x16x32xf32>
    %1 = vector.shape_cast %0 : vector<1x16x32xf32> to vector<16x32xf32>
    %2 = arith.truncf %1 : vector<16x32xf32> to vector<16x32xbf16>
    %c0_2 = arith.constant 0 : index
    %c0_3 = arith.constant 0 : index
    %3 = vector.load %arg2[%c0_2, %c0_3] : memref<32x64xbf16, #tpu.memory_space<vmem>>, vector<32x64xbf16>
    %cst = arith.constant dense<0.000000e+00> : vector<16x64xf32>
    %4 = tpu.matmul %2, %3, %cst {dimension_numbers = #tpu.dot_dimension_numbers<[1], [0], [0], [1], [0, 0, 1, 1], [], []>} : vector<16x32xbf16>, vector<32x64xbf16>, vector<16x64xf32> -> vector<16x64xf32>
    %cst_4 = arith.constant 0.000000e+00 : f32
    %5 = vector.broadcast %cst_4 : f32 to vector<16x64xf32>
    %6 = arith.maximumf %4, %5 : vector<16x64xf32>
    %7 = arith.truncf %6 : vector<16x64xf32> to vector<16x64xbf16>
    %c0_5 = arith.constant 0 : index
    %c0_6 = arith.constant 0 : index
    %8 = vector.load %arg3[%c0_5, %c0_6] : memref<64x32xbf16, #tpu.memory_space<vmem>>, vector<64x32xbf16>
    %cst_7 = arith.constant dense<0.000000e+00> : vector<16x32xf32>
    %9 = tpu.matmul %7, %8, %cst_7 {dimension_numbers = #tpu.dot_dimension_numbers<[1], [0], [0], [1], [0, 0, 1, 1], [], []>} : vector<16x64xbf16>, vector<64x32xbf16>, vector<16x32xf32> -> vector<16x32xf32>
    %10 = arith.addf %1, %9 : vector<16x32xf32>
    %11 = vector.extract_strided_slice %10 {offsets = [0, 0], sizes = [1, 32], strides = [1, 1]} : vector<16x32xf32> to vector<1x32xf32>
    %12 = vector.extract_strided_slice %10 {offsets = [0, 0], sizes = [14, 32], strides = [1, 1]} : vector<16x32xf32> to vector<14x32xf32>
    %13 = tpu.concatenate %11, %11, %12 in 0 : vector<1x32xf32>, vector<1x32xf32>, vector<14x32xf32> -> vector<16x32xf32>
    %14 = vector.extract_strided_slice %10 {offsets = [0, 0], sizes = [1, 32], strides = [1, 1]} : vector<16x32xf32> to vector<1x32xf32>
    %15 = vector.extract_strided_slice %10 {offsets = [0, 0], sizes = [15, 32], strides = [1, 1]} : vector<16x32xf32> to vector<15x32xf32>
    %16 = tpu.concatenate %14, %15 in 0 : vector<1x32xf32>, vector<15x32xf32> -> vector<16x32xf32>
    %17 = arith.addf %13, %16 : vector<16x32xf32>
    %18 = arith.addf %17, %10 : vector<16x32xf32>
    %19 = vector.extract_strided_slice %10 {offsets = [1, 0], sizes = [15, 32], strides = [1, 1]} : vector<16x32xf32> to vector<15x32xf32>
    %20 = vector.extract_strided_slice %10 {offsets = [15, 0], sizes = [1, 32], strides = [1, 1]} : vector<16x32xf32> to vector<1x32xf32>
    %21 = tpu.concatenate %19, %20 in 0 : vector<15x32xf32>, vector<1x32xf32> -> vector<16x32xf32>
    %22 = arith.addf %18, %21 : vector<16x32xf32>
    %23 = vector.extract_strided_slice %10 {offsets = [2, 0], sizes = [14, 32], strides = [1, 1]} : vector<16x32xf32> to vector<14x32xf32>
    %24 = vector.extract_strided_slice %10 {offsets = [15, 0], sizes = [1, 32], strides = [1, 1]} : vector<16x32xf32> to vector<1x32xf32>
    %25 = tpu.concatenate %23, %24, %24 in 0 : vector<14x32xf32>, vector<1x32xf32>, vector<1x32xf32> -> vector<16x32xf32>
    %26 = arith.addf %22, %25 : vector<16x32xf32>
    %cst_8 = arith.constant 2.000000e-01 : f32
    %27 = vector.broadcast %cst_8 : f32 to vector<16x32xf32>
    %28 = arith.mulf %26, %27 : vector<16x32xf32>
    %29 = arith.subf %10, %28 : vector<16x32xf32>
    %c0_9 = arith.constant 0 : index
    %c0_10 = arith.constant 0 : index
    %c0_11 = arith.constant 0 : index
    %30 = vector.load %arg4[%c0_9, %c0_10, %c0_11] : memref<1x16x32xf32, #tpu.memory_space<vmem>>, vector<1x16x32xf32>
    %31 = vector.shape_cast %30 : vector<1x16x32xf32> to vector<16x32xf32>
    %32 = vector.shape_cast %29 : vector<16x32xf32> to vector<1x16x32xf32>
    tpu.vector_store %arg4[%c0_9, %c0_10, %c0_11], %32 {strides = array<i32>} : memref<1x16x32xf32, #tpu.memory_space<vmem>>, vector<1x16x32xf32>,
    return
  }
  func.func @transform_0(%arg0: i32) -> (i32, i32, i32) {
    %c0_i32 = arith.constant 0 : i32
    %c0_i32_0 = arith.constant 0 : i32
    %c0_i32_1 = arith.constant 0 : i32
    return %arg0, %c0_i32, %c0_i32_0 : i32, i32, i32
  }
  func.func @transform_1(%arg0: i32) -> (i32, i32) {
    %c0_i32 = arith.constant 0 : i32
    %c0_i32_0 = arith.constant 0 : i32
    %c0_i32_1 = arith.constant 0 : i32
    return %c0_i32, %c0_i32_0 : i32, i32
  }
  func.func @transform_2(%arg0: i32) -> (i32, i32) {
    %c0_i32 = arith.constant 0 : i32
    %c0_i32_0 = arith.constant 0 : i32
    %c0_i32_1 = arith.constant 0 : i32
    return %c0_i32, %c0_i32_0 : i32, i32
  }
  func.func @transform_3(%arg0: i32) -> (i32, i32, i32) {
    %c0_i32 = arith.constant 0 : i32
    %c0_i32_0 = arith.constant 0 : i32
    %c0_i32_1 = arith.constant 0 : i32
    return %arg0, %c0_i32, %c0_i32_0 : i32, i32, i32
  }
}

module attributes {stable_mosaic.version = 11 : i64} {
  func.func @_my_layernorm_kernel(%arg0: i32, %arg1: memref<1x16x32xf32, #tpu.memory_space<vmem>>, %arg2: memref<1x32xf32, #tpu.memory_space<vmem>>, %arg3: memref<1x32xf32, #tpu.memory_space<vmem>>, %arg4: memref<1x16x32xf32, #tpu.memory_space<vmem>>) attributes {dimension_semantics = [#tpu.dimension_semantics<parallel>], iteration_bounds = array<i64: 2>, scalar_prefetch = 0 : i64, scratch_operands = 0 : i64, tpu.core_type = #tpu.core_type<tc>, window_params = [{transform_indices = @transform_0, window_bounds = array<i64: 1, 16, 32>}, {pipeline_mode = #tpu.pipeline_mode<synchronous>, transform_indices = @transform_1, window_bounds = array<i64: 1, 32>}, {pipeline_mode = #tpu.pipeline_mode<synchronous>, transform_indices = @transform_2, window_bounds = array<i64: 1, 32>}, {transform_indices = @transform_3, window_bounds = array<i64: 1, 16, 32>}]} {
    %c0 = arith.constant 0 : index
    %c0_0 = arith.constant 0 : index
    %c0_1 = arith.constant 0 : index
    %0 = vector.load %arg1[%c0, %c0_0, %c0_1] : memref<1x16x32xf32, #tpu.memory_space<vmem>>, vector<1x16x32xf32>
    %1 = vector.shape_cast %0 : vector<1x16x32xf32> to vector<16x32xf32>
    %cst = arith.constant dense<0.000000e+00> : vector<16xf32>
    %2 = vector.multi_reduction <add>, %1, %cst [1] : vector<16x32xf32> to vector<16xf32>
    %3 = vector.shape_cast %2 : vector<16xf32> to vector<16x1xf32>
    %cst_2 = arith.constant 3.200000e+01 : f32
    %4 = vector.broadcast %cst_2 : f32 to vector<16x1xf32>
    %5 = arith.divf %3, %4 : vector<16x1xf32>
    %6 = vector.broadcast %5 : vector<16x1xf32> to vector<16x32xf32>
    %7 = arith.subf %1, %6 : vector<16x32xf32>
    %8 = arith.mulf %7, %7 : vector<16x32xf32>
    %cst_3 = arith.constant dense<0.000000e+00> : vector<16xf32>
    %9 = vector.multi_reduction <add>, %8, %cst_3 [1] : vector<16x32xf32> to vector<16xf32>
    %10 = vector.shape_cast %9 : vector<16xf32> to vector<16x1xf32>
    %cst_4 = arith.constant 3.200000e+01 : f32
    %11 = vector.broadcast %cst_4 : f32 to vector<16x1xf32>
    %12 = arith.divf %10, %11 : vector<16x1xf32>
    %13 = vector.broadcast %5 : vector<16x1xf32> to vector<16x32xf32>
    %14 = arith.subf %1, %13 : vector<16x32xf32>
    %cst_5 = arith.constant 9.99999974E-6 : f32
    %15 = vector.broadcast %cst_5 : f32 to vector<16x1xf32>
    %16 = arith.addf %12, %15 : vector<16x1xf32>
    %17 = math.rsqrt %16 : vector<16x1xf32>
    %18 = vector.broadcast %17 : vector<16x1xf32> to vector<16x32xf32>
    %19 = arith.mulf %14, %18 : vector<16x32xf32>
    %c0_6 = arith.constant 0 : index
    %c0_7 = arith.constant 0 : index
    %20 = vector.load %arg2[%c0_6, %c0_7] : memref<1x32xf32, #tpu.memory_space<vmem>>, vector<1x32xf32>
    %21 = vector.broadcast %20 : vector<1x32xf32> to vector<16x32xf32>
    %22 = arith.mulf %19, %21 : vector<16x32xf32>
    %c0_8 = arith.constant 0 : index
    %c0_9 = arith.constant 0 : index
    %23 = vector.load %arg3[%c0_8, %c0_9] : memref<1x32xf32, #tpu.memory_space<vmem>>, vector<1x32xf32>
    %24 = vector.broadcast %23 : vector<1x32xf32> to vector<16x32xf32>
    %25 = arith.addf %22, %24 : vector<16x32xf32>
    %cst_10 = arith.constant dense<0.000000e+00> : vector<32xf32>
    %26 = vector.multi_reduction <add>, %25, %cst_10 [0] : vector<16x32xf32> to vector<32xf32>
    %27 = vector.shape_cast %26 : vector<32xf32> to vector<1x32xf32>
    %cst_11 = arith.constant 1.600000e+01 : f32
    %28 = vector.broadcast %cst_11 : f32 to vector<1x32xf32>
    %29 = arith.divf %27, %28 : vector<1x32xf32>
    %30 = vector.broadcast %29 : vector<1x32xf32> to vector<16x32xf32>
    %31 = arith.subf %25, %30 : vector<16x32xf32>
    %c0_12 = arith.constant 0 : index
    %c0_13 = arith.constant 0 : index
    %c0_14 = arith.constant 0 : index
    %32 = vector.load %arg4[%c0_12, %c0_13, %c0_14] : memref<1x16x32xf32, #tpu.memory_space<vmem>>, vector<1x16x32xf32>
    %33 = vector.shape_cast %32 : vector<1x16x32xf32> to vector<16x32xf32>
    %34 = vector.shape_cast %31 : vector<16x32xf32> to vector<1x16x32xf32>
    tpu.vector_store %arg4[%c0_12, %c0_13, %c0_14], %34 {strides = array<i32>} : memref<1x16x32xf32, #tpu.memory_space<vmem>>, vector<1x16x32xf32>,
    return
  }
  func.func @transform_0(%arg0: i32) -> (i32, i32, i32) {
    %c0_i32 = arith.constant 0 : i32
    %c0_i32_0 = arith.constant 0 : i32
    %c0_i32_1 = arith.constant 0 : i32
    return %arg0, %c0_i32, %c0_i32_0 : i32, i32, i32
  }
  func.func @transform_1(%arg0: i32) -> (i32, i32) {
    %c0_i32 = arith.constant 0 : i32
    %c0_i32_0 = arith.constant 0 : i32
    %c0_i32_1 = arith.constant 0 : i32
    return %c0_i32, %c0_i32_0 : i32, i32
  }
  func.func @transform_2(%arg0: i32) -> (i32, i32) {
    %c0_i32 = arith.constant 0 : i32
    %c0_i32_0 = arith.constant 0 : i32
    %c0_i32_1 = arith.constant 0 : i32
    return %c0_i32, %c0_i32_0 : i32, i32
  }
  func.func @transform_3(%arg0: i32) -> (i32, i32, i32) {
    %c0_i32 = arith.constant 0 : i32
    %c0_i32_0 = arith.constant 0 : i32
    %c0_i32_1 = arith.constant 0 : i32
    return %arg0, %c0_i32, %c0_i32_0 : i32, i32, i32
  }
}

module attributes {stable_mosaic.version = 11 : i64} {
  func.func @kernel(%arg0: i32, %arg1: memref<1x16x32xf32, #tpu.memory_space<vmem>>, %arg2: memref<1x16x32xf32, #tpu.memory_space<vmem>>, %arg3: memref<32x32xbf16, #tpu.memory_space<vmem>>, %arg4: memref<1x32xf32, #tpu.memory_space<vmem>>, %arg5: memref<32x64xbf16, #tpu.memory_space<vmem>>, %arg6: memref<1x64xf32, #tpu.memory_space<vmem>>, %arg7: memref<1x1x16xf32, #tpu.memory_space<vmem>>, %arg8: memref<1x16x32xf32, #tpu.memory_space<vmem>>) attributes {dimension_semantics = [#tpu.dimension_semantics<parallel>], iteration_bounds = array<i64: 2>, scalar_prefetch = 0 : i64, scratch_operands = 0 : i64, tpu.core_type = #tpu.core_type<tc>, window_params = [{transform_indices = @transform_0, window_bounds = array<i64: 1, 16, 32>}, {transform_indices = @transform_1, window_bounds = array<i64: 1, 16, 32>}, {pipeline_mode = #tpu.pipeline_mode<synchronous>, transform_indices = @transform_2, window_bounds = array<i64: 32, 32>}, {pipeline_mode = #tpu.pipeline_mode<synchronous>, transform_indices = @transform_3, window_bounds = array<i64: 1, 32>}, {pipeline_mode = #tpu.pipeline_mode<synchronous>, transform_indices = @transform_4, window_bounds = array<i64: 32, 64>}, {pipeline_mode = #tpu.pipeline_mode<synchronous>, transform_indices = @transform_5, window_bounds = array<i64: 1, 64>}, {transform_indices = @transform_6, window_bounds = array<i64: 1, 1, 16>}, {transform_indices = @transform_7, window_bounds = array<i64: 1, 16, 32>}]} {
    %c0 = arith.constant 0 : index
    %c0_0 = arith.constant 0 : index
    %c0_1 = arith.constant 0 : index
    %0 = vector.load %arg1[%c0, %c0_0, %c0_1] : memref<1x16x32xf32, #tpu.memory_space<vmem>>, vector<1x16x32xf32>
    %1 = vector.shape_cast %0 : vector<1x16x32xf32> to vector<16x32xf32>
    %2 = arith.truncf %1 : vector<16x32xf32> to vector<16x32xbf16>
    %c0_2 = arith.constant 0 : index
    %c0_3 = arith.constant 0 : index
    %3 = vector.load %arg3[%c0_2, %c0_3] : memref<32x32xbf16, #tpu.memory_space<vmem>>, vector<32x32xbf16>
    %cst = arith.constant dense<0.000000e+00> : vector<16x32xf32>
    %4 = tpu.matmul %2, %3, %cst {dimension_numbers = #tpu.dot_dimension_numbers<[1], [0], [0], [1], [0, 0, 1, 1], [], []>} : vector<16x32xbf16>, vector<32x32xbf16>, vector<16x32xf32> -> vector<16x32xf32>
    %c0_4 = arith.constant 0 : index
    %c0_5 = arith.constant 0 : index
    %5 = vector.load %arg4[%c0_4, %c0_5] : memref<1x32xf32, #tpu.memory_space<vmem>>, vector<1x32xf32>
    %6 = vector.broadcast %5 : vector<1x32xf32> to vector<16x32xf32>
    %7 = arith.addf %4, %6 : vector<16x32xf32>
    %c0_6 = arith.constant 0 : index
    %c0_7 = arith.constant 0 : index
    %c0_8 = arith.constant 0 : index
    %8 = vector.load %arg2[%c0_6, %c0_7, %c0_8] : memref<1x16x32xf32, #tpu.memory_space<vmem>>, vector<1x16x32xf32>
    %9 = vector.shape_cast %8 : vector<1x16x32xf32> to vector<16x32xf32>
    %10 = arith.truncf %9 : vector<16x32xf32> to vector<16x32xbf16>
    %c0_9 = arith.constant 0 : index
    %c0_10 = arith.constant 0 : index
    %11 = vector.load %arg5[%c0_9, %c0_10] : memref<32x64xbf16, #tpu.memory_space<vmem>>, vector<32x64xbf16>
    %cst_11 = arith.constant dense<0.000000e+00> : vector<16x64xf32>
    %12 = tpu.matmul %10, %11, %cst_11 {dimension_numbers = #tpu.dot_dimension_numbers<[1], [0], [0], [1], [0, 0, 1, 1], [], []>} : vector<16x32xbf16>, vector<32x64xbf16>, vector<16x64xf32> -> vector<16x64xf32>
    %c0_12 = arith.constant 0 : index
    %c0_13 = arith.constant 0 : index
    %13 = vector.load %arg6[%c0_12, %c0_13] : memref<1x64xf32, #tpu.memory_space<vmem>>, vector<1x64xf32>
    %14 = vector.broadcast %13 : vector<1x64xf32> to vector<16x64xf32>
    %15 = arith.addf %12, %14 : vector<16x64xf32>
    %16 = vector.extract_strided_slice %15 {offsets = [0, 0], sizes = [16, 32], strides = [1, 1]} : vector<16x64xf32> to vector<16x32xf32>
    %17 = vector.extract_strided_slice %15 {offsets = [0, 32], sizes = [16, 32], strides = [1, 1]} : vector<16x64xf32> to vector<16x32xf32>
    %c0_14 = arith.constant 0 : index
    %c0_15 = arith.constant 0 : index
    %c0_16 = arith.constant 0 : index
    %18 = vector.load %arg8[%c0_14, %c0_15, %c0_16] : memref<1x16x32xf32, #tpu.memory_space<vmem>>, vector<1x16x32xf32>
    %19 = vector.shape_cast %18 : vector<1x16x32xf32> to vector<16x32xf32>
    %20 = vector.shape_cast %17 : vector<16x32xf32> to vector<1x16x32xf32>
    tpu.vector_store %arg8[%c0_14, %c0_15, %c0_16], %20 {strides = array<i32>} : memref<1x16x32xf32, #tpu.memory_space<vmem>>, vector<1x16x32xf32>,
    %21 = arith.truncf %16 : vector<16x32xf32> to vector<16x32xbf16>
    %22 = arith.truncf %7 : vector<16x32xf32> to vector<16x32xbf16>
    %cst_17 = arith.constant dense<0.000000e+00> : vector<16x16xf32>
    %23 = tpu.matmul %21, %22, %cst_17 {dimension_numbers = #tpu.dot_dimension_numbers<[1], [1], [0], [0], [0, 0, 1, 0], [], []>} : vector<16x32xbf16>, vector<16x32xbf16>, vector<16x16xf32> -> vector<16x16xf32>
    %24 = tpu.iota {dimensions = array<i32: 0>} : vector<16x16xi32>
    %25 = vector.extract_strided_slice %23 {offsets = [0, 1], sizes = [16, 15], strides = [1, 1]} : vector<16x16xf32> to vector<16x15xf32>
    %26 = vector.extract_strided_slice %23 {offsets = [0, 0], sizes = [16, 1], strides = [1, 1]} : vector<16x16xf32> to vector<16x1xf32>
    %27 = tpu.concatenate %25, %26 in 1 : vector<16x15xf32>, vector<16x1xf32> -> vector<16x16xf32>
    %c1_i32 = arith.constant 1 : i32
    %28 = vector.broadcast %c1_i32 : i32 to vector<16x16xi32>
    %29 = arith.andi %24, %28 : vector<16x16xi32>
    %c0_i32 = arith.constant 0 : i32
    %30 = vector.broadcast %c0_i32 : i32 to vector<16x16xi32>
    %31 = arith.cmpi ne, %29, %30 : vector<16x16xi32>
    %32 = arith.select %31, %27, %23 : vector<16x16xi1>, vector<16x16xf32>
    %33 = vector.extract_strided_slice %32 {offsets = [0, 2], sizes = [16, 14], strides = [1, 1]} : vector<16x16xf32> to vector<16x14xf32>
    %34 = vector.extract_strided_slice %32 {offsets = [0, 0], sizes = [16, 2], strides = [1, 1]} : vector<16x16xf32> to vector<16x2xf32>
    %35 = tpu.concatenate %33, %34 in 1 : vector<16x14xf32>, vector<16x2xf32> -> vector<16x16xf32>
    %c2_i32 = arith.constant 2 : i32
    %36 = vector.broadcast %c2_i32 : i32 to vector<16x16xi32>
    %37 = arith.andi %24, %36 : vector<16x16xi32>
    %c0_i32_18 = arith.constant 0 : i32
    %38 = vector.broadcast %c0_i32_18 : i32 to vector<16x16xi32>
    %39 = arith.cmpi ne, %37, %38 : vector<16x16xi32>
    %40 = arith.select %39, %35, %32 : vector<16x16xi1>, vector<16x16xf32>
    %41 = vector.extract_strided_slice %40 {offsets = [0, 4], sizes = [16, 12], strides = [1, 1]} : vector<16x16xf32> to vector<16x12xf32>
    %42 = vector.extract_strided_slice %40 {offsets = [0, 0], sizes = [16, 4], strides = [1, 1]} : vector<16x16xf32> to vector<16x4xf32>
    %43 = tpu.concatenate %41, %42 in 1 : vector<16x12xf32>, vector<16x4xf32> -> vector<16x16xf32>
    %c4_i32 = arith.constant 4 : i32
    %44 = vector.broadcast %c4_i32 : i32 to vector<16x16xi32>
    %45 = arith.andi %24, %44 : vector<16x16xi32>
    %c0_i32_19 = arith.constant 0 : i32
    %46 = vector.broadcast %c0_i32_19 : i32 to vector<16x16xi32>
    %47 = arith.cmpi ne, %45, %46 : vector<16x16xi32>
    %48 = arith.select %47, %43, %40 : vector<16x16xi1>, vector<16x16xf32>
    %49 = vector.extract_strided_slice %48 {offsets = [0, 8], sizes = [16, 8], strides = [1, 1]} : vector<16x16xf32> to vector<16x8xf32>
    %50 = vector.extract_strided_slice %48 {offsets = [0, 0], sizes = [16, 8], strides = [1, 1]} : vector<16x16xf32> to vector<16x8xf32>
    %51 = tpu.concatenate %49, %50 in 1 : vector<16x8xf32>, vector<16x8xf32> -> vector<16x16xf32>
    %c8_i32 = arith.constant 8 : i32
    %52 = vector.broadcast %c8_i32 : i32 to vector<16x16xi32>
    %53 = arith.andi %24, %52 : vector<16x16xi32>
    %c0_i32_20 = arith.constant 0 : i32
    %54 = vector.broadcast %c0_i32_20 : i32 to vector<16x16xi32>
    %55 = arith.cmpi ne, %53, %54 : vector<16x16xi32>
    %56 = arith.select %55, %51, %48 : vector<16x16xi1>, vector<16x16xf32>
    %cst_21 = arith.constant dense<0.000000e+00> : vector<16xf32>
    %57 = vector.multi_reduction <add>, %56, %cst_21 [0] : vector<16x16xf32> to vector<16xf32>
    %58 = vector.shape_cast %57 : vector<16xf32> to vector<1x16xf32>
    %cst_22 = arith.constant 3.125000e-02 : f32
    %59 = vector.broadcast %cst_22 : f32 to vector<1x16xf32>
    %60 = arith.mulf %58, %59 : vector<1x16xf32>
    %c0_23 = arith.constant 0 : index
    %c0_24 = arith.constant 0 : index
    %c0_25 = arith.constant 0 : index
    %61 = vector.load %arg7[%c0_23, %c0_24, %c0_25] : memref<1x1x16xf32, #tpu.memory_space<vmem>>, vector<1x1x16xf32>
    %62 = vector.shape_cast %61 : vector<1x1x16xf32> to vector<1x16xf32>
    %63 = vector.shape_cast %60 : vector<1x16xf32> to vector<1x1x16xf32>
    tpu.vector_store %arg7[%c0_23, %c0_24, %c0_25], %63 {strides = array<i32>} : memref<1x1x16xf32, #tpu.memory_space<vmem>>, vector<1x1x16xf32>,
    return
  }
  func.func @transform_0(%arg0: i32) -> (i32, i32, i32) {
    %c0_i32 = arith.constant 0 : i32
    %c0_i32_0 = arith.constant 0 : i32
    %c0_i32_1 = arith.constant 0 : i32
    return %arg0, %c0_i32, %c0_i32_0 : i32, i32, i32
  }
  func.func @transform_1(%arg0: i32) -> (i32, i32, i32) {
    %c0_i32 = arith.constant 0 : i32
    %c0_i32_0 = arith.constant 0 : i32
    %c0_i32_1 = arith.constant 0 : i32
    return %arg0, %c0_i32, %c0_i32_0 : i32, i32, i32
  }
  func.func @transform_2(%arg0: i32) -> (i32, i32) {
    %c0_i32 = arith.constant 0 : i32
    %c0_i32_0 = arith.constant 0 : i32
    %c0_i32_1 = arith.constant 0 : i32
    return %c0_i32, %c0_i32_0 : i32, i32
  }
  func.func @transform_3(%arg0: i32) -> (i32, i32) {
    %c0_i32 = arith.constant 0 : i32
    %c0_i32_0 = arith.constant 0 : i32
    %c0_i32_1 = arith.constant 0 : i32
    return %c0_i32, %c0_i32_0 : i32, i32
  }
  func.func @transform_4(%arg0: i32) -> (i32, i32) {
    %c0_i32 = arith.constant 0 : i32
    %c0_i32_0 = arith.constant 0 : i32
    %c0_i32_1 = arith.constant 0 : i32
    return %c0_i32, %c0_i32_0 : i32, i32
  }
  func.func @transform_5(%arg0: i32) -> (i32, i32) {
    %c0_i32 = arith.constant 0 : i32
    %c0_i32_0 = arith.constant 0 : i32
    %c0_i32_1 = arith.constant 0 : i32
    return %c0_i32, %c0_i32_0 : i32, i32
  }
  func.func @transform_6(%arg0: i32) -> (i32, i32, i32) {
    %c0_i32 = arith.constant 0 : i32
    %c0_i32_0 = arith.constant 0 : i32
    %c0_i32_1 = arith.constant 0 : i32
    return %arg0, %c0_i32, %c0_i32_0 : i32, i32, i32
  }
  func.func @transform_7(%arg0: i32) -> (i32, i32, i32) {
    %c0_i32 = arith.constant 0 : i32
    %c0_i32_0 = arith.constant 0 : i32
    %c0_i32_1 = arith.constant 0 : i32
    return %arg0, %c0_i32, %c0_i32_0 : i32, i32, i32
  }
}

module attributes {stable_mosaic.version = 11 : i64} {
  func.func @kernel(%arg0: i32, %arg1: memref<2x2xi32, #tpu.memory_space<smem>>, %arg2: memref<2x2xf32, #tpu.memory_space<smem>>, %arg3: memref<1x16x32xf32, #tpu.memory_space<vmem>>, %arg4: memref<1x16x32xf32, #tpu.memory_space<vmem>>, %arg5: memref<32x32xbf16, #tpu.memory_space<vmem>>, %arg6: memref<1x32xf32, #tpu.memory_space<vmem>>, %arg7: memref<1x16x32xf32, #tpu.memory_space<vmem>>, %arg8: memref<1x16x32xf32, #tpu.memory_space<vmem>>, %arg9: memref<1x16x32xf32, #tpu.memory_space<vmem>>, %arg10: memref<32x32xf32, #tpu.memory_space<vmem>>) attributes {dimension_semantics = [#tpu.dimension_semantics<parallel>], iteration_bounds = array<i64: 2>, scalar_prefetch = 2 : i64, scratch_operands = 1 : i64, tpu.core_type = #tpu.core_type<tc>, window_params = [{transform_indices = @transform_0, window_bounds = array<i64: 1, 16, 32>}, {transform_indices = @transform_1, window_bounds = array<i64: 1, 16, 32>}, {pipeline_mode = #tpu.pipeline_mode<synchronous>, transform_indices = @transform_2, window_bounds = array<i64: 32, 32>}, {pipeline_mode = #tpu.pipeline_mode<synchronous>, transform_indices = @transform_3, window_bounds = array<i64: 1, 32>}, {transform_indices = @transform_4, window_bounds = array<i64: 1, 16, 32>}, {transform_indices = @transform_5, window_bounds = array<i64: 1, 16, 32>}, {transform_indices = @transform_6, window_bounds = array<i64: 1, 16, 32>}]} {
    %c0 = arith.constant 0 : index
    %c0_0 = arith.constant 0 : index
    %c0_1 = arith.constant 0 : index
    %0 = vector.load %arg7[%c0, %c0_0, %c0_1] : memref<1x16x32xf32, #tpu.memory_space<vmem>>, vector<1x16x32xf32>
    %1 = vector.shape_cast %0 : vector<1x16x32xf32> to vector<16x32xf32>
    %c0_2 = arith.constant 0 : index
    %c0_3 = arith.constant 0 : index
    %c0_4 = arith.constant 0 : index
    %2 = vector.load %arg3[%c0_2, %c0_3, %c0_4] : memref<1x16x32xf32, #tpu.memory_space<vmem>>, vector<1x16x32xf32>
    %3 = vector.shape_cast %2 : vector<1x16x32xf32> to vector<16x32xf32>
    %c0_5 = arith.constant 0 : index
    %c0_6 = arith.constant 0 : index
    %4 = vector.load %arg10[%c0_5, %c0_6] : memref<32x32xf32, #tpu.memory_space<vmem>>, vector<16x32xf32>
    tpu.vector_store %arg10[%c0_5, %c0_6], %3 {strides = array<i32>} : memref<32x32xf32, #tpu.memory_space<vmem>>, vector<16x32xf32>,
    %c16 = arith.constant 16 : index
    %c0_7 = arith.constant 0 : index
    %5 = vector.load %arg10[%c16, %c0_7] : memref<32x32xf32, #tpu.memory_space<vmem>>, vector<16x32xf32>
    tpu.vector_store %arg10[%c16, %c0_7], %3 {strides = array<i32>} : memref<32x32xf32, #tpu.memory_space<vmem>>, vector<16x32xf32>,
    %cst = arith.constant 0.000000e+00 : f32
    %6 = vector.broadcast %cst : f32 to vector<16x32xf32>
    %7 = arith.index_cast %arg0 : i32 to index
    %c0_8 = arith.constant 0 : index
    %8 = memref.load %arg1[%7, %c0_8] : memref<2x2xi32, #tpu.memory_space<smem>>
    %9 = arith.index_cast %8 : i32 to index
    %c0_9 = arith.constant 0 : index
    %10 = vector.load %arg10[%9, %c0_9] : memref<32x32xf32, #tpu.memory_space<vmem>>, vector<16x32xf32>
    %11 = arith.index_cast %arg0 : i32 to index
    %c0_10 = arith.constant 0 : index
    %12 = memref.load %arg2[%11, %c0_10] : memref<2x2xf32, #tpu.memory_space<smem>>
    %13 = vector.broadcast %12 : f32 to vector<16x32xf32>
    %14 = arith.mulf %10, %13 : vector<16x32xf32>
    %15 = arith.addf %6, %14 : vector<16x32xf32>
    %16 = arith.index_cast %arg0 : i32 to index
    %c1 = arith.constant 1 : index
    %17 = memref.load %arg1[%16, %c1] : memref<2x2xi32, #tpu.memory_space<smem>>
    %18 = arith.index_cast %17 : i32 to index
    %c0_11 = arith.constant 0 : index
    %19 = vector.load %arg10[%18, %c0_11] : memref<32x32xf32, #tpu.memory_space<vmem>>, vector<16x32xf32>
    %20 = arith.index_cast %arg0 : i32 to index
    %c1_12 = arith.constant 1 : index
    %21 = memref.load %arg2[%20, %c1_12] : memref<2x2xf32, #tpu.memory_space<smem>>
    %22 = vector.broadcast %21 : f32 to vector<16x32xf32>
    %23 = arith.mulf %19, %22 : vector<16x32xf32>
    %24 = arith.addf %15, %23 : vector<16x32xf32>
    %25 = arith.truncf %24 : vector<16x32xf32> to vector<16x32xbf16>
    %c0_13 = arith.constant 0 : index
    %c0_14 = arith.constant 0 : index
    %26 = vector.load %arg5[%c0_13, %c0_14] : memref<32x32xbf16, #tpu.memory_space<vmem>>, vector<32x32xbf16>
    %cst_15 = arith.constant dense<0.000000e+00> : vector<16x32xf32>
    %27 = tpu.matmul %25, %26, %cst_15 {dimension_numbers = #tpu.dot_dimension_numbers<[1], [0], [0], [1], [0, 0, 1, 1], [], []>} : vector<16x32xbf16>, vector<32x32xbf16>, vector<16x32xf32> -> vector<16x32xf32>
    %c0_16 = arith.constant 0 : index
    %c0_17 = arith.constant 0 : index
    %28 = vector.load %arg6[%c0_16, %c0_17] : memref<1x32xf32, #tpu.memory_space<vmem>>, vector<1x32xf32>
    %29 = vector.broadcast %28 : vector<1x32xf32> to vector<16x32xf32>
    %30 = arith.addf %27, %29 : vector<16x32xf32>
    %c0_18 = arith.constant 0 : index
    %c0_19 = arith.constant 0 : index
    %c0_20 = arith.constant 0 : index
    %31 = vector.load %arg4[%c0_18, %c0_19, %c0_20] : memref<1x16x32xf32, #tpu.memory_space<vmem>>, vector<1x16x32xf32>
    %32 = vector.shape_cast %31 : vector<1x16x32xf32> to vector<16x32xf32>
    %33 = arith.addf %32, %30 : vector<16x32xf32>
    %34 = vector.extract_strided_slice %33 {offsets = [0, 0], sizes = [1, 32], strides = [1, 1]} : vector<16x32xf32> to vector<1x32xf32>
    %35 = vector.extract_strided_slice %33 {offsets = [0, 0], sizes = [14, 32], strides = [1, 1]} : vector<16x32xf32> to vector<14x32xf32>
    %36 = tpu.concatenate %34, %34, %35 in 0 : vector<1x32xf32>, vector<1x32xf32>, vector<14x32xf32> -> vector<16x32xf32>
    %37 = vector.extract_strided_slice %33 {offsets = [0, 0], sizes = [1, 32], strides = [1, 1]} : vector<16x32xf32> to vector<1x32xf32>
    %38 = vector.extract_strided_slice %33 {offsets = [0, 0], sizes = [15, 32], strides = [1, 1]} : vector<16x32xf32> to vector<15x32xf32>
    %39 = tpu.concatenate %37, %38 in 0 : vector<1x32xf32>, vector<15x32xf32> -> vector<16x32xf32>
    %40 = arith.addf %36, %39 : vector<16x32xf32>
    %41 = arith.addf %40, %33 : vector<16x32xf32>
    %42 = vector.extract_strided_slice %33 {offsets = [1, 0], sizes = [15, 32], strides = [1, 1]} : vector<16x32xf32> to vector<15x32xf32>
    %43 = vector.extract_strided_slice %33 {offsets = [15, 0], sizes = [1, 32], strides = [1, 1]} : vector<16x32xf32> to vector<1x32xf32>
    %44 = tpu.concatenate %42, %43 in 0 : vector<15x32xf32>, vector<1x32xf32> -> vector<16x32xf32>
    %45 = arith.addf %41, %44 : vector<16x32xf32>
    %46 = vector.extract_strided_slice %33 {offsets = [2, 0], sizes = [14, 32], strides = [1, 1]} : vector<16x32xf32> to vector<14x32xf32>
    %47 = vector.extract_strided_slice %33 {offsets = [15, 0], sizes = [1, 32], strides = [1, 1]} : vector<16x32xf32> to vector<1x32xf32>
    %48 = tpu.concatenate %46, %47, %47 in 0 : vector<14x32xf32>, vector<1x32xf32>, vector<1x32xf32> -> vector<16x32xf32>
    %49 = arith.addf %45, %48 : vector<16x32xf32>
    %cst_21 = arith.constant 2.000000e-01 : f32
    %50 = vector.broadcast %cst_21 : f32 to vector<16x32xf32>
    %51 = arith.mulf %49, %50 : vector<16x32xf32>
    %52 = arith.subf %33, %51 : vector<16x32xf32>
    %c0_22 = arith.constant 0 : index
    %c0_23 = arith.constant 0 : index
    %c0_24 = arith.constant 0 : index
    %53 = vector.load %arg8[%c0_22, %c0_23, %c0_24] : memref<1x16x32xf32, #tpu.memory_space<vmem>>, vector<1x16x32xf32>
    %54 = vector.shape_cast %53 : vector<1x16x32xf32> to vector<16x32xf32>
    %55 = vector.shape_cast %52 : vector<16x32xf32> to vector<1x16x32xf32>
    tpu.vector_store %arg8[%c0_22, %c0_23, %c0_24], %55 {strides = array<i32>} : memref<1x16x32xf32, #tpu.memory_space<vmem>>, vector<1x16x32xf32>,
    %56 = arith.addf %51, %1 : vector<16x32xf32>
    %c0_25 = arith.constant 0 : index
    %c0_26 = arith.constant 0 : index
    %c0_27 = arith.constant 0 : index
    %57 = vector.load %arg9[%c0_25, %c0_26, %c0_27] : memref<1x16x32xf32, #tpu.memory_space<vmem>>, vector<1x16x32xf32>
    %58 = vector.shape_cast %57 : vector<1x16x32xf32> to vector<16x32xf32>
    %59 = vector.shape_cast %56 : vector<16x32xf32> to vector<1x16x32xf32>
    tpu.vector_store %arg9[%c0_25, %c0_26, %c0_27], %59 {strides = array<i32>} : memref<1x16x32xf32, #tpu.memory_space<vmem>>, vector<1x16x32xf32>,
    return
  }
  func.func @transform_0(%arg0: i32, %arg1: memref<2x2xi32, #tpu.memory_space<smem>>, %arg2: memref<2x2xf32, #tpu.memory_space<smem>>) -> (i32, i32, i32) {
    %c0_i32 = arith.constant 0 : i32
    %c0_i32_0 = arith.constant 0 : i32
    %c0_i32_1 = arith.constant 0 : i32
    return %arg0, %c0_i32, %c0_i32_0 : i32, i32, i32
  }
  func.func @transform_1(%arg0: i32, %arg1: memref<2x2xi32, #tpu.memory_space<smem>>, %arg2: memref<2x2xf32, #tpu.memory_space<smem>>) -> (i32, i32, i32) {
    %c0_i32 = arith.constant 0 : i32
    %c0_i32_0 = arith.constant 0 : i32
    %c0_i32_1 = arith.constant 0 : i32
    return %arg0, %c0_i32, %c0_i32_0 : i32, i32, i32
  }
  func.func @transform_2(%arg0: i32, %arg1: memref<2x2xi32, #tpu.memory_space<smem>>, %arg2: memref<2x2xf32, #tpu.memory_space<smem>>) -> (i32, i32) {
    %c0_i32 = arith.constant 0 : i32
    %c0_i32_0 = arith.constant 0 : i32
    %c0_i32_1 = arith.constant 0 : i32
    return %c0_i32, %c0_i32_0 : i32, i32
  }
  func.func @transform_3(%arg0: i32, %arg1: memref<2x2xi32, #tpu.memory_space<smem>>, %arg2: memref<2x2xf32, #tpu.memory_space<smem>>) -> (i32, i32) {
    %c0_i32 = arith.constant 0 : i32
    %c0_i32_0 = arith.constant 0 : i32
    %c0_i32_1 = arith.constant 0 : i32
    return %c0_i32, %c0_i32_0 : i32, i32
  }
  func.func @transform_4(%arg0: i32, %arg1: memref<2x2xi32, #tpu.memory_space<smem>>, %arg2: memref<2x2xf32, #tpu.memory_space<smem>>) -> (i32, i32, i32) {
    %c0_i32 = arith.constant 0 : i32
    %c0_i32_0 = arith.constant 0 : i32
    %c0_i32_1 = arith.constant 0 : i32
    return %arg0, %c0_i32, %c0_i32_0 : i32, i32, i32
  }
  func.func @transform_5(%arg0: i32, %arg1: memref<2x2xi32, #tpu.memory_space<smem>>, %arg2: memref<2x2xf32, #tpu.memory_space<smem>>) -> (i32, i32, i32) {
    %c0_i32 = arith.constant 0 : i32
    %c0_i32_0 = arith.constant 0 : i32
    %c0_i32_1 = arith.constant 0 : i32
    return %arg0, %c0_i32, %c0_i32_0 : i32, i32, i32
  }
  func.func @transform_6(%arg0: i32, %arg1: memref<2x2xi32, #tpu.memory_space<smem>>, %arg2: memref<2x2xf32, #tpu.memory_space<smem>>) -> (i32, i32, i32) {
    %c0_i32 = arith.constant 0 : i32
    %c0_i32_0 = arith.constant 0 : i32
    %c0_i32_1 = arith.constant 0 : i32
    return %arg0, %c0_i32, %c0_i32_0 : i32, i32, i32
  }
}

module attributes {stable_mosaic.version = 11 : i64} {
  func.func @kernel(%arg0: i32, %arg1: memref<1x16x32xf32, #tpu.memory_space<vmem>>, %arg2: memref<32x64xbf16, #tpu.memory_space<vmem>>, %arg3: memref<64x32xbf16, #tpu.memory_space<vmem>>, %arg4: memref<1x16x32xf32, #tpu.memory_space<vmem>>, %arg5: memref<1x16x32xf32, #tpu.memory_space<vmem>>, %arg6: memref<1x16x32xf32, #tpu.memory_space<vmem>>) attributes {dimension_semantics = [#tpu.dimension_semantics<parallel>], iteration_bounds = array<i64: 2>, scalar_prefetch = 0 : i64, scratch_operands = 0 : i64, tpu.core_type = #tpu.core_type<tc>, window_params = [{transform_indices = @transform_0, window_bounds = array<i64: 1, 16, 32>}, {pipeline_mode = #tpu.pipeline_mode<synchronous>, transform_indices = @transform_1, window_bounds = array<i64: 32, 64>}, {pipeline_mode = #tpu.pipeline_mode<synchronous>, transform_indices = @transform_2, window_bounds = array<i64: 64, 32>}, {transform_indices = @transform_3, window_bounds = array<i64: 1, 16, 32>}, {transform_indices = @transform_4, window_bounds = array<i64: 1, 16, 32>}, {transform_indices = @transform_5, window_bounds = array<i64: 1, 16, 32>}]} {
    %c0 = arith.constant 0 : index
    %c0_0 = arith.constant 0 : index
    %c0_1 = arith.constant 0 : index
    %0 = vector.load %arg4[%c0, %c0_0, %c0_1] : memref<1x16x32xf32, #tpu.memory_space<vmem>>, vector<1x16x32xf32>
    %1 = vector.shape_cast %0 : vector<1x16x32xf32> to vector<16x32xf32>
    %c0_2 = arith.constant 0 : index
    %c0_3 = arith.constant 0 : index
    %c0_4 = arith.constant 0 : index
    %2 = vector.load %arg1[%c0_2, %c0_3, %c0_4] : memref<1x16x32xf32, #tpu.memory_space<vmem>>, vector<1x16x32xf32>
    %3 = vector.shape_cast %2 : vector<1x16x32xf32> to vector<16x32xf32>
    %4 = arith.truncf %3 : vector<16x32xf32> to vector<16x32xbf16>
    %c0_5 = arith.constant 0 : index
    %c0_6 = arith.constant 0 : index
    %5 = vector.load %arg2[%c0_5, %c0_6] : memref<32x64xbf16, #tpu.memory_space<vmem>>, vector<32x64xbf16>
    %cst = arith.constant dense<0.000000e+00> : vector<16x64xf32>
    %6 = tpu.matmul %4, %5, %cst {dimension_numbers = #tpu.dot_dimension_numbers<[1], [0], [0], [1], [0, 0, 1, 1], [], []>} : vector<16x32xbf16>, vector<32x64xbf16>, vector<16x64xf32> -> vector<16x64xf32>
    %cst_7 = arith.constant 0.000000e+00 : f32
    %7 = vector.broadcast %cst_7 : f32 to vector<16x64xf32>
    %8 = arith.maximumf %6, %7 : vector<16x64xf32>
    %9 = arith.truncf %8 : vector<16x64xf32> to vector<16x64xbf16>
    %c0_8 = arith.constant 0 : index
    %c0_9 = arith.constant 0 : index
    %10 = vector.load %arg3[%c0_8, %c0_9] : memref<64x32xbf16, #tpu.memory_space<vmem>>, vector<64x32xbf16>
    %cst_10 = arith.constant dense<0.000000e+00> : vector<16x32xf32>
    %11 = tpu.matmul %9, %10, %cst_10 {dimension_numbers = #tpu.dot_dimension_numbers<[1], [0], [0], [1], [0, 0, 1, 1], [], []>} : vector<16x64xbf16>, vector<64x32xbf16>, vector<16x32xf32> -> vector<16x32xf32>
    %12 = arith.addf %3, %11 : vector<16x32xf32>
    %13 = vector.extract_strided_slice %12 {offsets = [0, 0], sizes = [1, 32], strides = [1, 1]} : vector<16x32xf32> to vector<1x32xf32>
    %14 = vector.extract_strided_slice %12 {offsets = [0, 0], sizes = [14, 32], strides = [1, 1]} : vector<16x32xf32> to vector<14x32xf32>
    %15 = tpu.concatenate %13, %13, %14 in 0 : vector<1x32xf32>, vector<1x32xf32>, vector<14x32xf32> -> vector<16x32xf32>
    %16 = vector.extract_strided_slice %12 {offsets = [0, 0], sizes = [1, 32], strides = [1, 1]} : vector<16x32xf32> to vector<1x32xf32>
    %17 = vector.extract_strided_slice %12 {offsets = [0, 0], sizes = [15, 32], strides = [1, 1]} : vector<16x32xf32> to vector<15x32xf32>
    %18 = tpu.concatenate %16, %17 in 0 : vector<1x32xf32>, vector<15x32xf32> -> vector<16x32xf32>
    %19 = arith.addf %15, %18 : vector<16x32xf32>
    %20 = arith.addf %19, %12 : vector<16x32xf32>
    %21 = vector.extract_strided_slice %12 {offsets = [1, 0], sizes = [15, 32], strides = [1, 1]} : vector<16x32xf32> to vector<15x32xf32>
    %22 = vector.extract_strided_slice %12 {offsets = [15, 0], sizes = [1, 32], strides = [1, 1]} : vector<16x32xf32> to vector<1x32xf32>
    %23 = tpu.concatenate %21, %22 in 0 : vector<15x32xf32>, vector<1x32xf32> -> vector<16x32xf32>
    %24 = arith.addf %20, %23 : vector<16x32xf32>
    %25 = vector.extract_strided_slice %12 {offsets = [2, 0], sizes = [14, 32], strides = [1, 1]} : vector<16x32xf32> to vector<14x32xf32>
    %26 = vector.extract_strided_slice %12 {offsets = [15, 0], sizes = [1, 32], strides = [1, 1]} : vector<16x32xf32> to vector<1x32xf32>
    %27 = tpu.concatenate %25, %26, %26 in 0 : vector<14x32xf32>, vector<1x32xf32>, vector<1x32xf32> -> vector<16x32xf32>
    %28 = arith.addf %24, %27 : vector<16x32xf32>
    %cst_11 = arith.constant 2.000000e-01 : f32
    %29 = vector.broadcast %cst_11 : f32 to vector<16x32xf32>
    %30 = arith.mulf %28, %29 : vector<16x32xf32>
    %31 = arith.subf %12, %30 : vector<16x32xf32>
    %c0_12 = arith.constant 0 : index
    %c0_13 = arith.constant 0 : index
    %c0_14 = arith.constant 0 : index
    %32 = vector.load %arg5[%c0_12, %c0_13, %c0_14] : memref<1x16x32xf32, #tpu.memory_space<vmem>>, vector<1x16x32xf32>
    %33 = vector.shape_cast %32 : vector<1x16x32xf32> to vector<16x32xf32>
    %34 = vector.shape_cast %31 : vector<16x32xf32> to vector<1x16x32xf32>
    tpu.vector_store %arg5[%c0_12, %c0_13, %c0_14], %34 {strides = array<i32>} : memref<1x16x32xf32, #tpu.memory_space<vmem>>, vector<1x16x32xf32>,
    %35 = arith.addf %30, %1 : vector<16x32xf32>
    %c0_15 = arith.constant 0 : index
    %c0_16 = arith.constant 0 : index
    %c0_17 = arith.constant 0 : index
    %36 = vector.load %arg6[%c0_15, %c0_16, %c0_17] : memref<1x16x32xf32, #tpu.memory_space<vmem>>, vector<1x16x32xf32>
    %37 = vector.shape_cast %36 : vector<1x16x32xf32> to vector<16x32xf32>
    %38 = vector.shape_cast %35 : vector<16x32xf32> to vector<1x16x32xf32>
    tpu.vector_store %arg6[%c0_15, %c0_16, %c0_17], %38 {strides = array<i32>} : memref<1x16x32xf32, #tpu.memory_space<vmem>>, vector<1x16x32xf32>,
    return
  }
  func.func @transform_0(%arg0: i32) -> (i32, i32, i32) {
    %c0_i32 = arith.constant 0 : i32
    %c0_i32_0 = arith.constant 0 : i32
    %c0_i32_1 = arith.constant 0 : i32
    return %arg0, %c0_i32, %c0_i32_0 : i32, i32, i32
  }
  func.func @transform_1(%arg0: i32) -> (i32, i32) {
    %c0_i32 = arith.constant 0 : i32
    %c0_i32_0 = arith.constant 0 : i32
    %c0_i32_1 = arith.constant 0 : i32
    return %c0_i32, %c0_i32_0 : i32, i32
  }
  func.func @transform_2(%arg0: i32) -> (i32, i32) {
    %c0_i32 = arith.constant 0 : i32
    %c0_i32_0 = arith.constant 0 : i32
    %c0_i32_1 = arith.constant 0 : i32
    return %c0_i32, %c0_i32_0 : i32, i32
  }
  func.func @transform_3(%arg0: i32) -> (i32, i32, i32) {
    %c0_i32 = arith.constant 0 : i32
    %c0_i32_0 = arith.constant 0 : i32
    %c0_i32_1 = arith.constant 0 : i32
    return %arg0, %c0_i32, %c0_i32_0 : i32, i32, i32
  }
  func.func @transform_4(%arg0: i32) -> (i32, i32, i32) {
    %c0_i32 = arith.constant 0 : i32
    %c0_i32_0 = arith.constant 0 : i32
    %c0_i32_1 = arith.constant 0 : i32
    return %arg0, %c0_i32, %c0_i32_0 : i32, i32, i32
  }
  func.func @transform_5(%arg0: i32) -> (i32, i32, i32) {
    %c0_i32 = arith.constant 0 : i32
    %c0_i32_0 = arith.constant 0 : i32
    %c0_i32_1 = arith.constant 0 : i32
    return %arg0, %c0_i32, %c0_i32_0 : i32, i32, i32
  }
}

</mosaic_0001>

<llo_original>
// kernel: _lambda_.13
$region0: #{_lambda_.13}
  #allocation0 [shape = 'u32[]', space=smem, size = 0x4, offset = 0x4, fixed_abs, tag = 'smem constant byte address 0x4 - core index']
  #allocation1 [shape = 'u32[144,128]{1,0:T(1,128)}', space=vmem, size = 0x12000, scoped, tag = 'internal scratch']
  %s0 = inlined_call_operand.vmem [shape: f32[2,16,4], index: 0, kind: input, shape index: {}]
  %s1 = inlined_call_operand.vmem [shape: f32[2,16,4], index: 1, kind: output, shape index: {0}]
  %s2 = inlined_call_operand.vmem [shape: f32[2,16,4], index: 2, kind: output, shape index: {1}]
  %3 = xla_tuple %s1, %s2
  %s4 = sld [smem:[#allocation0]]
  $region45: #{_lambda_.13} parent=0
    _
  %s6 = ssub.s32 1, %s4
  %s7 = scalar_select 0, %s6, %s4
  loop: start=0, step=1, limit=4
  $region2: #{_lambda_.13} parent=0 // loop_pre_header
    _
  $region3: #{_lambda_.13} parent=0 // loop_header
    %s9 = sphi 0, %s13
    %p10 = scmp.ge.s32.totalorder %s9, 4
    %s19 = sphi 0, %s21
    %s22 = sphi 0, %s19
    %s23 = sphi 0, %s22
    %s39 = sphi 0, %s23
    %s45 = sphi 0, %s47
    %s48 = sphi 0, %s45
    %s49 = sphi 0, %s48
    %s65 = sphi 0, %s49
    %s71 = sphi 0, %s73
    %s74 = sphi 0, %s71
    %s75 = sphi 0, %s74
    %s91 = sphi 0, %s75
  $region4: #{_lambda_.13} parent=0 // loop_header_branch
    %12 = sbr.rel (%p10) target = $region8
  $region5: #{_lambda_.13} parent=0 // loop_body
    %s14 = ssub.s32 %s9, 1
    %s15 = ssub.s32 %s9, 2
    %s16 = sadd.s32 %s9, 1
    %s17 = ssub.s32 %s9, %s16
    %p18 = scmp.eq.s32.totalorder %s17, 0
    %s20 = sadd.s32 %s19, 1
    %s21 = scalar_select %p18, %s19, %s20
    %p24 = pneg %p18
    %p25 = scmp.eq.s32.totalorder %s9, 1
    %p26 = por %p24, %p25
    %p27 = scmp.ne.s32.totalorder %s19, %s22
    %p28 = scmp.eq.s32.totalorder %s9, 0
    %p29 = por %p27, %p28
    %p30 = scmp.ne.s32.totalorder %s19, %s22
    %p31 = scmp.eq.s32.totalorder %s14, 1
    %p32 = por %p30, %p31
    %p33 = scmp.ne.s32.totalorder %s22, %s23
    %p34 = scmp.eq.s32.totalorder %s14, 0
    %p35 = por %p33, %p34
    %p36 = scmp.ne.s32.totalorder %s22, %s23
    %p37 = scmp.eq.s32.totalorder %s15, 1
    %p38 = por %p36, %p37
    %p40 = scmp.ne.s32.totalorder %s23, %s39
    %p41 = scmp.eq.s32.totalorder %s15, 0
    %p42 = por %p40, %p41
    %s43 = ssub.s32 %s9, %s16
    %p44 = scmp.eq.s32.totalorder %s43, 0
    %s46 = sadd.s32 %s45, 1
    %s47 = scalar_select %p44, %s45, %s46
    %p50 = pneg %p44
    %p51 = scmp.eq.s32.totalorder %s9, 1
    %p52 = por %p50, %p51
    %p53 = scmp.ne.s32.totalorder %s45, %s48
    %p54 = scmp.eq.s32.totalorder %s9, 0
    %p55 = por %p53, %p54
    %p56 = scmp.ne.s32.totalorder %s45, %s48
    %p57 = scmp.eq.s32.totalorder %s14, 1
    %p58 = por %p56, %p57
    %p59 = scmp.ne.s32.totalorder %s48, %s49
    %p60 = scmp.eq.s32.totalorder %s14, 0
    %p61 = por %p59, %p60
    %p62 = scmp.ne.s32.totalorder %s48, %s49
    %p63 = scmp.eq.s32.totalorder %s15, 1
    %p64 = por %p62, %p63
    %p66 = scmp.ne.s32.totalorder %s49, %s65
    %p67 = scmp.eq.s32.totalorder %s15, 0
    %p68 = por %p66, %p67
    %s69 = ssub.s32 %s9, %s16
    %p70 = scmp.eq.s32.totalorder %s69, 0
    %s72 = sadd.s32 %s71, 1
    %s73 = scalar_select %p70, %s71, %s72
    %p76 = pneg %p70
    %p77 = scmp.eq.s32.totalorder %s9, 1
    %p78 = por %p76, %p77
    %p79 = scmp.ne.s32.totalorder %s71, %s74
    %p80 = scmp.eq.s32.totalorder %s9, 0
    %p81 = por %p79, %p80
    %p82 = scmp.ne.s32.totalorder %s71, %s74
    %p83 = scmp.eq.s32.totalorder %s14, 1
    %p84 = por %p82, %p83
    %p85 = scmp.ne.s32.totalorder %s74, %s75
    %p86 = scmp.eq.s32.totalorder %s14, 0
    %p87 = por %p85, %p86
    %p88 = scmp.ne.s32.totalorder %s74, %s75
    %p89 = scmp.eq.s32.totalorder %s15, 1
    %p90 = por %p88, %p89
    %p92 = scmp.ne.s32.totalorder %s75, %s91
    %p93 = scmp.eq.s32.totalorder %s15, 0
    %p94 = por %p92, %p93
    %p95 = scmp.le.s32.totalorder 1, %s9
    %p96 = scmp.lt.s32.totalorder %s9, 3
    %p97 = pnand %p95, %p96
    %p98 = pneg %p97
    // Predicated region
    $region9: #{_lambda_.13} parent=5 // pred_check
      _
    $region10: #{_lambda_.13} parent=5 // pred_check_branch
      %100 = sbr.rel (%p97) target = $region12
    $region11: #{_lambda_.13} parent=5 // pred_region
      %s101 = ssub.s32 %s9, 1
    $region12: #{_lambda_.13} parent=5 // pred_fallthru
      _
    %p102 = scmp.lt.s32.totalorder %s9, 2
    // Predicated region
    $region13: #{_lambda_.13} parent=5 // pred_check
      %p103 = pneg %p102
    $region14: #{_lambda_.13} parent=5 // pred_check_branch
      %105 = sbr.rel (%p103) target = $region16
    $region15: #{_lambda_.13} parent=5 // pred_region
      // Predicated region
      $region17: #{_lambda_.13} parent=15 // pred_check
        %p106 = pneg %p29
      $region18: #{_lambda_.13} parent=15 // pred_check_branch
        %108 = sbr.rel (%p106) target = $region20
      $region19: #{_lambda_.13} parent=15 // pred_region
        %p109 = scmp.lt.s32.totalorder %s9, 1
        %s110 = scalar_select %p109, %s9, 1
        %s111 = smul.addr %s110, 2
        %s112 = smul.addr %s111, 8
        %s113 = scalar_lea.vmem %s0, %s112
      $region20: #{_lambda_.13} parent=15 // pred_fallthru
        _
    $region16: #{_lambda_.13} parent=5 // pred_fallthru
      _
    %p114 = scmp.le.s32.totalorder 1, %s9
    %p115 = scmp.lt.s32.totalorder %s9, 3
    %p116 = pnand %p114, %p115
    %p117 = pneg %p116
    // Predicated region
    $region21: #{_lambda_.13} parent=5 // pred_check
      _
    $region22: #{_lambda_.13} parent=5 // pred_check_branch
      %119 = sbr.rel (%p116) target = $region24
    $region23: #{_lambda_.13} parent=5 // pred_region
      %s120 = ssub.s32 %s9, 1
      %p121 = scmp.lt.s32.totalorder %s14, 1
      %s122 = scalar_select %p121, %s14, 1
      %s123 = smul.addr %s122, 2
      %s124 = smul.addr %s123, 8
      %s125 = scalar_lea.vmem %s0, %s124
      %p126 = pneg %p35
      %p127 = pneg %p32
      %p128 = pneg %p61
      %p129 = pneg %p58
      %p130 = scmp.lt.s32.totalorder %s14, 1
      %s131 = scalar_select %p130, %s14, 1
      %s132 = smul.addr %s131, 2
      %s133 = smul.addr %s132, 8
      %s134 = scalar_lea.vmem %s1, %s133
      %p135 = pneg %p87
      %p136 = pneg %p84
      %p137 = scmp.lt.s32.totalorder %s14, 1
      %s138 = scalar_select %p137, %s14, 1
      %s139 = smul.addr %s138, 2
      %s140 = smul.addr %s139, 8
      %s141 = scalar_lea.vmem %s2, %s140
      %p142 = scmp.lt.s32.totalorder %s14, 1
      %s143 = scalar_select %p142, %s14, 1
      %s144 = smul.addr %s143, 2
      %s145 = smul.addr %s144, 8
      %s146 = scalar_lea.vmem %s0, %s145
      %p147 = scmp.lt.s32.totalorder %s14, 1
      %s148 = scalar_select %p147, %s14, 1
      %s149 = smul.addr %s148, 2
      %s150 = smul.addr %s149, 8
      %s151 = scalar_lea.vmem %s1, %s150
      %p152 = scmp.lt.s32.totalorder %s14, 1
      %s153 = scalar_select %p152, %s14, 1
      %s154 = smul.addr %s153, 2
      %s155 = smul.addr %s154, 8
      %s156 = scalar_lea.vmem %s2, %s155
      %v157 = vld [vmem:[%s146] sm:$0xff]
      %v158 = vld [vmem:[%s146 + $0x8] sm:$0xff]
      %v160 = vrot.slane %v157, 7
      %vm163 = vcmask 1041408
      %v164 = vrot.slane %v157, 6
      %v165 = vrot.slane %v158, 6
      %v166 = vsel %vm163, %v164, %v165
      %vm169 = vcmask 1040384
      %v170 = vsel %vm169, %v157, %v160
      %v171 = vsel %vm163, %v170, %v164
      %v172 = vrot.slane %v158, 7
      %v173 = vsel %vm169, %v160, %v172
      %v175 = vadd.f32 %v171, %v170
      %v176 = vadd.f32 %v166, %v173
      %v177 = vadd.f32 %v175, %v157
      %v178 = vadd.f32 %v176, %v158
      %vm179 = vcmask 1046528
      %v180 = vrot.slane %v157, 1
      %v181 = vrot.slane %v158, 1
      %v182 = vsel %vm179, %v180, %v181
      %v185 = vsel %vm179, %v181, %v158
      %v186 = vadd.f32 %v177, %v182
      %v187 = vadd.f32 %v178, %v185
      %vm188 = vcmask 1045504
      %v189 = vrot.slane %v157, 2
      %v190 = vrot.slane %v158, 2
      %v191 = vsel %vm188, %v189, %v190
      %v194 = vsel %vm188, %v190, %v181
      %v195 = vsel %vm179, %v194, %v158
      %v196 = vadd.f32 %v186, %v191
      %v197 = vadd.f32 %v187, %v195
      %v198 = vmul.f32 %v196, 0.2
      %v199 = vmul.f32 %v197, 0.2
      %v200 = vsub.f32 %v157, %v198
      %v201 = vsub.f32 %v158, %v199
      %vm202 = vcmask 31744
      %203 = vst.msk [vmem:[%s151] sm:$0xff] %vm202, %v200
      %204 = vst.msk [vmem:[%s151 + $0x8] sm:$0xff] %vm202, %v201
      %205 = vst.msk [vmem:[%s156] sm:$0xff] %vm202, %v198
      %206 = vst.msk [vmem:[%s156 + $0x8] sm:$0xff] %vm202, %v199
      %p207 = scmp.lt.s32.totalorder %s14, 1
      %s208 = scalar_select %p207, %s14, 1
      %s209 = smul.addr %s208, 2
      %s210 = smul.addr %s209, 8
      %s211 = scalar_lea.vmem %s1, %s210
      %p212 = scmp.lt.s32.totalorder %s14, 1
      %s213 = scalar_select %p212, %s14, 1
      %s214 = smul.addr %s213, 2
      %s215 = smul.addr %s214, 8
      %s216 = scalar_lea.vmem %s2, %s215
      // Predicated region
      $region25: #{_lambda_.13} parent=23 // pred_check
        %p217 = pneg %p58
      $region26: #{_lambda_.13} parent=23 // pred_check_branch
        %219 = sbr.rel (%p217) target = $region28
      $region27: #{_lambda_.13} parent=23 // pred_region
        _
      $region28: #{_lambda_.13} parent=23 // pred_fallthru
        _
      // Predicated region
      $region29: #{_lambda_.13} parent=23 // pred_check
        %p220 = pneg %p84
      $region30: #{_lambda_.13} parent=23 // pred_check_branch
        %222 = sbr.rel (%p220) target = $region32
      $region31: #{_lambda_.13} parent=23 // pred_region
        _
      $region32: #{_lambda_.13} parent=23 // pred_fallthru
        _
    $region24: #{_lambda_.13} parent=5 // pred_fallthru
      _
    %p223 = scmp.le.s32.totalorder 2, %s9
    // Predicated region
    $region33: #{_lambda_.13} parent=5 // pred_check
      %p224 = pneg %p223
    $region34: #{_lambda_.13} parent=5 // pred_check_branch
      %226 = sbr.rel (%p224) target = $region36
    $region35: #{_lambda_.13} parent=5 // pred_region
      %s227 = ssub.s32 %s9, 2
      // Predicated region
      $region37: #{_lambda_.13} parent=35 // pred_check
        %p228 = pneg %p64
      $region38: #{_lambda_.13} parent=35 // pred_check_branch
        %230 = sbr.rel (%p228) target = $region40
      $region39: #{_lambda_.13} parent=35 // pred_region
        %p231 = scmp.lt.s32.totalorder %s15, 1
        %s232 = scalar_select %p231, %s15, 1
        %s233 = smul.addr %s232, 2
        %s234 = smul.addr %s233, 8
        %s235 = scalar_lea.vmem %s1, %s234
      $region40: #{_lambda_.13} parent=35 // pred_fallthru
        _
      // Predicated region
      $region41: #{_lambda_.13} parent=35 // pred_check
        %p236 = pneg %p90
      $region42: #{_lambda_.13} parent=35 // pred_check_branch
        %238 = sbr.rel (%p236) target = $region44
      $region43: #{_lambda_.13} parent=35 // pred_region
        %p239 = scmp.lt.s32.totalorder %s15, 1
        %s240 = scalar_select %p239, %s15, 1
        %s241 = smul.addr %s240, 2
        %s242 = smul.addr %s241, 8
        %s243 = scalar_lea.vmem %s2, %s242
      $region44: #{_lambda_.13} parent=35 // pred_fallthru
        _
    $region36: #{_lambda_.13} parent=5 // pred_fallthru
      _
  $region6: #{_lambda_.13} parent=0 // loop_footer
    %s13 = sadd.s32 1, %s9
  $region7: #{_lambda_.13} parent=0 // loop_footer_branch
    %8 = sbr.rel target = $region3
  $region8: #{_lambda_.13} parent=0 // loop_exit
    _

// kernel: _lambda_.19
$region0: #{_lambda_.19}
  #allocation0 [shape = 'u32[]', space=smem, size = 0x4, offset = 0x4, fixed_abs, tag = 'smem constant byte address 0x4 - core index']
  #allocation1 [shape = 'u32[144,128]{1,0:T(1,128)}', space=vmem, size = 0x12000, scoped, tag = 'internal scratch']
  %s0 = inlined_call_operand.vmem [shape: f32[2,16,4], index: 0, kind: input, shape index: {}]
  %s1 = inlined_call_operand.vmem [shape: f32[2,16,4], index: 1, kind: input, shape index: {}]
  %s2 = inlined_call_operand.vmem [shape: bf16[16,32], index: 2, kind: input, shape index: {}]
  %s3 = inlined_call_operand.vmem [shape: f32[2,16,32], index: 3, kind: output, shape index: {}]
  %s4 = sld [smem:[#allocation0]]
  $region45: #{_lambda_.19} parent=0
    _
  %s6 = ssub.s32 1, %s4
  %s7 = scalar_select 0, %s6, %s4
  loop: start=0, step=1, limit=4
  $region2: #{_lambda_.19} parent=0 // loop_pre_header
    _
  $region3: #{_lambda_.19} parent=0 // loop_header
    %s9 = sphi 0, %s13
    %p10 = scmp.ge.s32.totalorder %s9, 4
    %s19 = sphi 0, %s21
    %s22 = sphi 0, %s19
    %s23 = sphi 0, %s22
    %s39 = sphi 0, %s23
    %s45 = sphi 0, %s47
    %s48 = sphi 0, %s45
    %s49 = sphi 0, %s48
    %s65 = sphi 0, %s49
    %s69 = sphi 0, %s69
    %s71 = sphi 0, %s69
    %s72 = sphi 0, %s71
    %s86 = sphi 0, %s72
    %s92 = sphi 0, %s94
    %s95 = sphi 0, %s92
    %s96 = sphi 0, %s95
    %s112 = sphi 0, %s96
  $region4: #{_lambda_.19} parent=0 // loop_header_branch
    %12 = sbr.rel (%p10) target = $region8
  $region5: #{_lambda_.19} parent=0 // loop_body
    %s14 = ssub.s32 %s9, 1
    %s15 = ssub.s32 %s9, 2
    %s16 = sadd.s32 %s9, 1
    %s17 = ssub.s32 %s9, %s16
    %p18 = scmp.eq.s32.totalorder %s17, 0
    %s20 = sadd.s32 %s19, 1
    %s21 = scalar_select %p18, %s19, %s20
    %p24 = pneg %p18
    %p25 = scmp.eq.s32.totalorder %s9, 1
    %p26 = por %p24, %p25
    %p27 = scmp.ne.s32.totalorder %s19, %s22
    %p28 = scmp.eq.s32.totalorder %s9, 0
    %p29 = por %p27, %p28
    %p30 = scmp.ne.s32.totalorder %s19, %s22
    %p31 = scmp.eq.s32.totalorder %s14, 1
    %p32 = por %p30, %p31
    %p33 = scmp.ne.s32.totalorder %s22, %s23
    %p34 = scmp.eq.s32.totalorder %s14, 0
    %p35 = por %p33, %p34
    %p36 = scmp.ne.s32.totalorder %s22, %s23
    %p37 = scmp.eq.s32.totalorder %s15, 1
    %p38 = por %p36, %p37
    %p40 = scmp.ne.s32.totalorder %s23, %s39
    %p41 = scmp.eq.s32.totalorder %s15, 0
    %p42 = por %p40, %p41
    %s43 = ssub.s32 %s9, %s16
    %p44 = scmp.eq.s32.totalorder %s43, 0
    %s46 = sadd.s32 %s45, 1
    %s47 = scalar_select %p44, %s45, %s46
    %p50 = pneg %p44
    %p51 = scmp.eq.s32.totalorder %s9, 1
    %p52 = por %p50, %p51
    %p53 = scmp.ne.s32.totalorder %s45, %s48
    %p54 = scmp.eq.s32.totalorder %s9, 0
    %p55 = por %p53, %p54
    %p56 = scmp.ne.s32.totalorder %s45, %s48
    %p57 = scmp.eq.s32.totalorder %s14, 1
    %p58 = por %p56, %p57
    %p59 = scmp.ne.s32.totalorder %s48, %s49
    %p60 = scmp.eq.s32.totalorder %s14, 0
    %p61 = por %p59, %p60
    %p62 = scmp.ne.s32.totalorder %s48, %s49
    %p63 = scmp.eq.s32.totalorder %s15, 1
    %p64 = por %p62, %p63
    %p66 = scmp.ne.s32.totalorder %s49, %s65
    %p67 = scmp.eq.s32.totalorder %s15, 0
    %p68 = por %p66, %p67
    %s70 = sadd.s32 %s69, 1
    %p73 = scmp.eq.s32.totalorder %s9, 1
    %p74 = scmp.ne.s32.totalorder %s69, %s71
    %p75 = scmp.eq.s32.totalorder %s9, 0
    %p76 = por %p74, %p75
    %p77 = scmp.ne.s32.totalorder %s69, %s71
    %p78 = scmp.eq.s32.totalorder %s14, 1
    %p79 = por %p77, %p78
    %p80 = scmp.ne.s32.totalorder %s71, %s72
    %p81 = scmp.eq.s32.totalorder %s14, 0
    %p82 = por %p80, %p81
    %p83 = scmp.ne.s32.totalorder %s71, %s72
    %p84 = scmp.eq.s32.totalorder %s15, 1
    %p85 = por %p83, %p84
    %p87 = scmp.ne.s32.totalorder %s72, %s86
    %p88 = scmp.eq.s32.totalorder %s15, 0
    %p89 = por %p87, %p88
    %s90 = ssub.s32 %s9, %s16
    %p91 = scmp.eq.s32.totalorder %s90, 0
    %s93 = sadd.s32 %s92, 1
    %s94 = scalar_select %p91, %s92, %s93
    %p97 = pneg %p91
    %p98 = scmp.eq.s32.totalorder %s9, 1
    %p99 = por %p97, %p98
    %p100 = scmp.ne.s32.totalorder %s92, %s95
    %p101 = scmp.eq.s32.totalorder %s9, 0
    %p102 = por %p100, %p101
    %p103 = scmp.ne.s32.totalorder %s92, %s95
    %p104 = scmp.eq.s32.totalorder %s14, 1
    %p105 = por %p103, %p104
    %p106 = scmp.ne.s32.totalorder %s95, %s96
    %p107 = scmp.eq.s32.totalorder %s14, 0
    %p108 = por %p106, %p107
    %p109 = scmp.ne.s32.totalorder %s95, %s96
    %p110 = scmp.eq.s32.totalorder %s15, 1
    %p111 = por %p109, %p110
    %p113 = scmp.ne.s32.totalorder %s96, %s112
    %p114 = scmp.eq.s32.totalorder %s15, 0
    %p115 = por %p113, %p114
    %p116 = scmp.le.s32.totalorder 1, %s9
    %p117 = scmp.lt.s32.totalorder %s9, 3
    %p118 = pnand %p116, %p117
    %p119 = pneg %p118
    // Predicated region
    $region9: #{_lambda_.19} parent=5 // pred_check
      _
    $region10: #{_lambda_.19} parent=5 // pred_check_branch
      %121 = sbr.rel (%p118) target = $region12
    $region11: #{_lambda_.19} parent=5 // pred_region
      %s122 = ssub.s32 %s9, 1
      // Predicated region
      $region13: #{_lambda_.19} parent=11 // pred_check
        %p123 = pneg %p82
      $region14: #{_lambda_.19} parent=11 // pred_check_branch
        %125 = sbr.rel (%p123) target = $region16
      $region15: #{_lambda_.19} parent=11 // pred_region
        _
      $region16: #{_lambda_.19} parent=11 // pred_fallthru
        _
    $region12: #{_lambda_.19} parent=5 // pred_fallthru
      _
    %p126 = scmp.lt.s32.totalorder %s9, 2
    // Predicated region
    $region17: #{_lambda_.19} parent=5 // pred_check
      %p127 = pneg %p126
    $region18: #{_lambda_.19} parent=5 // pred_check_branch
      %129 = sbr.rel (%p127) target = $region20
    $region19: #{_lambda_.19} parent=5 // pred_region
      // Predicated region
      $region21: #{_lambda_.19} parent=19 // pred_check
        %p130 = pneg %p29
      $region22: #{_lambda_.19} parent=19 // pred_check_branch
        %132 = sbr.rel (%p130) target = $region24
      $region23: #{_lambda_.19} parent=19 // pred_region
        %p133 = scmp.lt.s32.totalorder %s9, 1
        %s134 = scalar_select %p133, %s9, 1
        %s135 = smul.addr %s134, 2
        %s136 = smul.addr %s135, 8
        %s137 = scalar_lea.vmem %s0, %s136
      $region24: #{_lambda_.19} parent=19 // pred_fallthru
        _
      // Predicated region
      $region25: #{_lambda_.19} parent=19 // pred_check
        %p138 = pneg %p55
      $region26: #{_lambda_.19} parent=19 // pred_check_branch
        %140 = sbr.rel (%p138) target = $region28
      $region27: #{_lambda_.19} parent=19 // pred_region
        %p141 = scmp.lt.s32.totalorder %s9, 1
        %s142 = scalar_select %p141, %s9, 1
        %s143 = smul.addr %s142, 2
        %s144 = smul.addr %s143, 8
        %s145 = scalar_lea.vmem %s1, %s144
      $region28: #{_lambda_.19} parent=19 // pred_fallthru
        _
    $region20: #{_lambda_.19} parent=5 // pred_fallthru
      _
    %p146 = scmp.le.s32.totalorder 1, %s9
    %p147 = scmp.lt.s32.totalorder %s9, 3
    %p148 = pnand %p146, %p147
    %p149 = pneg %p148
    // Predicated region
    $region29: #{_lambda_.19} parent=5 // pred_check
      _
    $region30: #{_lambda_.19} parent=5 // pred_check_branch
      %151 = sbr.rel (%p148) target = $region32
    $region31: #{_lambda_.19} parent=5 // pred_region
      %s152 = ssub.s32 %s9, 1
      %p153 = scmp.lt.s32.totalorder %s14, 1
      %s154 = scalar_select %p153, %s14, 1
      %s155 = smul.addr %s154, 2
      %s156 = smul.addr %s155, 8
      %s157 = scalar_lea.vmem %s0, %s156
      %p158 = pneg %p35
      %p159 = pneg %p32
      %p160 = scmp.lt.s32.totalorder %s14, 1
      %s161 = scalar_select %p160, %s14, 1
      %s162 = smul.addr %s161, 2
      %s163 = smul.addr %s162, 8
      %s164 = scalar_lea.vmem %s1, %s163
      %p165 = pneg %p61
      %p166 = pneg %p58
      %p167 = pneg %p82
      %p168 = pneg %p79
      %p169 = pneg %p108
      %p170 = pneg %p105
      %p171 = scmp.lt.s32.totalorder %s14, 1
      %s172 = scalar_select %p171, %s14, 1
      %s173 = smul.addr %s172, 2
      %s174 = smul.addr %s173, 8
      %s175 = scalar_lea.vmem %s3, %s174
      %p176 = scmp.lt.s32.totalorder %s14, 1
      %s177 = scalar_select %p176, %s14, 1
      %s178 = smul.addr %s177, 2
      %s179 = smul.addr %s178, 8
      %s180 = scalar_lea.vmem %s0, %s179
      %p181 = scmp.lt.s32.totalorder %s14, 1
      %s182 = scalar_select %p181, %s14, 1
      %s183 = smul.addr %s182, 2
      %s184 = smul.addr %s183, 8
      %s185 = scalar_lea.vmem %s1, %s184
      %p186 = scmp.lt.s32.totalorder %s14, 1
      %s187 = scalar_select %p186, %s14, 1
      %s188 = smul.addr %s187, 2
      %s189 = smul.addr %s188, 8
      %s190 = scalar_lea.vmem %s3, %s189
      %v192 = vld [vmem:[%s180] sm:$0xff]
      %v193 = vld [vmem:[%s180 + $0x8] sm:$0xff]
      %v195 = vrot.slane %v193, 7
      %vm198 = vcmask 1040384
      %v199 = vrot.slane %v192, 7
      %v200 = vsel %vm198, %v199, %v195
      %v203 = vsel %vm198, %v195, %v199
      %vm204 = vcmask 1046528
      %v205 = vrot.slane %v192, 1
      %v206 = vrot.slane %v193, 1
      %v207 = vsel %vm204, %v205, %v206
      %v210 = vsel %vm204, %v206, %v205
      %v211 = vld [vmem:[%s185] sm:$0xff]
      %v212 = vld [vmem:[%s185 + $0x8] sm:$0xff]
      %213 = vrot.lane.b32.xlu0 %v192, 4
      %v214 = vpop.permute.xlu0 %213
      %215 = vrot.lane.b32.xlu0 %v193, 4
      %v216 = vpop.permute.xlu0 %215
      %220 = vrot.lane.b32.xlu0 %v207, 8
      %v221 = vpop.permute.xlu0 %220
      %222 = vrot.lane.b32.xlu0 %v210, 8
      %v223 = vpop.permute.xlu0 %222
      %228 = vrot.lane.b32.xlu0 %v211, 12
      %v229 = vpop.permute.xlu0 %228
      %230 = vrot.lane.b32.xlu0 %v212, 12
      %v231 = vpop.permute.xlu0 %230
      %vm234 = vcmask 31744
      %v235 = vsel %vm234, %v203, %v214
      %v236 = vsel %vm234, %v200, %v216
      %vm237 = vcmask 64512
      %v238 = vsel %vm237, %v235, %v221
      %v239 = vsel %vm237, %v236, %v223
      %vm240 = vcmask 97280
      %v241 = vsel %vm240, %v238, %v229
      %v242 = vsel %vm240, %v239, %v231
      %v243 = vpack.c.bf16 %v242, %v241
      %v244 = vld [vmem:[%s2] sm:$0xf]
      %v245 = vld [vmem:[%s2 + $0x4] sm:$0xf]
      %v248 = vunpack.c.l.b16 %v244
      %v249 = vunpack.c.l.b16 %v245
      %v250 = vpack.c.b16 %v249, %v248
      %vm252 = vcmask 130048
      %v254 = vsel %vm252, %v243, 0
      %256 = vmatprep.subr.bf16.mxu0 0
      %257 = vmatpush1.bf16.msra.mxu0 %v250
      %258 = vmatprep.subr.bf16.mxu0 0
      %259 = vmatpush1.bf16.msra.mxu0 0
      %260 = vmatprep.subr.bf16.mxu0 0
      %261 = vmatpush1.bf16.msra.mxu0 0
      %262 = vmatprep.subr.bf16.mxu0 0
      %263 = vmatpush1.bf16.msra.mxu0 0
      %264 = vmatprep.subr.bf16.mxu0 0
      %265 = vmatpush1.bf16.msra.mxu0 0
      %266 = vmatprep.subr.bf16.mxu0 0
      %267 = vmatpush1.bf16.msra.mxu0 0
      %268 = vmatprep.subr.bf16.mxu0 0
      %269 = vmatpush1.bf16.msra.mxu0 0
      %270 = vmatprep.subr.bf16.mxu0 0
      %271 = vmatpush1.bf16.msra.mxu0 0
      %272 = vmatprep.subr.bf16.mxu0 0
      %273 = vmatpush1.bf16.msra.mxu0 0
      %274 = vmatprep.subr.bf16.mxu0 0
      %275 = vmatpush1.bf16.msra.mxu0 0
      %276 = vmatprep.subr.bf16.mxu0 0
      %277 = vmatpush1.bf16.msra.mxu0 0
      %278 = vmatprep.subr.bf16.mxu0 0
      %279 = vmatpush1.bf16.msra.mxu0 0
      %280 = vmatprep.subr.bf16.mxu0 0
      %281 = vmatpush1.bf16.msra.mxu0 0
      %282 = vmatprep.subr.bf16.mxu0 0
      %283 = vmatpush1.bf16.msra.mxu0 0
      %284 = vmatprep.subr.bf16.mxu0 0
      %285 = vmatpush1.bf16.msra.mxu0 0
      %286 = vmatprep.subr.bf16.mxu0 0
      %287 = vmatpush1.bf16.msra.mxu0 0
      %288 = vmatprep.mubr.bf16.mxu0 0
      %289 = vmatmul.mubr.bf16.gmra.mrb[0].mxu0 %v254
      %v290 = vpop.f32.mrb[0].mxu0
      %v291 = vadd.f32 0.0, %v290
      %v292 = vpop.f32.mrb[0].mxu0
      %v293 = vpop.f32.mrb[0].mxu0
      %v294 = vadd.f32 0.0, %v293
      %v295 = vpop.f32.mrb[0].mxu0
      %296 = vdwg.mxu0
      %vm297 = vcmask 261120
      %298 = vst.msk [vmem:[%s190] sm:$0xff] %vm297, %v291
      %299 = vst.msk [vmem:[%s190 + $0x8] sm:$0xff] %vm297, %v294
      %p300 = scmp.lt.s32.totalorder %s14, 1
      %s301 = scalar_select %p300, %s14, 1
      %s302 = smul.addr %s301, 2
      %s303 = smul.addr %s302, 8
      %s304 = scalar_lea.vmem %s3, %s303
      // Predicated region
      $region33: #{_lambda_.19} parent=31 // pred_check
        %p305 = pneg %p105
      $region34: #{_lambda_.19} parent=31 // pred_check_branch
        %307 = sbr.rel (%p305) target = $region36
      $region35: #{_lambda_.19} parent=31 // pred_region
        _
      $region36: #{_lambda_.19} parent=31 // pred_fallthru
        _
    $region32: #{_lambda_.19} parent=5 // pred_fallthru
      _
    %p308 = scmp.le.s32.totalorder 2, %s9
    // Predicated region
    $region37: #{_lambda_.19} parent=5 // pred_check
      %p309 = pneg %p308
    $region38: #{_lambda_.19} parent=5 // pred_check_branch
      %311 = sbr.rel (%p309) target = $region40
    $region39: #{_lambda_.19} parent=5 // pred_region
      %s312 = ssub.s32 %s9, 2
      // Predicated region
      $region41: #{_lambda_.19} parent=39 // pred_check
        %p313 = pneg %p111
      $region42: #{_lambda_.19} parent=39 // pred_check_branch
        %315 = sbr.rel (%p313) target = $region44
      $region43: #{_lambda_.19} parent=39 // pred_region
        %p316 = scmp.lt.s32.totalorder %s15, 1
        %s317 = scalar_select %p316, %s15, 1
        %s318 = smul.addr %s317, 2
        %s319 = smul.addr %s318, 8
        %s320 = scalar_lea.vmem %s3, %s319
      $region44: #{_lambda_.19} parent=39 // pred_fallthru
        _
    $region40: #{_lambda_.19} parent=5 // pred_fallthru
      _
  $region6: #{_lambda_.19} parent=0 // loop_footer
    %s13 = sadd.s32 1, %s9
  $region7: #{_lambda_.19} parent=0 // loop_footer_branch
    %8 = sbr.rel target = $region3
  $region8: #{_lambda_.19} parent=0 // loop_exit
    _

// kernel: _lambda_.20
$region0: #{_lambda_.20}
  #allocation0 [shape = 'u32[]', space=smem, size = 0x4, offset = 0x4, fixed_abs, tag = 'smem constant byte address 0x4 - core index']
  #allocation1 [shape = 'u32[144,128]{1,0:T(1,128)}', space=vmem, size = 0x12000, scoped, tag = 'internal scratch']
  %s0 = inlined_call_operand.vmem [shape: f32[2,16,32], index: 0, kind: input, shape index: {}]
  %s1 = inlined_call_operand.vmem [shape: bf16[32,96], index: 1, kind: input, shape index: {}]
  %s2 = inlined_call_operand.vmem [shape: f32[1,96], index: 2, kind: input, shape index: {}]
  %s3 = inlined_call_operand.vmem [shape: f32[2,1,16], index: 3, kind: output, shape index: {0}]
  %s4 = inlined_call_operand.vmem [shape: f32[2,16,32], index: 4, kind: output, shape index: {1}]
  %5 = xla_tuple %s3, %s4
  %s6 = sld [smem:[#allocation0]]
  $region53: #{_lambda_.20} parent=0
    _
  %s8 = ssub.s32 1, %s6
  %s9 = scalar_select 0, %s8, %s6
  loop: start=0, step=1, limit=4
  $region2: #{_lambda_.20} parent=0 // loop_pre_header
    _
  $region3: #{_lambda_.20} parent=0 // loop_header
    %s11 = sphi 0, %s15
    %p12 = scmp.ge.s32.totalorder %s11, 4
    %s21 = sphi 0, %s23
    %s24 = sphi 0, %s21
    %s25 = sphi 0, %s24
    %s41 = sphi 0, %s25
    %s45 = sphi 0, %s45
    %s47 = sphi 0, %s45
    %s48 = sphi 0, %s47
    %s62 = sphi 0, %s48
    %s66 = sphi 0, %s66
    %s68 = sphi 0, %s66
    %s69 = sphi 0, %s68
    %s83 = sphi 0, %s69
    %s89 = sphi 0, %s91
    %s92 = sphi 0, %s89
    %s93 = sphi 0, %s92
    %s109 = sphi 0, %s93
    %s115 = sphi 0, %s117
    %s118 = sphi 0, %s115
    %s119 = sphi 0, %s118
    %s135 = sphi 0, %s119
  $region4: #{_lambda_.20} parent=0 // loop_header_branch
    %14 = sbr.rel (%p12) target = $region8
  $region5: #{_lambda_.20} parent=0 // loop_body
    %s16 = ssub.s32 %s11, 1
    %s17 = ssub.s32 %s11, 2
    %s18 = sadd.s32 %s11, 1
    %s19 = ssub.s32 %s11, %s18
    %p20 = scmp.eq.s32.totalorder %s19, 0
    %s22 = sadd.s32 %s21, 1
    %s23 = scalar_select %p20, %s21, %s22
    %p26 = pneg %p20
    %p27 = scmp.eq.s32.totalorder %s11, 1
    %p28 = por %p26, %p27
    %p29 = scmp.ne.s32.totalorder %s21, %s24
    %p30 = scmp.eq.s32.totalorder %s11, 0
    %p31 = por %p29, %p30
    %p32 = scmp.ne.s32.totalorder %s21, %s24
    %p33 = scmp.eq.s32.totalorder %s16, 1
    %p34 = por %p32, %p33
    %p35 = scmp.ne.s32.totalorder %s24, %s25
    %p36 = scmp.eq.s32.totalorder %s16, 0
    %p37 = por %p35, %p36
    %p38 = scmp.ne.s32.totalorder %s24, %s25
    %p39 = scmp.eq.s32.totalorder %s17, 1
    %p40 = por %p38, %p39
    %p42 = scmp.ne.s32.totalorder %s25, %s41
    %p43 = scmp.eq.s32.totalorder %s17, 0
    %p44 = por %p42, %p43
    %s46 = sadd.s32 %s45, 1
    %p49 = scmp.eq.s32.totalorder %s11, 1
    %p50 = scmp.ne.s32.totalorder %s45, %s47
    %p51 = scmp.eq.s32.totalorder %s11, 0
    %p52 = por %p50, %p51
    %p53 = scmp.ne.s32.totalorder %s45, %s47
    %p54 = scmp.eq.s32.totalorder %s16, 1
    %p55 = por %p53, %p54
    %p56 = scmp.ne.s32.totalorder %s47, %s48
    %p57 = scmp.eq.s32.totalorder %s16, 0
    %p58 = por %p56, %p57
    %p59 = scmp.ne.s32.totalorder %s47, %s48
    %p60 = scmp.eq.s32.totalorder %s17, 1
    %p61 = por %p59, %p60
    %p63 = scmp.ne.s32.totalorder %s48, %s62
    %p64 = scmp.eq.s32.totalorder %s17, 0
    %p65 = por %p63, %p64
    %s67 = sadd.s32 %s66, 1
    %p70 = scmp.eq.s32.totalorder %s11, 1
    %p71 = scmp.ne.s32.totalorder %s66, %s68
    %p72 = scmp.eq.s32.totalorder %s11, 0
    %p73 = por %p71, %p72
    %p74 = scmp.ne.s32.totalorder %s66, %s68
    %p75 = scmp.eq.s32.totalorder %s16, 1
    %p76 = por %p74, %p75
    %p77 = scmp.ne.s32.totalorder %s68, %s69
    %p78 = scmp.eq.s32.totalorder %s16, 0
    %p79 = por %p77, %p78
    %p80 = scmp.ne.s32.totalorder %s68, %s69
    %p81 = scmp.eq.s32.totalorder %s17, 1
    %p82 = por %p80, %p81
    %p84 = scmp.ne.s32.totalorder %s69, %s83
    %p85 = scmp.eq.s32.totalorder %s17, 0
    %p86 = por %p84, %p85
    %s87 = ssub.s32 %s11, %s18
    %p88 = scmp.eq.s32.totalorder %s87, 0
    %s90 = sadd.s32 %s89, 1
    %s91 = scalar_select %p88, %s89, %s90
    %p94 = pneg %p88
    %p95 = scmp.eq.s32.totalorder %s11, 1
    %p96 = por %p94, %p95
    %p97 = scmp.ne.s32.totalorder %s89, %s92
    %p98 = scmp.eq.s32.totalorder %s11, 0
    %p99 = por %p97, %p98
    %p100 = scmp.ne.s32.totalorder %s89, %s92
    %p101 = scmp.eq.s32.totalorder %s16, 1
    %p102 = por %p100, %p101
    %p103 = scmp.ne.s32.totalorder %s92, %s93
    %p104 = scmp.eq.s32.totalorder %s16, 0
    %p105 = por %p103, %p104
    %p106 = scmp.ne.s32.totalorder %s92, %s93
    %p107 = scmp.eq.s32.totalorder %s17, 1
    %p108 = por %p106, %p107
    %p110 = scmp.ne.s32.totalorder %s93, %s109
    %p111 = scmp.eq.s32.totalorder %s17, 0
    %p112 = por %p110, %p111
    %s113 = ssub.s32 %s11, %s18
    %p114 = scmp.eq.s32.totalorder %s113, 0
    %s116 = sadd.s32 %s115, 1
    %s117 = scalar_select %p114, %s115, %s116
    %p120 = pneg %p114
    %p121 = scmp.eq.s32.totalorder %s11, 1
    %p122 = por %p120, %p121
    %p123 = scmp.ne.s32.totalorder %s115, %s118
    %p124 = scmp.eq.s32.totalorder %s11, 0
    %p125 = por %p123, %p124
    %p126 = scmp.ne.s32.totalorder %s115, %s118
    %p127 = scmp.eq.s32.totalorder %s16, 1
    %p128 = por %p126, %p127
    %p129 = scmp.ne.s32.totalorder %s118, %s119
    %p130 = scmp.eq.s32.totalorder %s16, 0
    %p131 = por %p129, %p130
    %p132 = scmp.ne.s32.totalorder %s118, %s119
    %p133 = scmp.eq.s32.totalorder %s17, 1
    %p134 = por %p132, %p133
    %p136 = scmp.ne.s32.totalorder %s119, %s135
    %p137 = scmp.eq.s32.totalorder %s17, 0
    %p138 = por %p136, %p137
    %p139 = scmp.le.s32.totalorder 1, %s11
    %p140 = scmp.lt.s32.totalorder %s11, 3
    %p141 = pnand %p139, %p140
    %p142 = pneg %p141
    // Predicated region
    $region9: #{_lambda_.20} parent=5 // pred_check
      _
    $region10: #{_lambda_.20} parent=5 // pred_check_branch
      %144 = sbr.rel (%p141) target = $region12
    $region11: #{_lambda_.20} parent=5 // pred_region
      %s145 = ssub.s32 %s11, 1
      // Predicated region
      $region13: #{_lambda_.20} parent=11 // pred_check
        %p146 = pneg %p58
      $region14: #{_lambda_.20} parent=11 // pred_check_branch
        %148 = sbr.rel (%p146) target = $region16
      $region15: #{_lambda_.20} parent=11 // pred_region
        _
      $region16: #{_lambda_.20} parent=11 // pred_fallthru
        _
      // Predicated region
      $region17: #{_lambda_.20} parent=11 // pred_check
        %p149 = pneg %p79
      $region18: #{_lambda_.20} parent=11 // pred_check_branch
        %151 = sbr.rel (%p149) target = $region20
      $region19: #{_lambda_.20} parent=11 // pred_region
        _
      $region20: #{_lambda_.20} parent=11 // pred_fallthru
        _
    $region12: #{_lambda_.20} parent=5 // pred_fallthru
      _
    %p152 = scmp.lt.s32.totalorder %s11, 2
    // Predicated region
    $region21: #{_lambda_.20} parent=5 // pred_check
      %p153 = pneg %p152
    $region22: #{_lambda_.20} parent=5 // pred_check_branch
      %155 = sbr.rel (%p153) target = $region24
    $region23: #{_lambda_.20} parent=5 // pred_region
      // Predicated region
      $region25: #{_lambda_.20} parent=23 // pred_check
        %p156 = pneg %p31
      $region26: #{_lambda_.20} parent=23 // pred_check_branch
        %158 = sbr.rel (%p156) target = $region28
      $region27: #{_lambda_.20} parent=23 // pred_region
        %p159 = scmp.lt.s32.totalorder %s11, 1
        %s160 = scalar_select %p159, %s11, 1
        %s161 = smul.addr %s160, 2
        %s162 = smul.addr %s161, 8
        %s163 = scalar_lea.vmem %s0, %s162
      $region28: #{_lambda_.20} parent=23 // pred_fallthru
        _
    $region24: #{_lambda_.20} parent=5 // pred_fallthru
      _
    %p164 = scmp.le.s32.totalorder 1, %s11
    %p165 = scmp.lt.s32.totalorder %s11, 3
    %p166 = pnand %p164, %p165
    %p167 = pneg %p166
    // Predicated region
    $region29: #{_lambda_.20} parent=5 // pred_check
      _
    $region30: #{_lambda_.20} parent=5 // pred_check_branch
      %169 = sbr.rel (%p166) target = $region32
    $region31: #{_lambda_.20} parent=5 // pred_region
      %s170 = ssub.s32 %s11, 1
      %p171 = scmp.lt.s32.totalorder %s16, 1
      %s172 = scalar_select %p171, %s16, 1
      %s173 = smul.addr %s172, 2
      %s174 = smul.addr %s173, 8
      %s175 = scalar_lea.vmem %s0, %s174
      %p176 = pneg %p37
      %p177 = pneg %p34
      %p178 = pneg %p58
      %p179 = pneg %p55
      %p180 = pneg %p79
      %p181 = pneg %p76
      %p182 = pneg %p105
      %p183 = pneg %p102
      %p184 = scmp.lt.s32.totalorder %s16, 1
      %s185 = scalar_select %p184, %s16, 1
      %s186 = scalar_lea.vmem %s3, %s185
      %p187 = pneg %p131
      %p188 = pneg %p128
      %p189 = scmp.lt.s32.totalorder %s16, 1
      %s190 = scalar_select %p189, %s16, 1
      %s191 = smul.addr %s190, 2
      %s192 = smul.addr %s191, 8
      %s193 = scalar_lea.vmem %s4, %s192
      %p194 = scmp.lt.s32.totalorder %s16, 1
      %s195 = scalar_select %p194, %s16, 1
      %s196 = smul.addr %s195, 2
      %s197 = smul.addr %s196, 8
      %s198 = scalar_lea.vmem %s0, %s197
      %p199 = scmp.lt.s32.totalorder %s16, 1
      %s200 = scalar_select %p199, %s16, 1
      %s201 = scalar_lea.vmem %s3, %s200
      %p202 = scmp.lt.s32.totalorder %s16, 1
      %s203 = scalar_select %p202, %s16, 1
      %s204 = smul.addr %s203, 2
      %s205 = smul.addr %s204, 8
      %s206 = scalar_lea.vmem %s4, %s205
      %v208 = vld [vmem:[%s198] sm:$0xff]
      %v209 = vld [vmem:[%s198 + $0x8] sm:$0xff]
      %v210 = vpack.c.bf16 %v209, %v208
      %v211 = vld [vmem:[%s1] sm:$0xf]
      %v212 = vld [vmem:[%s1 + $0x4] sm:$0xf]
      %v213 = vld [vmem:[%s1 + $0x8] sm:$0xf]
      %v214 = vld [vmem:[%s1 + $0xc] sm:$0xf]
      %v215 = vld [vmem:[%s2] sm:$0x1]
      %v217 = vlaneseq
      %v218 = vshrl.u32 %v217, 7
      %v219 = vsub.s32 0, %v218
      %v220 = vrot.slane %v215, %v219
      %v226 = vunpack.c.l.b16 %v211
      %v227 = vunpack.c.l.b16 %v212
      %v228 = vunpack.c.l.b16 %v213
      %v229 = vunpack.c.l.b16 %v214
      %v230 = vpack.c.b16 %v227, %v226
      %v231 = vpack.c.b16 %v229, %v228
      %vm234 = vcmask 261120
      %v236 = vsel %vm234, %v210, 0
      %238 = vmatprep.subr.bf16.mxu0 0
      %239 = vmatpush1.bf16.msra.mxu0 %v230
      %240 = vmatprep.subr.bf16.mxu0 0
      %241 = vmatpush1.bf16.msra.mxu0 %v231
      %242 = vmatprep.subr.bf16.mxu0 0
      %243 = vmatpush1.bf16.msra.mxu0 0
      %244 = vmatprep.subr.bf16.mxu0 0
      %245 = vmatpush1.bf16.msra.mxu0 0
      %246 = vmatprep.subr.bf16.mxu0 0
      %247 = vmatpush1.bf16.msra.mxu0 0
      %248 = vmatprep.subr.bf16.mxu0 0
      %249 = vmatpush1.bf16.msra.mxu0 0
      %250 = vmatprep.subr.bf16.mxu0 0
      %251 = vmatpush1.bf16.msra.mxu0 0
      %252 = vmatprep.subr.bf16.mxu0 0
      %253 = vmatpush1.bf16.msra.mxu0 0
      %254 = vmatprep.subr.bf16.mxu0 0
      %255 = vmatpush1.bf16.msra.mxu0 0
      %256 = vmatprep.subr.bf16.mxu0 0
      %257 = vmatpush1.bf16.msra.mxu0 0
      %258 = vmatprep.subr.bf16.mxu0 0
      %259 = vmatpush1.bf16.msra.mxu0 0
      %260 = vmatprep.subr.bf16.mxu0 0
      %261 = vmatpush1.bf16.msra.mxu0 0
      %262 = vmatprep.subr.bf16.mxu0 0
      %263 = vmatpush1.bf16.msra.mxu0 0
      %264 = vmatprep.subr.bf16.mxu0 0
      %265 = vmatpush1.bf16.msra.mxu0 0
      %266 = vmatprep.subr.bf16.mxu0 0
      %267 = vmatpush1.bf16.msra.mxu0 0
      %268 = vmatprep.subr.bf16.mxu0 0
      %269 = vmatpush1.bf16.msra.mxu0 0
      %270 = vmatprep.mubr.bf16.mxu0 0
      %271 = vmatmul.mubr.bf16.gmra.mrb[0].mxu0 %v236
      %v272 = vpop.f32.mrb[0].mxu0
      %v273 = vadd.f32 %v220, %v272
      %v274 = vpop.f32.mrb[0].mxu0
      %v275 = vpop.f32.mrb[0].mxu0
      %v276 = vadd.f32 %v220, %v275
      %v277 = vpop.f32.mrb[0].mxu0
      %278 = vdwg.mxu0
      %281 = vrot.lane.b32.xlu0 %v273, 64
      %v282 = vpop.permute.xlu0 %281
      %283 = vrot.lane.b32.xlu0 %v276, 64
      %v284 = vpop.permute.xlu0 %283
      %287 = vst.msk [vmem:[%s206] sm:$0xff] %vm234, %v282
      %288 = vst.msk [vmem:[%s206 + $0x8] sm:$0xff] %vm234, %v284
      %v289 = vpack.c.bf16 %v276, %v273
      %291 = vrot.lane.b32.xlu0 %v289, 96
      %v292 = vpop.permute.xlu0 %291
      %v294 = vsel %vm234, %v292, 0
      %v297 = vsel %vm234, %v289, 0
      %299 = vmatprep.subr.bf16.mxu0 0
      %300 = vmatpush1.bf16.xpose.msra.mxu0 %v297
      %301 = vmatprep.subr.bf16.mxu0 0
      %302 = vmatpush1.bf16.xpose.msra.mxu0 0
      %303 = vmatprep.subr.bf16.mxu0 0
      %304 = vmatpush1.bf16.xpose.msra.mxu0 0
      %305 = vmatprep.subr.bf16.mxu0 0
      %306 = vmatpush1.bf16.xpose.msra.mxu0 0
      %307 = vmatprep.subr.bf16.mxu0 0
      %308 = vmatpush1.bf16.xpose.msra.mxu0 0
      %309 = vmatprep.subr.bf16.mxu0 0
      %310 = vmatpush1.bf16.xpose.msra.mxu0 0
      %311 = vmatprep.subr.bf16.mxu0 0
      %312 = vmatpush1.bf16.xpose.msra.mxu0 0
      %313 = vmatprep.subr.bf16.mxu0 0
      %314 = vmatpush1.bf16.xpose.msra.mxu0 0
      %315 = vmatprep.subr.bf16.mxu0 0
      %316 = vmatpush1.bf16.xpose.msra.mxu0 0
      %317 = vmatprep.subr.bf16.mxu0 0
      %318 = vmatpush1.bf16.xpose.msra.mxu0 0
      %319 = vmatprep.subr.bf16.mxu0 0
      %320 = vmatpush1.bf16.xpose.msra.mxu0 0
      %321 = vmatprep.subr.bf16.mxu0 0
      %322 = vmatpush1.bf16.xpose.msra.mxu0 0
      %323 = vmatprep.subr.bf16.mxu0 0
      %324 = vmatpush1.bf16.xpose.msra.mxu0 0
      %325 = vmatprep.subr.bf16.mxu0 0
      %326 = vmatpush1.bf16.xpose.msra.mxu0 0
      %327 = vmatprep.subr.bf16.mxu0 0
      %328 = vmatpush1.bf16.xpose.msra.mxu0 0
      %329 = vmatprep.subr.bf16.mxu0 0
      %330 = vmatpush1.bf16.xpose.msra.mxu0 0
      %331 = vmatprep.mubr.bf16.mxu0 0
      %332 = vmatmul.mubr.bf16.gmra.mrb[0].mxu0 %v294
      %v333 = vpop.f32.mrb[0].mxu0
      %v334 = vadd.f32 0.0, %v333
      %v335 = vpop.f32.mrb[0].mxu0
      %v336 = vpop.f32.mrb[0].mxu0
      %v337 = vadd.f32 0.0, %v336
      %v338 = vpop.f32.mrb[0].mxu0
      %339 = vdwg.mxu0
      %v340 = vlaneseq
      %v341 = vshrl.u32 %v340, 7
      %v342 = vadd.s32 %v341, 8
      %345 = vrot.lane.b32.xlu0 %v334, 127
      %v346 = vpop.permute.xlu0 %345
      %347 = vrot.lane.b32.xlu0 %v337, 127
      %v348 = vpop.permute.xlu0 %347
      %351 = vrot.lane.b32.xlu0 %v334, 15
      %v352 = vpop.permute.xlu0 %351
      %353 = vrot.lane.b32.xlu0 %v337, 15
      %v354 = vpop.permute.xlu0 %353
      %vm357 = vcmask 121856
      %v358 = vsel %vm357, %v346, %v352
      %v359 = vsel %vm357, %v348, %v354
      %v360 = vand.u32 %v341, 1
      %v361 = vand.u32 %v342, 1
      %vm362 = vcmp.ne.s32.totalorder %v360, 0
      %vm363 = vcmp.ne.s32.totalorder %v361, 0
      %v364 = vsel %vm362, %v358, %v334
      %v365 = vsel %vm363, %v359, %v337
      %368 = vrot.lane.b32.xlu0 %v364, 126
      %v369 = vpop.permute.xlu0 %368
      %370 = vrot.lane.b32.xlu0 %v365, 126
      %v371 = vpop.permute.xlu0 %370
      %374 = vrot.lane.b32.xlu0 %v364, 14
      %v375 = vpop.permute.xlu0 %374
      %376 = vrot.lane.b32.xlu0 %v365, 14
      %v377 = vpop.permute.xlu0 %376
      %vm380 = vcmask 113664
      %v381 = vsel %vm380, %v369, %v375
      %v382 = vsel %vm380, %v371, %v377
      %v383 = vand.u32 %v341, 2
      %v384 = vand.u32 %v342, 2
      %vm385 = vcmp.ne.s32.totalorder %v383, 0
      %vm386 = vcmp.ne.s32.totalorder %v384, 0
      %v387 = vsel %vm385, %v381, %v364
      %v388 = vsel %vm386, %v382, %v365
      %391 = vrot.lane.b32.xlu0 %v387, 124
      %v392 = vpop.permute.xlu0 %391
      %393 = vrot.lane.b32.xlu0 %v388, 124
      %v394 = vpop.permute.xlu0 %393
      %397 = vrot.lane.b32.xlu0 %v387, 12
      %v398 = vpop.permute.xlu0 %397
      %399 = vrot.lane.b32.xlu0 %v388, 12
      %v400 = vpop.permute.xlu0 %399
      %vm403 = vcmask 97280
      %v404 = vsel %vm403, %v392, %v398
      %v405 = vsel %vm403, %v394, %v400
      %v406 = vand.u32 %v341, 4
      %v407 = vand.u32 %v342, 4
      %vm408 = vcmp.ne.s32.totalorder %v406, 0
      %vm409 = vcmp.ne.s32.totalorder %v407, 0
      %v410 = vsel %vm408, %v404, %v387
      %v411 = vsel %vm409, %v405, %v388
      %414 = vrot.lane.b32.xlu0 %v410, 120
      %v415 = vpop.permute.xlu0 %414
      %416 = vrot.lane.b32.xlu0 %v411, 120
      %v417 = vpop.permute.xlu0 %416
      %420 = vrot.lane.b32.xlu0 %v410, 8
      %v421 = vpop.permute.xlu0 %420
      %422 = vrot.lane.b32.xlu0 %v411, 8
      %v423 = vpop.permute.xlu0 %422
      %vm426 = vcmask 64512
      %v427 = vsel %vm426, %v415, %v421
      %v428 = vsel %vm426, %v417, %v423
      %v429 = vand.u32 %v341, 8
      %v430 = vand.u32 %v342, 8
      %vm431 = vcmp.ne.s32.totalorder %v429, 0
      %vm432 = vcmp.ne.s32.totalorder %v430, 0
      %v433 = vsel %vm431, %v427, %v410
      %v434 = vsel %vm432, %v428, %v411
      %vm435 = vcmask 130048
      %v436 = vsel %vm435, %v433, 0.0
      %v437 = vsel %vm435, %v434, 0.0
      %v438 = vadd.f32 %v436, %v437
      %v439 = vrot.slane %v438, 4
      %v440 = vadd.f32 %v438, %v439
      %v441 = vrot.slane %v440, 2
      %v442 = vadd.f32 %v440, %v441
      %v443 = vrot.slane %v442, 1
      %v444 = vadd.f32 %v442, %v443
      %v445 = vmul.f32 %v444, 0.03125
      %vm446 = vcmask 122880
      %447 = vst.msk [vmem:[%s201] sm:$0x1] %vm446, %v445
      %p448 = scmp.lt.s32.totalorder %s16, 1
      %s449 = scalar_select %p448, %s16, 1
      %s450 = scalar_lea.vmem %s3, %s449
      %p451 = scmp.lt.s32.totalorder %s16, 1
      %s452 = scalar_select %p451, %s16, 1
      %s453 = smul.addr %s452, 2
      %s454 = smul.addr %s453, 8
      %s455 = scalar_lea.vmem %s4, %s454
      // Predicated region
      $region33: #{_lambda_.20} parent=31 // pred_check
        %p456 = pneg %p102
      $region34: #{_lambda_.20} parent=31 // pred_check_branch
        %458 = sbr.rel (%p456) target = $region36
      $region35: #{_lambda_.20} parent=31 // pred_region
        _
      $region36: #{_lambda_.20} parent=31 // pred_fallthru
        _
      // Predicated region
      $region37: #{_lambda_.20} parent=31 // pred_check
        %p459 = pneg %p128
      $region38: #{_lambda_.20} parent=31 // pred_check_branch
        %461 = sbr.rel (%p459) target = $region40
      $region39: #{_lambda_.20} parent=31 // pred_region
        _
      $region40: #{_lambda_.20} parent=31 // pred_fallthru
        _
    $region32: #{_lambda_.20} parent=5 // pred_fallthru
      _
    %p462 = scmp.le.s32.totalorder 2, %s11
    // Predicated region
    $region41: #{_lambda_.20} parent=5 // pred_check
      %p463 = pneg %p462
    $region42: #{_lambda_.20} parent=5 // pred_check_branch
      %465 = sbr.rel (%p463) target = $region44
    $region43: #{_lambda_.20} parent=5 // pred_region
      %s466 = ssub.s32 %s11, 2
      // Predicated region
      $region45: #{_lambda_.20} parent=43 // pred_check
        %p467 = pneg %p108
      $region46: #{_lambda_.20} parent=43 // pred_check_branch
        %469 = sbr.rel (%p467) target = $region48
      $region47: #{_lambda_.20} parent=43 // pred_region
        %p470 = scmp.lt.s32.totalorder %s17, 1
        %s471 = scalar_select %p470, %s17, 1
        %s472 = scalar_lea.vmem %s3, %s471
      $region48: #{_lambda_.20} parent=43 // pred_fallthru
        _
      // Predicated region
      $region49: #{_lambda_.20} parent=43 // pred_check
        %p473 = pneg %p134
      $region50: #{_lambda_.20} parent=43 // pred_check_branch
        %475 = sbr.rel (%p473) target = $region52
      $region51: #{_lambda_.20} parent=43 // pred_region
        %p476 = scmp.lt.s32.totalorder %s17, 1
        %s477 = scalar_select %p476, %s17, 1
        %s478 = smul.addr %s477, 2
        %s479 = smul.addr %s478, 8
        %s480 = scalar_lea.vmem %s4, %s479
      $region52: #{_lambda_.20} parent=43 // pred_fallthru
        _
    $region44: #{_lambda_.20} parent=5 // pred_fallthru
      _
  $region6: #{_lambda_.20} parent=0 // loop_footer
    %s15 = sadd.s32 1, %s11
  $region7: #{_lambda_.20} parent=0 // loop_footer_branch
    %10 = sbr.rel target = $region3
  $region8: #{_lambda_.20} parent=0 // loop_exit
    _

// kernel: _lambda_.21
$region0: #{_lambda_.21}
  #allocation0 [shape = 'u32[]', space=smem, size = 0x4, offset = 0x4, fixed_abs, tag = 'smem constant byte address 0x4 - core index']
  #allocation1 [shape = 'u32[144,128]{1,0:T(1,128)}', space=vmem, size = 0x12000, scoped, tag = 'internal scratch']
  #allocation2 [shape = 'f32[32,32]{1,0:T(8,128)}', space=vmem, size = 0x4000, scoped, tag = 'scratch operand']
  #allocation3 [shape = 's32[1]{0}', space=sflag, size = 0x4, scoped, tag = 'scoped memory for _lambda_.21']
  #allocation4 [shape = 'u8[1024]{0}', space=smem, size = 0x400, scoped, tag = 'prefetched SMEM operand 0']
  #allocation5 [shape = 'u8[1024]{0}', space=smem, size = 0x400, scoped, tag = 'prefetched SMEM operand 1']
  %s0 = inlined_call_operand.vmem [shape: s32[2,2], index: 0, kind: input, shape index: {}]
  %s1 = inlined_call_operand.vmem [shape: f32[2,2], index: 1, kind: input, shape index: {}]
  %s2 = inlined_call_operand.vmem [shape: f32[2,16,32], index: 2, kind: input, shape index: {}]
  %s3 = inlined_call_operand.vmem [shape: f32[2,16,32], index: 3, kind: input, shape index: {}]
  %s4 = inlined_call_operand.vmem [shape: bf16[32,32], index: 4, kind: input, shape index: {}]
  %s5 = inlined_call_operand.vmem [shape: f32[1,32], index: 5, kind: input, shape index: {}]
  %s6 = inlined_call_operand.vmem [shape: f32[2,16,32], index: 6, kind: output, shape index: {0}]
  %s7 = inlined_call_operand.vmem [shape: f32[2,16,32], index: 7, kind: output, shape index: {1}]
  %8 = xla_tuple %s6, %s7
  %s9 = sld [smem:[#allocation0]]
  $region57: #{_lambda_.21} parent=0
    _
  %s11 = ssub.s32 1, %s9
  %s12 = scalar_select 0, %s11, %s9
  %s13 = sshll.u32 %s0, 4
  %s14 = int_to_ptr.vmem [resolvable:$true] %s13
  %16 = dma.vmem_to_smem %s14, 32, [#allocation4], [#allocation3]
  %s17 = sshll.u32 %s1, 4
  %s18 = int_to_ptr.vmem [resolvable:$true] %s17
  %20 = dma.vmem_to_smem %s18, 32, [#allocation5], [#allocation3]
  %21 = dma.done [#allocation3], 64
  %22 = sfence
  loop: start=0, step=1, limit=4
  $region2: #{_lambda_.21} parent=0 // loop_pre_header
    _
  $region3: #{_lambda_.21} parent=0 // loop_header
    %s24 = sphi 0, %s28
    %p25 = scmp.ge.s32.totalorder %s24, 4
    %s34 = sphi 0, %s36
    %s37 = sphi 0, %s34
    %s38 = sphi 0, %s37
    %s54 = sphi 0, %s38
    %s60 = sphi 0, %s62
    %s63 = sphi 0, %s60
    %s64 = sphi 0, %s63
    %s80 = sphi 0, %s64
    %s84 = sphi 0, %s84
    %s86 = sphi 0, %s84
    %s87 = sphi 0, %s86
    %s101 = sphi 0, %s87
    %s105 = sphi 0, %s105
    %s107 = sphi 0, %s105
    %s108 = sphi 0, %s107
    %s122 = sphi 0, %s108
    %s128 = sphi 0, %s130
    %s131 = sphi 0, %s128
    %s132 = sphi 0, %s131
    %s148 = sphi 0, %s132
    %s154 = sphi 0, %s156
    %s157 = sphi 0, %s154
    %s158 = sphi 0, %s157
    %s174 = sphi 0, %s158
  $region4: #{_lambda_.21} parent=0 // loop_header_branch
    %27 = sbr.rel (%p25) target = $region8
  $region5: #{_lambda_.21} parent=0 // loop_body
    %s29 = ssub.s32 %s24, 1
    %s30 = ssub.s32 %s24, 2
    %s31 = sadd.s32 %s24, 1
    %s32 = ssub.s32 %s24, %s31
    %p33 = scmp.eq.s32.totalorder %s32, 0
    %s35 = sadd.s32 %s34, 1
    %s36 = scalar_select %p33, %s34, %s35
    %p39 = pneg %p33
    %p40 = scmp.eq.s32.totalorder %s24, 1
    %p41 = por %p39, %p40
    %p42 = scmp.ne.s32.totalorder %s34, %s37
    %p43 = scmp.eq.s32.totalorder %s24, 0
    %p44 = por %p42, %p43
    %p45 = scmp.ne.s32.totalorder %s34, %s37
    %p46 = scmp.eq.s32.totalorder %s29, 1
    %p47 = por %p45, %p46
    %p48 = scmp.ne.s32.totalorder %s37, %s38
    %p49 = scmp.eq.s32.totalorder %s29, 0
    %p50 = por %p48, %p49
    %p51 = scmp.ne.s32.totalorder %s37, %s38
    %p52 = scmp.eq.s32.totalorder %s30, 1
    %p53 = por %p51, %p52
    %p55 = scmp.ne.s32.totalorder %s38, %s54
    %p56 = scmp.eq.s32.totalorder %s30, 0
    %p57 = por %p55, %p56
    %s58 = ssub.s32 %s24, %s31
    %p59 = scmp.eq.s32.totalorder %s58, 0
    %s61 = sadd.s32 %s60, 1
    %s62 = scalar_select %p59, %s60, %s61
    %p65 = pneg %p59
    %p66 = scmp.eq.s32.totalorder %s24, 1
    %p67 = por %p65, %p66
    %p68 = scmp.ne.s32.totalorder %s60, %s63
    %p69 = scmp.eq.s32.totalorder %s24, 0
    %p70 = por %p68, %p69
    %p71 = scmp.ne.s32.totalorder %s60, %s63
    %p72 = scmp.eq.s32.totalorder %s29, 1
    %p73 = por %p71, %p72
    %p74 = scmp.ne.s32.totalorder %s63, %s64
    %p75 = scmp.eq.s32.totalorder %s29, 0
    %p76 = por %p74, %p75
    %p77 = scmp.ne.s32.totalorder %s63, %s64
    %p78 = scmp.eq.s32.totalorder %s30, 1
    %p79 = por %p77, %p78
    %p81 = scmp.ne.s32.totalorder %s64, %s80
    %p82 = scmp.eq.s32.totalorder %s30, 0
    %p83 = por %p81, %p82
    %s85 = sadd.s32 %s84, 1
    %p88 = scmp.eq.s32.totalorder %s24, 1
    %p89 = scmp.ne.s32.totalorder %s84, %s86
    %p90 = scmp.eq.s32.totalorder %s24, 0
    %p91 = por %p89, %p90
    %p92 = scmp.ne.s32.totalorder %s84, %s86
    %p93 = scmp.eq.s32.totalorder %s29, 1
    %p94 = por %p92, %p93
    %p95 = scmp.ne.s32.totalorder %s86, %s87
    %p96 = scmp.eq.s32.totalorder %s29, 0
    %p97 = por %p95, %p96
    %p98 = scmp.ne.s32.totalorder %s86, %s87
    %p99 = scmp.eq.s32.totalorder %s30, 1
    %p100 = por %p98, %p99
    %p102 = scmp.ne.s32.totalorder %s87, %s101
    %p103 = scmp.eq.s32.totalorder %s30, 0
    %p104 = por %p102, %p103
    %s106 = sadd.s32 %s105, 1
    %p109 = scmp.eq.s32.totalorder %s24, 1
    %p110 = scmp.ne.s32.totalorder %s105, %s107
    %p111 = scmp.eq.s32.totalorder %s24, 0
    %p112 = por %p110, %p111
    %p113 = scmp.ne.s32.totalorder %s105, %s107
    %p114 = scmp.eq.s32.totalorder %s29, 1
    %p115 = por %p113, %p114
    %p116 = scmp.ne.s32.totalorder %s107, %s108
    %p117 = scmp.eq.s32.totalorder %s29, 0
    %p118 = por %p116, %p117
    %p119 = scmp.ne.s32.totalorder %s107, %s108
    %p120 = scmp.eq.s32.totalorder %s30, 1
    %p121 = por %p119, %p120
    %p123 = scmp.ne.s32.totalorder %s108, %s122
    %p124 = scmp.eq.s32.totalorder %s30, 0
    %p125 = por %p123, %p124
    %s126 = ssub.s32 %s24, %s31
    %p127 = scmp.eq.s32.totalorder %s126, 0
    %s129 = sadd.s32 %s128, 1
    %s130 = scalar_select %p127, %s128, %s129
    %p133 = pneg %p127
    %p134 = scmp.eq.s32.totalorder %s24, 1
    %p135 = por %p133, %p134
    %p136 = scmp.ne.s32.totalorder %s128, %s131
    %p137 = scmp.eq.s32.totalorder %s24, 0
    %p138 = por %p136, %p137
    %p139 = scmp.ne.s32.totalorder %s128, %s131
    %p140 = scmp.eq.s32.totalorder %s29, 1
    %p141 = por %p139, %p140
    %p142 = scmp.ne.s32.totalorder %s131, %s132
    %p143 = scmp.eq.s32.totalorder %s29, 0
    %p144 = por %p142, %p143
    %p145 = scmp.ne.s32.totalorder %s131, %s132
    %p146 = scmp.eq.s32.totalorder %s30, 1
    %p147 = por %p145, %p146
    %p149 = scmp.ne.s32.totalorder %s132, %s148
    %p150 = scmp.eq.s32.totalorder %s30, 0
    %p151 = por %p149, %p150
    %s152 = ssub.s32 %s24, %s31
    %p153 = scmp.eq.s32.totalorder %s152, 0
    %s155 = sadd.s32 %s154, 1
    %s156 = scalar_select %p153, %s154, %s155
    %p159 = pneg %p153
    %p160 = scmp.eq.s32.totalorder %s24, 1
    %p161 = por %p159, %p160
    %p162 = scmp.ne.s32.totalorder %s154, %s157
    %p163 = scmp.eq.s32.totalorder %s24, 0
    %p164 = por %p162, %p163
    %p165 = scmp.ne.s32.totalorder %s154, %s157
    %p166 = scmp.eq.s32.totalorder %s29, 1
    %p167 = por %p165, %p166
    %p168 = scmp.ne.s32.totalorder %s157, %s158
    %p169 = scmp.eq.s32.totalorder %s29, 0
    %p170 = por %p168, %p169
    %p171 = scmp.ne.s32.totalorder %s157, %s158
    %p172 = scmp.eq.s32.totalorder %s30, 1
    %p173 = por %p171, %p172
    %p175 = scmp.ne.s32.totalorder %s158, %s174
    %p176 = scmp.eq.s32.totalorder %s30, 0
    %p177 = por %p175, %p176
    %p178 = scmp.le.s32.totalorder 1, %s24
    %p179 = scmp.lt.s32.totalorder %s24, 3
    %p180 = pnand %p178, %p179
    %p181 = pneg %p180
    // Predicated region
    $region9: #{_lambda_.21} parent=5 // pred_check
      _
    $region10: #{_lambda_.21} parent=5 // pred_check_branch
      %183 = sbr.rel (%p180) target = $region12
    $region11: #{_lambda_.21} parent=5 // pred_region
      %s184 = ssub.s32 %s24, 1
      // Predicated region
      $region13: #{_lambda_.21} parent=11 // pred_check
        %p185 = pneg %p97
      $region14: #{_lambda_.21} parent=11 // pred_check_branch
        %187 = sbr.rel (%p185) target = $region16
      $region15: #{_lambda_.21} parent=11 // pred_region
        _
      $region16: #{_lambda_.21} parent=11 // pred_fallthru
        _
      // Predicated region
      $region17: #{_lambda_.21} parent=11 // pred_check
        %p188 = pneg %p118
      $region18: #{_lambda_.21} parent=11 // pred_check_branch
        %190 = sbr.rel (%p188) target = $region20
      $region19: #{_lambda_.21} parent=11 // pred_region
        _
      $region20: #{_lambda_.21} parent=11 // pred_fallthru
        _
    $region12: #{_lambda_.21} parent=5 // pred_fallthru
      _
    %p191 = scmp.lt.s32.totalorder %s24, 2
    // Predicated region
    $region21: #{_lambda_.21} parent=5 // pred_check
      %p192 = pneg %p191
    $region22: #{_lambda_.21} parent=5 // pred_check_branch
      %194 = sbr.rel (%p192) target = $region24
    $region23: #{_lambda_.21} parent=5 // pred_region
      // Predicated region
      $region25: #{_lambda_.21} parent=23 // pred_check
        %p195 = pneg %p44
      $region26: #{_lambda_.21} parent=23 // pred_check_branch
        %197 = sbr.rel (%p195) target = $region28
      $region27: #{_lambda_.21} parent=23 // pred_region
        %p198 = scmp.lt.s32.totalorder %s24, 1
        %s199 = scalar_select %p198, %s24, 1
        %s200 = smul.addr %s199, 2
        %s201 = smul.addr %s200, 8
        %s202 = scalar_lea.vmem %s2, %s201
      $region28: #{_lambda_.21} parent=23 // pred_fallthru
        _
      // Predicated region
      $region29: #{_lambda_.21} parent=23 // pred_check
        %p203 = pneg %p70
      $region30: #{_lambda_.21} parent=23 // pred_check_branch
        %205 = sbr.rel (%p203) target = $region32
      $region31: #{_lambda_.21} parent=23 // pred_region
        %p206 = scmp.lt.s32.totalorder %s24, 1
        %s207 = scalar_select %p206, %s24, 1
        %s208 = smul.addr %s207, 2
        %s209 = smul.addr %s208, 8
        %s210 = scalar_lea.vmem %s3, %s209
      $region32: #{_lambda_.21} parent=23 // pred_fallthru
        _
    $region24: #{_lambda_.21} parent=5 // pred_fallthru
      _
    %p211 = scmp.le.s32.totalorder 1, %s24
    %p212 = scmp.lt.s32.totalorder %s24, 3
    %p213 = pnand %p211, %p212
    %p214 = pneg %p213
    // Predicated region
    $region33: #{_lambda_.21} parent=5 // pred_check
      _
    $region34: #{_lambda_.21} parent=5 // pred_check_branch
      %216 = sbr.rel (%p213) target = $region36
    $region35: #{_lambda_.21} parent=5 // pred_region
      %s217 = ssub.s32 %s24, 1
      %p218 = scmp.lt.s32.totalorder %s29, 1
      %s219 = scalar_select %p218, %s29, 1
      %s220 = smul.addr %s219, 2
      %s221 = smul.addr %s220, 8
      %s222 = scalar_lea.vmem %s2, %s221
      %p223 = pneg %p50
      %p224 = pneg %p47
      %p225 = scmp.lt.s32.totalorder %s29, 1
      %s226 = scalar_select %p225, %s29, 1
      %s227 = smul.addr %s226, 2
      %s228 = smul.addr %s227, 8
      %s229 = scalar_lea.vmem %s3, %s228
      %p230 = pneg %p76
      %p231 = pneg %p73
      %p232 = pneg %p97
      %p233 = pneg %p94
      %p234 = pneg %p118
      %p235 = pneg %p115
      %p236 = pneg %p144
      %p237 = pneg %p141
      %p238 = scmp.lt.s32.totalorder %s29, 1
      %s239 = scalar_select %p238, %s29, 1
      %s240 = smul.addr %s239, 2
      %s241 = smul.addr %s240, 8
      %s242 = scalar_lea.vmem %s6, %s241
      %p243 = pneg %p170
      %p244 = pneg %p167
      %p245 = scmp.lt.s32.totalorder %s29, 1
      %s246 = scalar_select %p245, %s29, 1
      %s247 = smul.addr %s246, 2
      %s248 = smul.addr %s247, 8
      %s249 = scalar_lea.vmem %s7, %s248
      %p250 = scmp.lt.s32.totalorder %s29, 1
      %s251 = scalar_select %p250, %s29, 1
      %s252 = smul.addr %s251, 2
      %s253 = smul.addr %s252, 8
      %s254 = scalar_lea.vmem %s2, %s253
      %p255 = scmp.lt.s32.totalorder %s29, 1
      %s256 = scalar_select %p255, %s29, 1
      %s257 = smul.addr %s256, 2
      %s258 = smul.addr %s257, 8
      %s259 = scalar_lea.vmem %s3, %s258
      %p260 = scmp.lt.s32.totalorder %s29, 1
      %s261 = scalar_select %p260, %s29, 1
      %s262 = smul.addr %s261, 2
      %s263 = smul.addr %s262, 8
      %s264 = scalar_lea.vmem %s6, %s263
      %p265 = scmp.lt.s32.totalorder %s29, 1
      %s266 = scalar_select %p265, %s29, 1
      %s267 = smul.addr %s266, 2
      %s268 = smul.addr %s267, 8
      %s269 = scalar_lea.vmem %s7, %s268
      %v271 = vld [vmem:[%s254] sm:$0xff]
      %v272 = vld [vmem:[%s254 + $0x8] sm:$0xff]
      %vm273 = vcmask 261120
      %274 = vst.msk [vmem:[#allocation2] sm:$0xff] %vm273, %v271
      %275 = vst.msk [vmem:[#allocation2 + $0x8] sm:$0xff] %vm273, %v272
      %276 = vst.msk [vmem:[#allocation2 + $0x10] sm:$0xff] %vm273, %v271
      %277 = vst.msk [vmem:[#allocation2 + $0x18] sm:$0xff] %vm273, %v272
      %s278 = smul.u32 %s29, 128
      %s279 = sld [smem:[#allocation4 + %s278]]
      %s280 = scalar_lea.vmem [#allocation2], %s279
      %v281 = vld [vmem:[%s280] sm:$0xff]
      %v282 = vld [vmem:[%s280 + $0x8] sm:$0xff]
      %s283 = sld [smem:[#allocation5 + %s278]]
      %v284 = vstv %s283
      %v285 = vmul.f32 %v281, %v284
      %v286 = vmul.f32 %v282, %v284
      %v287 = vadd.f32 %v285, 0.0
      %v288 = vadd.f32 %v286, 0.0
      %s289 = sadd.s32 %s278, 1
      %s290 = sld [smem:[#allocation4 + %s289]]
      %s291 = scalar_lea.vmem [#allocation2], %s290
      %v292 = vld [vmem:[%s291] sm:$0xff]
      %v293 = vld [vmem:[%s291 + $0x8] sm:$0xff]
      %s294 = sld [smem:[#allocation5 + %s289]]
      %v295 = vstv %s294
      %v296 = vmul.f32 %v292, %v295
      %v297 = vmul.f32 %v293, %v295
      %v298 = vadd.f32 %v287, %v296
      %v299 = vadd.f32 %v288, %v297
      %v300 = vpack.c.bf16 %v299, %v298
      %v301 = vld [vmem:[%s4] sm:$0xf]
      %v302 = vld [vmem:[%s4 + $0x4] sm:$0xf]
      %v303 = vld [vmem:[%s4 + $0x8] sm:$0xf]
      %v304 = vld [vmem:[%s4 + $0xc] sm:$0xf]
      %v305 = vld [vmem:[%s5] sm:$0x1]
      %v307 = vlaneseq
      %v308 = vshrl.u32 %v307, 7
      %v309 = vsub.s32 0, %v308
      %v310 = vrot.slane %v305, %v309
      %v316 = vunpack.c.l.b16 %v301
      %v317 = vunpack.c.l.b16 %v302
      %v318 = vunpack.c.l.b16 %v303
      %v319 = vunpack.c.l.b16 %v304
      %v320 = vpack.c.b16 %v317, %v316
      %v321 = vpack.c.b16 %v319, %v318
      %v325 = vsel %vm273, %v300, 0
      %327 = vmatprep.subr.bf16.mxu0 0
      %328 = vmatpush1.bf16.msra.mxu0 %v320
      %329 = vmatprep.subr.bf16.mxu0 0
      %330 = vmatpush1.bf16.msra.mxu0 %v321
      %331 = vmatprep.subr.bf16.mxu0 0
      %332 = vmatpush1.bf16.msra.mxu0 0
      %333 = vmatprep.subr.bf16.mxu0 0
      %334 = vmatpush1.bf16.msra.mxu0 0
      %335 = vmatprep.subr.bf16.mxu0 0
      %336 = vmatpush1.bf16.msra.mxu0 0
      %337 = vmatprep.subr.bf16.mxu0 0
      %338 = vmatpush1.bf16.msra.mxu0 0
      %339 = vmatprep.subr.bf16.mxu0 0
      %340 = vmatpush1.bf16.msra.mxu0 0
      %341 = vmatprep.subr.bf16.mxu0 0
      %342 = vmatpush1.bf16.msra.mxu0 0
      %343 = vmatprep.subr.bf16.mxu0 0
      %344 = vmatpush1.bf16.msra.mxu0 0
      %345 = vmatprep.subr.bf16.mxu0 0
      %346 = vmatpush1.bf16.msra.mxu0 0
      %347 = vmatprep.subr.bf16.mxu0 0
      %348 = vmatpush1.bf16.msra.mxu0 0
      %349 = vmatprep.subr.bf16.mxu0 0
      %350 = vmatpush1.bf16.msra.mxu0 0
      %351 = vmatprep.subr.bf16.mxu0 0
      %352 = vmatpush1.bf16.msra.mxu0 0
      %353 = vmatprep.subr.bf16.mxu0 0
      %354 = vmatpush1.bf16.msra.mxu0 0
      %355 = vmatprep.subr.bf16.mxu0 0
      %356 = vmatpush1.bf16.msra.mxu0 0
      %357 = vmatprep.subr.bf16.mxu0 0
      %358 = vmatpush1.bf16.msra.mxu0 0
      %359 = vmatprep.mubr.bf16.mxu0 0
      %360 = vmatmul.mubr.bf16.gmra.mrb[0].mxu0 %v325
      %v361 = vpop.f32.mrb[0].mxu0
      %v362 = vadd.f32 %v310, %v361
      %v363 = vpop.f32.mrb[0].mxu0
      %v364 = vpop.f32.mrb[0].mxu0
      %v365 = vadd.f32 %v310, %v364
      %v366 = vpop.f32.mrb[0].mxu0
      %367 = vdwg.mxu0
      %v368 = vld [vmem:[%s259] sm:$0xff]
      %v369 = vld [vmem:[%s259 + $0x8] sm:$0xff]
      %v370 = vadd.f32 %v368, %v362
      %v371 = vadd.f32 %v369, %v365
      %v373 = vrot.slane %v370, 7
      %vm376 = vcmask 1041408
      %v377 = vrot.slane %v370, 6
      %v378 = vrot.slane %v371, 6
      %v379 = vsel %vm376, %v377, %v378
      %vm382 = vcmask 1040384
      %v383 = vsel %vm382, %v370, %v373
      %v384 = vsel %vm376, %v383, %v377
      %v385 = vrot.slane %v371, 7
      %v386 = vsel %vm382, %v373, %v385
      %v388 = vadd.f32 %v384, %v383
      %v389 = vadd.f32 %v379, %v386
      %v390 = vadd.f32 %v388, %v370
      %v391 = vadd.f32 %v389, %v371
      %vm392 = vcmask 1046528
      %v393 = vrot.slane %v370, 1
      %v394 = vrot.slane %v371, 1
      %v395 = vsel %vm392, %v393, %v394
      %v398 = vsel %vm392, %v394, %v371
      %v399 = vadd.f32 %v390, %v395
      %v400 = vadd.f32 %v391, %v398
      %vm401 = vcmask 1045504
      %v402 = vrot.slane %v370, 2
      %v403 = vrot.slane %v371, 2
      %v404 = vsel %vm401, %v402, %v403
      %v407 = vsel %vm401, %v403, %v394
      %v408 = vsel %vm392, %v407, %v371
      %v409 = vadd.f32 %v399, %v404
      %v410 = vadd.f32 %v400, %v408
      %v411 = vmul.f32 %v409, 0.2
      %v412 = vmul.f32 %v410, 0.2
      %v413 = vsub.f32 %v370, %v411
      %v414 = vsub.f32 %v371, %v412
      %415 = vst.msk [vmem:[%s264] sm:$0xff] %vm273, %v413
      %416 = vst.msk [vmem:[%s264 + $0x8] sm:$0xff] %vm273, %v414
      %417 = vst.msk [vmem:[%s269] sm:$0xff] %vm273, %v411
      %418 = vst.msk [vmem:[%s269 + $0x8] sm:$0xff] %vm273, %v412
      %p419 = scmp.lt.s32.totalorder %s29, 1
      %s420 = scalar_select %p419, %s29, 1
      %s421 = smul.addr %s420, 2
      %s422 = smul.addr %s421, 8
      %s423 = scalar_lea.vmem %s6, %s422
      %p424 = scmp.lt.s32.totalorder %s29, 1
      %s425 = scalar_select %p424, %s29, 1
      %s426 = smul.addr %s425, 2
      %s427 = smul.addr %s426, 8
      %s428 = scalar_lea.vmem %s7, %s427
      // Predicated region
      $region37: #{_lambda_.21} parent=35 // pred_check
        %p429 = pneg %p141
      $region38: #{_lambda_.21} parent=35 // pred_check_branch
        %431 = sbr.rel (%p429) target = $region40
      $region39: #{_lambda_.21} parent=35 // pred_region
        _
      $region40: #{_lambda_.21} parent=35 // pred_fallthru
        _
      // Predicated region
      $region41: #{_lambda_.21} parent=35 // pred_check
        %p432 = pneg %p167
      $region42: #{_lambda_.21} parent=35 // pred_check_branch
        %434 = sbr.rel (%p432) target = $region44
      $region43: #{_lambda_.21} parent=35 // pred_region
        _
      $region44: #{_lambda_.21} parent=35 // pred_fallthru
        _
    $region36: #{_lambda_.21} parent=5 // pred_fallthru
      _
    %p435 = scmp.le.s32.totalorder 2, %s24
    // Predicated region
    $region45: #{_lambda_.21} parent=5 // pred_check
      %p436 = pneg %p435
    $region46: #{_lambda_.21} parent=5 // pred_check_branch
      %438 = sbr.rel (%p436) target = $region48
    $region47: #{_lambda_.21} parent=5 // pred_region
      %s439 = ssub.s32 %s24, 2
      // Predicated region
      $region49: #{_lambda_.21} parent=47 // pred_check
        %p440 = pneg %p147
      $region50: #{_lambda_.21} parent=47 // pred_check_branch
        %442 = sbr.rel (%p440) target = $region52
      $region51: #{_lambda_.21} parent=47 // pred_region
        %p443 = scmp.lt.s32.totalorder %s30, 1
        %s444 = scalar_select %p443, %s30, 1
        %s445 = smul.addr %s444, 2
        %s446 = smul.addr %s445, 8
        %s447 = scalar_lea.vmem %s6, %s446
      $region52: #{_lambda_.21} parent=47 // pred_fallthru
        _
      // Predicated region
      $region53: #{_lambda_.21} parent=47 // pred_check
        %p448 = pneg %p173
      $region54: #{_lambda_.21} parent=47 // pred_check_branch
        %450 = sbr.rel (%p448) target = $region56
      $region55: #{_lambda_.21} parent=47 // pred_region
        %p451 = scmp.lt.s32.totalorder %s30, 1
        %s452 = scalar_select %p451, %s30, 1
        %s453 = smul.addr %s452, 2
        %s454 = smul.addr %s453, 8
        %s455 = scalar_lea.vmem %s7, %s454
      $region56: #{_lambda_.21} parent=47 // pred_fallthru
        _
    $region48: #{_lambda_.21} parent=5 // pred_fallthru
      _
  $region6: #{_lambda_.21} parent=0 // loop_footer
    %s28 = sadd.s32 1, %s24
  $region7: #{_lambda_.21} parent=0 // loop_footer_branch
    %23 = sbr.rel target = $region3
  $region8: #{_lambda_.21} parent=0 // loop_exit
    _

// kernel: _lambda_.16
$region0: #{_lambda_.16}
  #allocation0 [shape = 'u32[]', space=smem, size = 0x4, offset = 0x4, fixed_abs, tag = 'smem constant byte address 0x4 - core index']
  #allocation1 [shape = 'u32[144,128]{1,0:T(1,128)}', space=vmem, size = 0x12000, scoped, tag = 'internal scratch']
  #allocation2 [shape = 'f32[32,32]{1,0:T(8,128)}', space=vmem, size = 0x4000, scoped, tag = 'scratch operand']
  #allocation3 [shape = 's32[1]{0}', space=sflag, size = 0x4, scoped, tag = 'scoped memory for _lambda_.16']
  #allocation4 [shape = 'u8[1024]{0}', space=smem, size = 0x400, scoped, tag = 'prefetched SMEM operand 0']
  #allocation5 [shape = 'u8[1024]{0}', space=smem, size = 0x400, scoped, tag = 'prefetched SMEM operand 1']
  %s0 = inlined_call_operand.vmem [shape: s32[2,2], index: 0, kind: input, shape index: {}]
  %s1 = inlined_call_operand.vmem [shape: f32[2,2], index: 1, kind: input, shape index: {}]
  %s2 = inlined_call_operand.vmem [shape: f32[2,16,32], index: 2, kind: input, shape index: {}]
  %s3 = inlined_call_operand.vmem [shape: f32[2,16,32], index: 3, kind: input, shape index: {}]
  %s4 = inlined_call_operand.vmem [shape: bf16[32,32], index: 4, kind: input, shape index: {}]
  %s5 = inlined_call_operand.vmem [shape: f32[1,32], index: 5, kind: input, shape index: {}]
  %s6 = inlined_call_operand.vmem [shape: f32[2,16,32], index: 6, kind: output, shape index: {}]
  %s7 = sld [smem:[#allocation0]]
  $region49: #{_lambda_.16} parent=0
    _
  %s9 = ssub.s32 1, %s7
  %s10 = scalar_select 0, %s9, %s7
  %s11 = sshll.u32 %s0, 4
  %s12 = int_to_ptr.vmem [resolvable:$true] %s11
  %14 = dma.vmem_to_smem %s12, 32, [#allocation4], [#allocation3]
  %s15 = sshll.u32 %s1, 4
  %s16 = int_to_ptr.vmem [resolvable:$true] %s15
  %18 = dma.vmem_to_smem %s16, 32, [#allocation5], [#allocation3]
  %19 = dma.done [#allocation3], 64
  %20 = sfence
  loop: start=0, step=1, limit=4
  $region2: #{_lambda_.16} parent=0 // loop_pre_header
    _
  $region3: #{_lambda_.16} parent=0 // loop_header
    %s22 = sphi 0, %s26
    %p23 = scmp.ge.s32.totalorder %s22, 4
    %s32 = sphi 0, %s34
    %s35 = sphi 0, %s32
    %s36 = sphi 0, %s35
    %s52 = sphi 0, %s36
    %s58 = sphi 0, %s60
    %s61 = sphi 0, %s58
    %s62 = sphi 0, %s61
    %s78 = sphi 0, %s62
    %s82 = sphi 0, %s82
    %s84 = sphi 0, %s82
    %s85 = sphi 0, %s84
    %s99 = sphi 0, %s85
    %s103 = sphi 0, %s103
    %s105 = sphi 0, %s103
    %s106 = sphi 0, %s105
    %s120 = sphi 0, %s106
    %s126 = sphi 0, %s128
    %s129 = sphi 0, %s126
    %s130 = sphi 0, %s129
    %s146 = sphi 0, %s130
  $region4: #{_lambda_.16} parent=0 // loop_header_branch
    %25 = sbr.rel (%p23) target = $region8
  $region5: #{_lambda_.16} parent=0 // loop_body
    %s27 = ssub.s32 %s22, 1
    %s28 = ssub.s32 %s22, 2
    %s29 = sadd.s32 %s22, 1
    %s30 = ssub.s32 %s22, %s29
    %p31 = scmp.eq.s32.totalorder %s30, 0
    %s33 = sadd.s32 %s32, 1
    %s34 = scalar_select %p31, %s32, %s33
    %p37 = pneg %p31
    %p38 = scmp.eq.s32.totalorder %s22, 1
    %p39 = por %p37, %p38
    %p40 = scmp.ne.s32.totalorder %s32, %s35
    %p41 = scmp.eq.s32.totalorder %s22, 0
    %p42 = por %p40, %p41
    %p43 = scmp.ne.s32.totalorder %s32, %s35
    %p44 = scmp.eq.s32.totalorder %s27, 1
    %p45 = por %p43, %p44
    %p46 = scmp.ne.s32.totalorder %s35, %s36
    %p47 = scmp.eq.s32.totalorder %s27, 0
    %p48 = por %p46, %p47
    %p49 = scmp.ne.s32.totalorder %s35, %s36
    %p50 = scmp.eq.s32.totalorder %s28, 1
    %p51 = por %p49, %p50
    %p53 = scmp.ne.s32.totalorder %s36, %s52
    %p54 = scmp.eq.s32.totalorder %s28, 0
    %p55 = por %p53, %p54
    %s56 = ssub.s32 %s22, %s29
    %p57 = scmp.eq.s32.totalorder %s56, 0
    %s59 = sadd.s32 %s58, 1
    %s60 = scalar_select %p57, %s58, %s59
    %p63 = pneg %p57
    %p64 = scmp.eq.s32.totalorder %s22, 1
    %p65 = por %p63, %p64
    %p66 = scmp.ne.s32.totalorder %s58, %s61
    %p67 = scmp.eq.s32.totalorder %s22, 0
    %p68 = por %p66, %p67
    %p69 = scmp.ne.s32.totalorder %s58, %s61
    %p70 = scmp.eq.s32.totalorder %s27, 1
    %p71 = por %p69, %p70
    %p72 = scmp.ne.s32.totalorder %s61, %s62
    %p73 = scmp.eq.s32.totalorder %s27, 0
    %p74 = por %p72, %p73
    %p75 = scmp.ne.s32.totalorder %s61, %s62
    %p76 = scmp.eq.s32.totalorder %s28, 1
    %p77 = por %p75, %p76
    %p79 = scmp.ne.s32.totalorder %s62, %s78
    %p80 = scmp.eq.s32.totalorder %s28, 0
    %p81 = por %p79, %p80
    %s83 = sadd.s32 %s82, 1
    %p86 = scmp.eq.s32.totalorder %s22, 1
    %p87 = scmp.ne.s32.totalorder %s82, %s84
    %p88 = scmp.eq.s32.totalorder %s22, 0
    %p89 = por %p87, %p88
    %p90 = scmp.ne.s32.totalorder %s82, %s84
    %p91 = scmp.eq.s32.totalorder %s27, 1
    %p92 = por %p90, %p91
    %p93 = scmp.ne.s32.totalorder %s84, %s85
    %p94 = scmp.eq.s32.totalorder %s27, 0
    %p95 = por %p93, %p94
    %p96 = scmp.ne.s32.totalorder %s84, %s85
    %p97 = scmp.eq.s32.totalorder %s28, 1
    %p98 = por %p96, %p97
    %p100 = scmp.ne.s32.totalorder %s85, %s99
    %p101 = scmp.eq.s32.totalorder %s28, 0
    %p102 = por %p100, %p101
    %s104 = sadd.s32 %s103, 1
    %p107 = scmp.eq.s32.totalorder %s22, 1
    %p108 = scmp.ne.s32.totalorder %s103, %s105
    %p109 = scmp.eq.s32.totalorder %s22, 0
    %p110 = por %p108, %p109
    %p111 = scmp.ne.s32.totalorder %s103, %s105
    %p112 = scmp.eq.s32.totalorder %s27, 1
    %p113 = por %p111, %p112
    %p114 = scmp.ne.s32.totalorder %s105, %s106
    %p115 = scmp.eq.s32.totalorder %s27, 0
    %p116 = por %p114, %p115
    %p117 = scmp.ne.s32.totalorder %s105, %s106
    %p118 = scmp.eq.s32.totalorder %s28, 1
    %p119 = por %p117, %p118
    %p121 = scmp.ne.s32.totalorder %s106, %s120
    %p122 = scmp.eq.s32.totalorder %s28, 0
    %p123 = por %p121, %p122
    %s124 = ssub.s32 %s22, %s29
    %p125 = scmp.eq.s32.totalorder %s124, 0
    %s127 = sadd.s32 %s126, 1
    %s128 = scalar_select %p125, %s126, %s127
    %p131 = pneg %p125
    %p132 = scmp.eq.s32.totalorder %s22, 1
    %p133 = por %p131, %p132
    %p134 = scmp.ne.s32.totalorder %s126, %s129
    %p135 = scmp.eq.s32.totalorder %s22, 0
    %p136 = por %p134, %p135
    %p137 = scmp.ne.s32.totalorder %s126, %s129
    %p138 = scmp.eq.s32.totalorder %s27, 1
    %p139 = por %p137, %p138
    %p140 = scmp.ne.s32.totalorder %s129, %s130
    %p141 = scmp.eq.s32.totalorder %s27, 0
    %p142 = por %p140, %p141
    %p143 = scmp.ne.s32.totalorder %s129, %s130
    %p144 = scmp.eq.s32.totalorder %s28, 1
    %p145 = por %p143, %p144
    %p147 = scmp.ne.s32.totalorder %s130, %s146
    %p148 = scmp.eq.s32.totalorder %s28, 0
    %p149 = por %p147, %p148
    %p150 = scmp.le.s32.totalorder 1, %s22
    %p151 = scmp.lt.s32.totalorder %s22, 3
    %p152 = pnand %p150, %p151
    %p153 = pneg %p152
    // Predicated region
    $region9: #{_lambda_.16} parent=5 // pred_check
      _
    $region10: #{_lambda_.16} parent=5 // pred_check_branch
      %155 = sbr.rel (%p152) target = $region12
    $region11: #{_lambda_.16} parent=5 // pred_region
      %s156 = ssub.s32 %s22, 1
      // Predicated region
      $region13: #{_lambda_.16} parent=11 // pred_check
        %p157 = pneg %p95
      $region14: #{_lambda_.16} parent=11 // pred_check_branch
        %159 = sbr.rel (%p157) target = $region16
      $region15: #{_lambda_.16} parent=11 // pred_region
        _
      $region16: #{_lambda_.16} parent=11 // pred_fallthru
        _
      // Predicated region
      $region17: #{_lambda_.16} parent=11 // pred_check
        %p160 = pneg %p116
      $region18: #{_lambda_.16} parent=11 // pred_check_branch
        %162 = sbr.rel (%p160) target = $region20
      $region19: #{_lambda_.16} parent=11 // pred_region
        _
      $region20: #{_lambda_.16} parent=11 // pred_fallthru
        _
    $region12: #{_lambda_.16} parent=5 // pred_fallthru
      _
    %p163 = scmp.lt.s32.totalorder %s22, 2
    // Predicated region
    $region21: #{_lambda_.16} parent=5 // pred_check
      %p164 = pneg %p163
    $region22: #{_lambda_.16} parent=5 // pred_check_branch
      %166 = sbr.rel (%p164) target = $region24
    $region23: #{_lambda_.16} parent=5 // pred_region
      // Predicated region
      $region25: #{_lambda_.16} parent=23 // pred_check
        %p167 = pneg %p42
      $region26: #{_lambda_.16} parent=23 // pred_check_branch
        %169 = sbr.rel (%p167) target = $region28
      $region27: #{_lambda_.16} parent=23 // pred_region
        %p170 = scmp.lt.s32.totalorder %s22, 1
        %s171 = scalar_select %p170, %s22, 1
        %s172 = smul.addr %s171, 2
        %s173 = smul.addr %s172, 8
        %s174 = scalar_lea.vmem %s2, %s173
      $region28: #{_lambda_.16} parent=23 // pred_fallthru
        _
      // Predicated region
      $region29: #{_lambda_.16} parent=23 // pred_check
        %p175 = pneg %p68
      $region30: #{_lambda_.16} parent=23 // pred_check_branch
        %177 = sbr.rel (%p175) target = $region32
      $region31: #{_lambda_.16} parent=23 // pred_region
        %p178 = scmp.lt.s32.totalorder %s22, 1
        %s179 = scalar_select %p178, %s22, 1
        %s180 = smul.addr %s179, 2
        %s181 = smul.addr %s180, 8
        %s182 = scalar_lea.vmem %s3, %s181
      $region32: #{_lambda_.16} parent=23 // pred_fallthru
        _
    $region24: #{_lambda_.16} parent=5 // pred_fallthru
      _
    %p183 = scmp.le.s32.totalorder 1, %s22
    %p184 = scmp.lt.s32.totalorder %s22, 3
    %p185 = pnand %p183, %p184
    %p186 = pneg %p185
    // Predicated region
    $region33: #{_lambda_.16} parent=5 // pred_check
      _
    $region34: #{_lambda_.16} parent=5 // pred_check_branch
      %188 = sbr.rel (%p185) target = $region36
    $region35: #{_lambda_.16} parent=5 // pred_region
      %s189 = ssub.s32 %s22, 1
      %p190 = scmp.lt.s32.totalorder %s27, 1
      %s191 = scalar_select %p190, %s27, 1
      %s192 = smul.addr %s191, 2
      %s193 = smul.addr %s192, 8
      %s194 = scalar_lea.vmem %s2, %s193
      %p195 = pneg %p48
      %p196 = pneg %p45
      %p197 = scmp.lt.s32.totalorder %s27, 1
      %s198 = scalar_select %p197, %s27, 1
      %s199 = smul.addr %s198, 2
      %s200 = smul.addr %s199, 8
      %s201 = scalar_lea.vmem %s3, %s200
      %p202 = pneg %p74
      %p203 = pneg %p71
      %p204 = pneg %p95
      %p205 = pneg %p92
      %p206 = pneg %p116
      %p207 = pneg %p113
      %p208 = pneg %p142
      %p209 = pneg %p139
      %p210 = scmp.lt.s32.totalorder %s27, 1
      %s211 = scalar_select %p210, %s27, 1
      %s212 = smul.addr %s211, 2
      %s213 = smul.addr %s212, 8
      %s214 = scalar_lea.vmem %s6, %s213
      %p215 = scmp.lt.s32.totalorder %s27, 1
      %s216 = scalar_select %p215, %s27, 1
      %s217 = smul.addr %s216, 2
      %s218 = smul.addr %s217, 8
      %s219 = scalar_lea.vmem %s2, %s218
      %p220 = scmp.lt.s32.totalorder %s27, 1
      %s221 = scalar_select %p220, %s27, 1
      %s222 = smul.addr %s221, 2
      %s223 = smul.addr %s222, 8
      %s224 = scalar_lea.vmem %s3, %s223
      %p225 = scmp.lt.s32.totalorder %s27, 1
      %s226 = scalar_select %p225, %s27, 1
      %s227 = smul.addr %s226, 2
      %s228 = smul.addr %s227, 8
      %s229 = scalar_lea.vmem %s6, %s228
      %v231 = vld [vmem:[%s219] sm:$0xff]
      %v232 = vld [vmem:[%s219 + $0x8] sm:$0xff]
      %vm233 = vcmask 261120
      %234 = vst.msk [vmem:[#allocation2] sm:$0xff] %vm233, %v231
      %235 = vst.msk [vmem:[#allocation2 + $0x8] sm:$0xff] %vm233, %v232
      %236 = vst.msk [vmem:[#allocation2 + $0x10] sm:$0xff] %vm233, %v231
      %237 = vst.msk [vmem:[#allocation2 + $0x18] sm:$0xff] %vm233, %v232
      %s238 = smul.u32 %s27, 128
      %s239 = sld [smem:[#allocation4 + %s238]]
      %s240 = scalar_lea.vmem [#allocation2], %s239
      %v241 = vld [vmem:[%s240] sm:$0xff]
      %v242 = vld [vmem:[%s240 + $0x8] sm:$0xff]
      %s243 = sld [smem:[#allocation5 + %s238]]
      %v244 = vstv %s243
      %v245 = vmul.f32 %v241, %v244
      %v246 = vmul.f32 %v242, %v244
      %v247 = vadd.f32 %v245, 0.0
      %v248 = vadd.f32 %v246, 0.0
      %s249 = sadd.s32 %s238, 1
      %s250 = sld [smem:[#allocation4 + %s249]]
      %s251 = scalar_lea.vmem [#allocation2], %s250
      %v252 = vld [vmem:[%s251] sm:$0xff]
      %v253 = vld [vmem:[%s251 + $0x8] sm:$0xff]
      %s254 = sld [smem:[#allocation5 + %s249]]
      %v255 = vstv %s254
      %v256 = vmul.f32 %v252, %v255
      %v257 = vmul.f32 %v253, %v255
      %v258 = vadd.f32 %v247, %v256
      %v259 = vadd.f32 %v248, %v257
      %v260 = vpack.c.bf16 %v259, %v258
      %v261 = vld [vmem:[%s4] sm:$0xf]
      %v262 = vld [vmem:[%s4 + $0x4] sm:$0xf]
      %v263 = vld [vmem:[%s4 + $0x8] sm:$0xf]
      %v264 = vld [vmem:[%s4 + $0xc] sm:$0xf]
      %v265 = vld [vmem:[%s5] sm:$0x1]
      %v267 = vlaneseq
      %v268 = vshrl.u32 %v267, 7
      %v269 = vsub.s32 0, %v268
      %v270 = vrot.slane %v265, %v269
      %v276 = vunpack.c.l.b16 %v261
      %v277 = vunpack.c.l.b16 %v262
      %v278 = vunpack.c.l.b16 %v263
      %v279 = vunpack.c.l.b16 %v264
      %v280 = vpack.c.b16 %v277, %v276
      %v281 = vpack.c.b16 %v279, %v278
      %v285 = vsel %vm233, %v260, 0
      %287 = vmatprep.subr.bf16.mxu0 0
      %288 = vmatpush1.bf16.msra.mxu0 %v280
      %289 = vmatprep.subr.bf16.mxu0 0
      %290 = vmatpush1.bf16.msra.mxu0 %v281
      %291 = vmatprep.subr.bf16.mxu0 0
      %292 = vmatpush1.bf16.msra.mxu0 0
      %293 = vmatprep.subr.bf16.mxu0 0
      %294 = vmatpush1.bf16.msra.mxu0 0
      %295 = vmatprep.subr.bf16.mxu0 0
      %296 = vmatpush1.bf16.msra.mxu0 0
      %297 = vmatprep.subr.bf16.mxu0 0
      %298 = vmatpush1.bf16.msra.mxu0 0
      %299 = vmatprep.subr.bf16.mxu0 0
      %300 = vmatpush1.bf16.msra.mxu0 0
      %301 = vmatprep.subr.bf16.mxu0 0
      %302 = vmatpush1.bf16.msra.mxu0 0
      %303 = vmatprep.subr.bf16.mxu0 0
      %304 = vmatpush1.bf16.msra.mxu0 0
      %305 = vmatprep.subr.bf16.mxu0 0
      %306 = vmatpush1.bf16.msra.mxu0 0
      %307 = vmatprep.subr.bf16.mxu0 0
      %308 = vmatpush1.bf16.msra.mxu0 0
      %309 = vmatprep.subr.bf16.mxu0 0
      %310 = vmatpush1.bf16.msra.mxu0 0
      %311 = vmatprep.subr.bf16.mxu0 0
      %312 = vmatpush1.bf16.msra.mxu0 0
      %313 = vmatprep.subr.bf16.mxu0 0
      %314 = vmatpush1.bf16.msra.mxu0 0
      %315 = vmatprep.subr.bf16.mxu0 0
      %316 = vmatpush1.bf16.msra.mxu0 0
      %317 = vmatprep.subr.bf16.mxu0 0
      %318 = vmatpush1.bf16.msra.mxu0 0
      %319 = vmatprep.mubr.bf16.mxu0 0
      %320 = vmatmul.mubr.bf16.gmra.mrb[0].mxu0 %v285
      %v321 = vpop.f32.mrb[0].mxu0
      %v322 = vadd.f32 %v270, %v321
      %v323 = vpop.f32.mrb[0].mxu0
      %v324 = vpop.f32.mrb[0].mxu0
      %v325 = vadd.f32 %v270, %v324
      %v326 = vpop.f32.mrb[0].mxu0
      %327 = vdwg.mxu0
      %v328 = vld [vmem:[%s224] sm:$0xff]
      %v329 = vld [vmem:[%s224 + $0x8] sm:$0xff]
      %v330 = vadd.f32 %v328, %v322
      %v331 = vadd.f32 %v329, %v325
      %v333 = vrot.slane %v330, 7
      %vm336 = vcmask 1041408
      %v337 = vrot.slane %v330, 6
      %v338 = vrot.slane %v331, 6
      %v339 = vsel %vm336, %v337, %v338
      %vm342 = vcmask 1040384
      %v343 = vsel %vm342, %v330, %v333
      %v344 = vsel %vm336, %v343, %v337
      %v345 = vrot.slane %v331, 7
      %v346 = vsel %vm342, %v333, %v345
      %v348 = vadd.f32 %v344, %v343
      %v349 = vadd.f32 %v339, %v346
      %v350 = vadd.f32 %v348, %v330
      %v351 = vadd.f32 %v349, %v331
      %vm352 = vcmask 1046528
      %v353 = vrot.slane %v330, 1
      %v354 = vrot.slane %v331, 1
      %v355 = vsel %vm352, %v353, %v354
      %v358 = vsel %vm352, %v354, %v331
      %v359 = vadd.f32 %v350, %v355
      %v360 = vadd.f32 %v351, %v358
      %vm361 = vcmask 1045504
      %v362 = vrot.slane %v330, 2
      %v363 = vrot.slane %v331, 2
      %v364 = vsel %vm361, %v362, %v363
      %v367 = vsel %vm361, %v363, %v354
      %v368 = vsel %vm352, %v367, %v331
      %v369 = vadd.f32 %v359, %v364
      %v370 = vadd.f32 %v360, %v368
      %v371 = vmul.f32 %v369, 0.2
      %v372 = vmul.f32 %v370, 0.2
      %v373 = vsub.f32 %v330, %v371
      %v374 = vsub.f32 %v331, %v372
      %375 = vst.msk [vmem:[%s229] sm:$0xff] %vm233, %v373
      %376 = vst.msk [vmem:[%s229 + $0x8] sm:$0xff] %vm233, %v374
      %p377 = scmp.lt.s32.totalorder %s27, 1
      %s378 = scalar_select %p377, %s27, 1
      %s379 = smul.addr %s378, 2
      %s380 = smul.addr %s379, 8
      %s381 = scalar_lea.vmem %s6, %s380
      // Predicated region
      $region37: #{_lambda_.16} parent=35 // pred_check
        %p382 = pneg %p139
      $region38: #{_lambda_.16} parent=35 // pred_check_branch
        %384 = sbr.rel (%p382) target = $region40
      $region39: #{_lambda_.16} parent=35 // pred_region
        _
      $region40: #{_lambda_.16} parent=35 // pred_fallthru
        _
    $region36: #{_lambda_.16} parent=5 // pred_fallthru
      _
    %p385 = scmp.le.s32.totalorder 2, %s22
    // Predicated region
    $region41: #{_lambda_.16} parent=5 // pred_check
      %p386 = pneg %p385
    $region42: #{_lambda_.16} parent=5 // pred_check_branch
      %388 = sbr.rel (%p386) target = $region44
    $region43: #{_lambda_.16} parent=5 // pred_region
      %s389 = ssub.s32 %s22, 2
      // Predicated region
      $region45: #{_lambda_.16} parent=43 // pred_check
        %p390 = pneg %p145
      $region46: #{_lambda_.16} parent=43 // pred_check_branch
        %392 = sbr.rel (%p390) target = $region48
      $region47: #{_lambda_.16} parent=43 // pred_region
        %p393 = scmp.lt.s32.totalorder %s28, 1
        %s394 = scalar_select %p393, %s28, 1
        %s395 = smul.addr %s394, 2
        %s396 = smul.addr %s395, 8
        %s397 = scalar_lea.vmem %s6, %s396
      $region48: #{_lambda_.16} parent=43 // pred_fallthru
        _
    $region44: #{_lambda_.16} parent=5 // pred_fallthru
      _
  $region6: #{_lambda_.16} parent=0 // loop_footer
    %s26 = sadd.s32 1, %s22
  $region7: #{_lambda_.16} parent=0 // loop_footer_branch
    %21 = sbr.rel target = $region3
  $region8: #{_lambda_.16} parent=0 // loop_exit
    _

// kernel: _lambda_.18
$region0: #{_lambda_.18}
  #allocation0 [shape = 'u32[]', space=smem, size = 0x4, offset = 0x4, fixed_abs, tag = 'smem constant byte address 0x4 - core index']
  #allocation1 [shape = 'u32[144,128]{1,0:T(1,128)}', space=vmem, size = 0x12000, scoped, tag = 'internal scratch']
  %s0 = inlined_call_operand.vmem [shape: f32[2,16,32], index: 0, kind: input, shape index: {}]
  %s1 = inlined_call_operand.vmem [shape: f32[1,32], index: 1, kind: input, shape index: {}]
  %s2 = inlined_call_operand.vmem [shape: f32[1,32], index: 2, kind: input, shape index: {}]
  %s3 = inlined_call_operand.vmem [shape: f32[2,16,32], index: 3, kind: output, shape index: {}]
  %s4 = sld [smem:[#allocation0]]
  $region45: #{_lambda_.18} parent=0
    _
  %s6 = ssub.s32 1, %s4
  %s7 = scalar_select 0, %s6, %s4
  loop: start=0, step=1, limit=4
  $region2: #{_lambda_.18} parent=0 // loop_pre_header
    _
  $region3: #{_lambda_.18} parent=0 // loop_header
    %s9 = sphi 0, %s13
    %p10 = scmp.ge.s32.totalorder %s9, 4
    %s19 = sphi 0, %s21
    %s22 = sphi 0, %s19
    %s23 = sphi 0, %s22
    %s39 = sphi 0, %s23
    %s43 = sphi 0, %s43
    %s45 = sphi 0, %s43
    %s46 = sphi 0, %s45
    %s60 = sphi 0, %s46
    %s64 = sphi 0, %s64
    %s66 = sphi 0, %s64
    %s67 = sphi 0, %s66
    %s81 = sphi 0, %s67
    %s87 = sphi 0, %s89
    %s90 = sphi 0, %s87
    %s91 = sphi 0, %s90
    %s107 = sphi 0, %s91
  $region4: #{_lambda_.18} parent=0 // loop_header_branch
    %12 = sbr.rel (%p10) target = $region8
  $region5: #{_lambda_.18} parent=0 // loop_body
    %s14 = ssub.s32 %s9, 1
    %s15 = ssub.s32 %s9, 2
    %s16 = sadd.s32 %s9, 1
    %s17 = ssub.s32 %s9, %s16
    %p18 = scmp.eq.s32.totalorder %s17, 0
    %s20 = sadd.s32 %s19, 1
    %s21 = scalar_select %p18, %s19, %s20
    %p24 = pneg %p18
    %p25 = scmp.eq.s32.totalorder %s9, 1
    %p26 = por %p24, %p25
    %p27 = scmp.ne.s32.totalorder %s19, %s22
    %p28 = scmp.eq.s32.totalorder %s9, 0
    %p29 = por %p27, %p28
    %p30 = scmp.ne.s32.totalorder %s19, %s22
    %p31 = scmp.eq.s32.totalorder %s14, 1
    %p32 = por %p30, %p31
    %p33 = scmp.ne.s32.totalorder %s22, %s23
    %p34 = scmp.eq.s32.totalorder %s14, 0
    %p35 = por %p33, %p34
    %p36 = scmp.ne.s32.totalorder %s22, %s23
    %p37 = scmp.eq.s32.totalorder %s15, 1
    %p38 = por %p36, %p37
    %p40 = scmp.ne.s32.totalorder %s23, %s39
    %p41 = scmp.eq.s32.totalorder %s15, 0
    %p42 = por %p40, %p41
    %s44 = sadd.s32 %s43, 1
    %p47 = scmp.eq.s32.totalorder %s9, 1
    %p48 = scmp.ne.s32.totalorder %s43, %s45
    %p49 = scmp.eq.s32.totalorder %s9, 0
    %p50 = por %p48, %p49
    %p51 = scmp.ne.s32.totalorder %s43, %s45
    %p52 = scmp.eq.s32.totalorder %s14, 1
    %p53 = por %p51, %p52
    %p54 = scmp.ne.s32.totalorder %s45, %s46
    %p55 = scmp.eq.s32.totalorder %s14, 0
    %p56 = por %p54, %p55
    %p57 = scmp.ne.s32.totalorder %s45, %s46
    %p58 = scmp.eq.s32.totalorder %s15, 1
    %p59 = por %p57, %p58
    %p61 = scmp.ne.s32.totalorder %s46, %s60
    %p62 = scmp.eq.s32.totalorder %s15, 0
    %p63 = por %p61, %p62
    %s65 = sadd.s32 %s64, 1
    %p68 = scmp.eq.s32.totalorder %s9, 1
    %p69 = scmp.ne.s32.totalorder %s64, %s66
    %p70 = scmp.eq.s32.totalorder %s9, 0
    %p71 = por %p69, %p70
    %p72 = scmp.ne.s32.totalorder %s64, %s66
    %p73 = scmp.eq.s32.totalorder %s14, 1
    %p74 = por %p72, %p73
    %p75 = scmp.ne.s32.totalorder %s66, %s67
    %p76 = scmp.eq.s32.totalorder %s14, 0
    %p77 = por %p75, %p76
    %p78 = scmp.ne.s32.totalorder %s66, %s67
    %p79 = scmp.eq.s32.totalorder %s15, 1
    %p80 = por %p78, %p79
    %p82 = scmp.ne.s32.totalorder %s67, %s81
    %p83 = scmp.eq.s32.totalorder %s15, 0
    %p84 = por %p82, %p83
    %s85 = ssub.s32 %s9, %s16
    %p86 = scmp.eq.s32.totalorder %s85, 0
    %s88 = sadd.s32 %s87, 1
    %s89 = scalar_select %p86, %s87, %s88
    %p92 = pneg %p86
    %p93 = scmp.eq.s32.totalorder %s9, 1
    %p94 = por %p92, %p93
    %p95 = scmp.ne.s32.totalorder %s87, %s90
    %p96 = scmp.eq.s32.totalorder %s9, 0
    %p97 = por %p95, %p96
    %p98 = scmp.ne.s32.totalorder %s87, %s90
    %p99 = scmp.eq.s32.totalorder %s14, 1
    %p100 = por %p98, %p99
    %p101 = scmp.ne.s32.totalorder %s90, %s91
    %p102 = scmp.eq.s32.totalorder %s14, 0
    %p103 = por %p101, %p102
    %p104 = scmp.ne.s32.totalorder %s90, %s91
    %p105 = scmp.eq.s32.totalorder %s15, 1
    %p106 = por %p104, %p105
    %p108 = scmp.ne.s32.totalorder %s91, %s107
    %p109 = scmp.eq.s32.totalorder %s15, 0
    %p110 = por %p108, %p109
    %p111 = scmp.le.s32.totalorder 1, %s9
    %p112 = scmp.lt.s32.totalorder %s9, 3
    %p113 = pnand %p111, %p112
    %p114 = pneg %p113
    // Predicated region
    $region9: #{_lambda_.18} parent=5 // pred_check
      _
    $region10: #{_lambda_.18} parent=5 // pred_check_branch
      %116 = sbr.rel (%p113) target = $region12
    $region11: #{_lambda_.18} parent=5 // pred_region
      %s117 = ssub.s32 %s9, 1
      // Predicated region
      $region13: #{_lambda_.18} parent=11 // pred_check
        %p118 = pneg %p56
      $region14: #{_lambda_.18} parent=11 // pred_check_branch
        %120 = sbr.rel (%p118) target = $region16
      $region15: #{_lambda_.18} parent=11 // pred_region
        _
      $region16: #{_lambda_.18} parent=11 // pred_fallthru
        _
      // Predicated region
      $region17: #{_lambda_.18} parent=11 // pred_check
        %p121 = pneg %p77
      $region18: #{_lambda_.18} parent=11 // pred_check_branch
        %123 = sbr.rel (%p121) target = $region20
      $region19: #{_lambda_.18} parent=11 // pred_region
        _
      $region20: #{_lambda_.18} parent=11 // pred_fallthru
        _
    $region12: #{_lambda_.18} parent=5 // pred_fallthru
      _
    %p124 = scmp.lt.s32.totalorder %s9, 2
    // Predicated region
    $region21: #{_lambda_.18} parent=5 // pred_check
      %p125 = pneg %p124
    $region22: #{_lambda_.18} parent=5 // pred_check_branch
      %127 = sbr.rel (%p125) target = $region24
    $region23: #{_lambda_.18} parent=5 // pred_region
      // Predicated region
      $region25: #{_lambda_.18} parent=23 // pred_check
        %p128 = pneg %p29
      $region26: #{_lambda_.18} parent=23 // pred_check_branch
        %130 = sbr.rel (%p128) target = $region28
      $region27: #{_lambda_.18} parent=23 // pred_region
        %p131 = scmp.lt.s32.totalorder %s9, 1
        %s132 = scalar_select %p131, %s9, 1
        %s133 = smul.addr %s132, 2
        %s134 = smul.addr %s133, 8
        %s135 = scalar_lea.vmem %s0, %s134
      $region28: #{_lambda_.18} parent=23 // pred_fallthru
        _
    $region24: #{_lambda_.18} parent=5 // pred_fallthru
      _
    %p136 = scmp.le.s32.totalorder 1, %s9
    %p137 = scmp.lt.s32.totalorder %s9, 3
    %p138 = pnand %p136, %p137
    %p139 = pneg %p138
    // Predicated region
    $region29: #{_lambda_.18} parent=5 // pred_check
      _
    $region30: #{_lambda_.18} parent=5 // pred_check_branch
      %141 = sbr.rel (%p138) target = $region32
    $region31: #{_lambda_.18} parent=5 // pred_region
      %s142 = ssub.s32 %s9, 1
      %p143 = scmp.lt.s32.totalorder %s14, 1
      %s144 = scalar_select %p143, %s14, 1
      %s145 = smul.addr %s144, 2
      %s146 = smul.addr %s145, 8
      %s147 = scalar_lea.vmem %s0, %s146
      %p148 = pneg %p35
      %p149 = pneg %p32
      %p150 = pneg %p56
      %p151 = pneg %p53
      %p152 = pneg %p77
      %p153 = pneg %p74
      %p154 = pneg %p103
      %p155 = pneg %p100
      %p156 = scmp.lt.s32.totalorder %s14, 1
      %s157 = scalar_select %p156, %s14, 1
      %s158 = smul.addr %s157, 2
      %s159 = smul.addr %s158, 8
      %s160 = scalar_lea.vmem %s3, %s159
      %p161 = scmp.lt.s32.totalorder %s14, 1
      %s162 = scalar_select %p161, %s14, 1
      %s163 = smul.addr %s162, 2
      %s164 = smul.addr %s163, 8
      %s165 = scalar_lea.vmem %s0, %s164
      %p166 = scmp.lt.s32.totalorder %s14, 1
      %s167 = scalar_select %p166, %s14, 1
      %s168 = smul.addr %s167, 2
      %s169 = smul.addr %s168, 8
      %s170 = scalar_lea.vmem %s3, %s169
      %v171 = vld [vmem:[%s165] sm:$0xff]
      %v172 = vld [vmem:[%s165 + $0x8] sm:$0xff]
      %vm173 = vcmask 261120
      %v174 = vsel %vm173, %v171, 0.0
      %175 = vadd.xlane.f32.xlu0 %v174
      %v176 = vpop.xlane.xlu0 %175
      %v177 = vsel %vm173, %v172, 0.0
      %178 = vadd.xlane.f32.xlu0 %v177
      %v179 = vpop.xlane.xlu0 %178
      %v180 = vrcp.pop 32.0
      %v181 = vmul.f32 %v176, %v180
      %v182 = vmul.f32 %v179, %v180
      %v183 = vsub.f32 %v171, %v181
      %v184 = vsub.f32 %v172, %v182
      %v185 = vmul.f32 %v183, %v183
      %v186 = vmul.f32 %v184, %v184
      %v187 = vsel %vm173, %v185, 0.0
      %188 = vadd.xlane.f32.xlu0 %v187
      %v189 = vpop.xlane.xlu0 %188
      %v190 = vsel %vm173, %v186, 0.0
      %191 = vadd.xlane.f32.xlu0 %v190
      %v192 = vpop.xlane.xlu0 %191
      %v193 = vmul.f32 %v189, %v180
      %v194 = vmul.f32 %v192, %v180
      %v195 = vadd.f32 %v193, 1e-05
      %v196 = vadd.f32 %v194, 1e-05
      %v197 = vrsqrt.pop %v195
      %v198 = vrsqrt.pop %v196
      %v199 = vmul.f32 %v183, %v197
      %v200 = vmul.f32 %v184, %v198
      %v201 = vld [vmem:[%s1] sm:$0x1]
      %v203 = vlaneseq
      %v204 = vshrl.u32 %v203, 7
      %v205 = vsub.s32 0, %v204
      %v206 = vrot.slane %v201, %v205
      %v208 = vmul.f32 %v199, %v206
      %v209 = vmul.f32 %v200, %v206
      %v210 = vld [vmem:[%s2] sm:$0x1]
      %v212 = vlaneseq
      %v213 = vshrl.u32 %v212, 7
      %v214 = vsub.s32 0, %v213
      %v215 = vrot.slane %v210, %v214
      %v217 = vadd.f32 %v208, %v215
      %v218 = vadd.f32 %v209, %v215
      %v219 = vsel %vm173, %v217, 0.0
      %v220 = vsel %vm173, %v218, 0.0
      %v221 = vadd.f32 %v219, %v220
      %v222 = vrot.slane %v221, 4
      %v223 = vadd.f32 %v221, %v222
      %v224 = vrot.slane %v223, 2
      %v225 = vadd.f32 %v223, %v224
      %v226 = vrot.slane %v225, 1
      %v227 = vadd.f32 %v225, %v226
      %v228 = vrcp.pop 16.0
      %v229 = vmul.f32 %v227, %v228
      %v230 = vsub.f32 %v217, %v229
      %v231 = vsub.f32 %v218, %v229
      %232 = vst.msk [vmem:[%s170] sm:$0xff] %vm173, %v230
      %233 = vst.msk [vmem:[%s170 + $0x8] sm:$0xff] %vm173, %v231
      %p234 = scmp.lt.s32.totalorder %s14, 1
      %s235 = scalar_select %p234, %s14, 1
      %s236 = smul.addr %s235, 2
      %s237 = smul.addr %s236, 8
      %s238 = scalar_lea.vmem %s3, %s237
      // Predicated region
      $region33: #{_lambda_.18} parent=31 // pred_check
        %p239 = pneg %p100
      $region34: #{_lambda_.18} parent=31 // pred_check_branch
        %241 = sbr.rel (%p239) target = $region36
      $region35: #{_lambda_.18} parent=31 // pred_region
        _
      $region36: #{_lambda_.18} parent=31 // pred_fallthru
        _
    $region32: #{_lambda_.18} parent=5 // pred_fallthru
      _
    %p242 = scmp.le.s32.totalorder 2, %s9
    // Predicated region
    $region37: #{_lambda_.18} parent=5 // pred_check
      %p243 = pneg %p242
    $region38: #{_lambda_.18} parent=5 // pred_check_branch
      %245 = sbr.rel (%p243) target = $region40
    $region39: #{_lambda_.18} parent=5 // pred_region
      %s246 = ssub.s32 %s9, 2
      // Predicated region
      $region41: #{_lambda_.18} parent=39 // pred_check
        %p247 = pneg %p106
      $region42: #{_lambda_.18} parent=39 // pred_check_branch
        %249 = sbr.rel (%p247) target = $region44
      $region43: #{_lambda_.18} parent=39 // pred_region
        %p250 = scmp.lt.s32.totalorder %s15, 1
        %s251 = scalar_select %p250, %s15, 1
        %s252 = smul.addr %s251, 2
        %s253 = smul.addr %s252, 8
        %s254 = scalar_lea.vmem %s3, %s253
      $region44: #{_lambda_.18} parent=39 // pred_fallthru
        _
    $region40: #{_lambda_.18} parent=5 // pred_fallthru
      _
  $region6: #{_lambda_.18} parent=0 // loop_footer
    %s13 = sadd.s32 1, %s9
  $region7: #{_lambda_.18} parent=0 // loop_footer_branch
    %8 = sbr.rel target = $region3
  $region8: #{_lambda_.18} parent=0 // loop_exit
    _

// kernel: _lambda_.17
$region0: #{_lambda_.17}
  #allocation0 [shape = 'u32[]', space=smem, size = 0x4, offset = 0x4, fixed_abs, tag = 'smem constant byte address 0x4 - core index']
  #allocation1 [shape = 'u32[144,128]{1,0:T(1,128)}', space=vmem, size = 0x12000, scoped, tag = 'internal scratch']
  %s0 = inlined_call_operand.vmem [shape: f32[2,16,32], index: 0, kind: input, shape index: {}]
  %s1 = inlined_call_operand.vmem [shape: bf16[32,64], index: 1, kind: input, shape index: {}]
  %s2 = inlined_call_operand.vmem [shape: bf16[64,32], index: 2, kind: input, shape index: {}]
  %s3 = inlined_call_operand.vmem [shape: f32[2,16,32], index: 3, kind: output, shape index: {}]
  %s4 = sld [smem:[#allocation0]]
  $region45: #{_lambda_.17} parent=0
    _
  %s6 = ssub.s32 1, %s4
  %s7 = scalar_select 0, %s6, %s4
  loop: start=0, step=1, limit=4
  $region2: #{_lambda_.17} parent=0 // loop_pre_header
    _
  $region3: #{_lambda_.17} parent=0 // loop_header
    %s9 = sphi 0, %s13
    %p10 = scmp.ge.s32.totalorder %s9, 4
    %s19 = sphi 0, %s21
    %s22 = sphi 0, %s19
    %s23 = sphi 0, %s22
    %s39 = sphi 0, %s23
    %s43 = sphi 0, %s43
    %s45 = sphi 0, %s43
    %s46 = sphi 0, %s45
    %s60 = sphi 0, %s46
    %s64 = sphi 0, %s64
    %s66 = sphi 0, %s64
    %s67 = sphi 0, %s66
    %s81 = sphi 0, %s67
    %s87 = sphi 0, %s89
    %s90 = sphi 0, %s87
    %s91 = sphi 0, %s90
    %s107 = sphi 0, %s91
  $region4: #{_lambda_.17} parent=0 // loop_header_branch
    %12 = sbr.rel (%p10) target = $region8
  $region5: #{_lambda_.17} parent=0 // loop_body
    %s14 = ssub.s32 %s9, 1
    %s15 = ssub.s32 %s9, 2
    %s16 = sadd.s32 %s9, 1
    %s17 = ssub.s32 %s9, %s16
    %p18 = scmp.eq.s32.totalorder %s17, 0
    %s20 = sadd.s32 %s19, 1
    %s21 = scalar_select %p18, %s19, %s20
    %p24 = pneg %p18
    %p25 = scmp.eq.s32.totalorder %s9, 1
    %p26 = por %p24, %p25
    %p27 = scmp.ne.s32.totalorder %s19, %s22
    %p28 = scmp.eq.s32.totalorder %s9, 0
    %p29 = por %p27, %p28
    %p30 = scmp.ne.s32.totalorder %s19, %s22
    %p31 = scmp.eq.s32.totalorder %s14, 1
    %p32 = por %p30, %p31
    %p33 = scmp.ne.s32.totalorder %s22, %s23
    %p34 = scmp.eq.s32.totalorder %s14, 0
    %p35 = por %p33, %p34
    %p36 = scmp.ne.s32.totalorder %s22, %s23
    %p37 = scmp.eq.s32.totalorder %s15, 1
    %p38 = por %p36, %p37
    %p40 = scmp.ne.s32.totalorder %s23, %s39
    %p41 = scmp.eq.s32.totalorder %s15, 0
    %p42 = por %p40, %p41
    %s44 = sadd.s32 %s43, 1
    %p47 = scmp.eq.s32.totalorder %s9, 1
    %p48 = scmp.ne.s32.totalorder %s43, %s45
    %p49 = scmp.eq.s32.totalorder %s9, 0
    %p50 = por %p48, %p49
    %p51 = scmp.ne.s32.totalorder %s43, %s45
    %p52 = scmp.eq.s32.totalorder %s14, 1
    %p53 = por %p51, %p52
    %p54 = scmp.ne.s32.totalorder %s45, %s46
    %p55 = scmp.eq.s32.totalorder %s14, 0
    %p56 = por %p54, %p55
    %p57 = scmp.ne.s32.totalorder %s45, %s46
    %p58 = scmp.eq.s32.totalorder %s15, 1
    %p59 = por %p57, %p58
    %p61 = scmp.ne.s32.totalorder %s46, %s60
    %p62 = scmp.eq.s32.totalorder %s15, 0
    %p63 = por %p61, %p62
    %s65 = sadd.s32 %s64, 1
    %p68 = scmp.eq.s32.totalorder %s9, 1
    %p69 = scmp.ne.s32.totalorder %s64, %s66
    %p70 = scmp.eq.s32.totalorder %s9, 0
    %p71 = por %p69, %p70
    %p72 = scmp.ne.s32.totalorder %s64, %s66
    %p73 = scmp.eq.s32.totalorder %s14, 1
    %p74 = por %p72, %p73
    %p75 = scmp.ne.s32.totalorder %s66, %s67
    %p76 = scmp.eq.s32.totalorder %s14, 0
    %p77 = por %p75, %p76
    %p78 = scmp.ne.s32.totalorder %s66, %s67
    %p79 = scmp.eq.s32.totalorder %s15, 1
    %p80 = por %p78, %p79
    %p82 = scmp.ne.s32.totalorder %s67, %s81
    %p83 = scmp.eq.s32.totalorder %s15, 0
    %p84 = por %p82, %p83
    %s85 = ssub.s32 %s9, %s16
    %p86 = scmp.eq.s32.totalorder %s85, 0
    %s88 = sadd.s32 %s87, 1
    %s89 = scalar_select %p86, %s87, %s88
    %p92 = pneg %p86
    %p93 = scmp.eq.s32.totalorder %s9, 1
    %p94 = por %p92, %p93
    %p95 = scmp.ne.s32.totalorder %s87, %s90
    %p96 = scmp.eq.s32.totalorder %s9, 0
    %p97 = por %p95, %p96
    %p98 = scmp.ne.s32.totalorder %s87, %s90
    %p99 = scmp.eq.s32.totalorder %s14, 1
    %p100 = por %p98, %p99
    %p101 = scmp.ne.s32.totalorder %s90, %s91
    %p102 = scmp.eq.s32.totalorder %s14, 0
    %p103 = por %p101, %p102
    %p104 = scmp.ne.s32.totalorder %s90, %s91
    %p105 = scmp.eq.s32.totalorder %s15, 1
    %p106 = por %p104, %p105
    %p108 = scmp.ne.s32.totalorder %s91, %s107
    %p109 = scmp.eq.s32.totalorder %s15, 0
    %p110 = por %p108, %p109
    %p111 = scmp.le.s32.totalorder 1, %s9
    %p112 = scmp.lt.s32.totalorder %s9, 3
    %p113 = pnand %p111, %p112
    %p114 = pneg %p113
    // Predicated region
    $region9: #{_lambda_.17} parent=5 // pred_check
      _
    $region10: #{_lambda_.17} parent=5 // pred_check_branch
      %116 = sbr.rel (%p113) target = $region12
    $region11: #{_lambda_.17} parent=5 // pred_region
      %s117 = ssub.s32 %s9, 1
      // Predicated region
      $region13: #{_lambda_.17} parent=11 // pred_check
        %p118 = pneg %p56
      $region14: #{_lambda_.17} parent=11 // pred_check_branch
        %120 = sbr.rel (%p118) target = $region16
      $region15: #{_lambda_.17} parent=11 // pred_region
        _
      $region16: #{_lambda_.17} parent=11 // pred_fallthru
        _
      // Predicated region
      $region17: #{_lambda_.17} parent=11 // pred_check
        %p121 = pneg %p77
      $region18: #{_lambda_.17} parent=11 // pred_check_branch
        %123 = sbr.rel (%p121) target = $region20
      $region19: #{_lambda_.17} parent=11 // pred_region
        _
      $region20: #{_lambda_.17} parent=11 // pred_fallthru
        _
    $region12: #{_lambda_.17} parent=5 // pred_fallthru
      _
    %p124 = scmp.lt.s32.totalorder %s9, 2
    // Predicated region
    $region21: #{_lambda_.17} parent=5 // pred_check
      %p125 = pneg %p124
    $region22: #{_lambda_.17} parent=5 // pred_check_branch
      %127 = sbr.rel (%p125) target = $region24
    $region23: #{_lambda_.17} parent=5 // pred_region
      // Predicated region
      $region25: #{_lambda_.17} parent=23 // pred_check
        %p128 = pneg %p29
      $region26: #{_lambda_.17} parent=23 // pred_check_branch
        %130 = sbr.rel (%p128) target = $region28
      $region27: #{_lambda_.17} parent=23 // pred_region
        %p131 = scmp.lt.s32.totalorder %s9, 1
        %s132 = scalar_select %p131, %s9, 1
        %s133 = smul.addr %s132, 2
        %s134 = smul.addr %s133, 8
        %s135 = scalar_lea.vmem %s0, %s134
      $region28: #{_lambda_.17} parent=23 // pred_fallthru
        _
    $region24: #{_lambda_.17} parent=5 // pred_fallthru
      _
    %p136 = scmp.le.s32.totalorder 1, %s9
    %p137 = scmp.lt.s32.totalorder %s9, 3
    %p138 = pnand %p136, %p137
    %p139 = pneg %p138
    // Predicated region
    $region29: #{_lambda_.17} parent=5 // pred_check
      _
    $region30: #{_lambda_.17} parent=5 // pred_check_branch
      %141 = sbr.rel (%p138) target = $region32
    $region31: #{_lambda_.17} parent=5 // pred_region
      %s142 = ssub.s32 %s9, 1
      %p143 = scmp.lt.s32.totalorder %s14, 1
      %s144 = scalar_select %p143, %s14, 1
      %s145 = smul.addr %s144, 2
      %s146 = smul.addr %s145, 8
      %s147 = scalar_lea.vmem %s0, %s146
      %p148 = pneg %p35
      %p149 = pneg %p32
      %p150 = pneg %p56
      %p151 = pneg %p53
      %p152 = pneg %p77
      %p153 = pneg %p74
      %p154 = pneg %p103
      %p155 = pneg %p100
      %p156 = scmp.lt.s32.totalorder %s14, 1
      %s157 = scalar_select %p156, %s14, 1
      %s158 = smul.addr %s157, 2
      %s159 = smul.addr %s158, 8
      %s160 = scalar_lea.vmem %s3, %s159
      %p161 = scmp.lt.s32.totalorder %s14, 1
      %s162 = scalar_select %p161, %s14, 1
      %s163 = smul.addr %s162, 2
      %s164 = smul.addr %s163, 8
      %s165 = scalar_lea.vmem %s0, %s164
      %p166 = scmp.lt.s32.totalorder %s14, 1
      %s167 = scalar_select %p166, %s14, 1
      %s168 = smul.addr %s167, 2
      %s169 = smul.addr %s168, 8
      %s170 = scalar_lea.vmem %s3, %s169
      %v172 = vld [vmem:[%s165] sm:$0xff]
      %v173 = vld [vmem:[%s165 + $0x8] sm:$0xff]
      %v174 = vpack.c.bf16 %v173, %v172
      %v175 = vld [vmem:[%s1] sm:$0xf]
      %v176 = vld [vmem:[%s1 + $0x4] sm:$0xf]
      %v177 = vld [vmem:[%s1 + $0x8] sm:$0xf]
      %v178 = vld [vmem:[%s1 + $0xc] sm:$0xf]
      %v183 = vunpack.c.l.b16 %v175
      %v184 = vunpack.c.l.b16 %v176
      %v185 = vunpack.c.l.b16 %v177
      %v186 = vunpack.c.l.b16 %v178
      %v187 = vpack.c.b16 %v184, %v183
      %v188 = vpack.c.b16 %v186, %v185
      %vm191 = vcmask 261120
      %v193 = vsel %vm191, %v174, 0
      %195 = vmatprep.subr.bf16.mxu0 0
      %196 = vmatpush1.bf16.msra.mxu0 %v187
      %197 = vmatprep.subr.bf16.mxu0 0
      %198 = vmatpush1.bf16.msra.mxu0 %v188
      %199 = vmatprep.subr.bf16.mxu0 0
      %200 = vmatpush1.bf16.msra.mxu0 0
      %201 = vmatprep.subr.bf16.mxu0 0
      %202 = vmatpush1.bf16.msra.mxu0 0
      %203 = vmatprep.subr.bf16.mxu0 0
      %204 = vmatpush1.bf16.msra.mxu0 0
      %205 = vmatprep.subr.bf16.mxu0 0
      %206 = vmatpush1.bf16.msra.mxu0 0
      %207 = vmatprep.subr.bf16.mxu0 0
      %208 = vmatpush1.bf16.msra.mxu0 0
      %209 = vmatprep.subr.bf16.mxu0 0
      %210 = vmatpush1.bf16.msra.mxu0 0
      %211 = vmatprep.subr.bf16.mxu0 0
      %212 = vmatpush1.bf16.msra.mxu0 0
      %213 = vmatprep.subr.bf16.mxu0 0
      %214 = vmatpush1.bf16.msra.mxu0 0
      %215 = vmatprep.subr.bf16.mxu0 0
      %216 = vmatpush1.bf16.msra.mxu0 0
      %217 = vmatprep.subr.bf16.mxu0 0
      %218 = vmatpush1.bf16.msra.mxu0 0
      %219 = vmatprep.subr.bf16.mxu0 0
      %220 = vmatpush1.bf16.msra.mxu0 0
      %221 = vmatprep.subr.bf16.mxu0 0
      %222 = vmatpush1.bf16.msra.mxu0 0
      %223 = vmatprep.subr.bf16.mxu0 0
      %224 = vmatpush1.bf16.msra.mxu0 0
      %225 = vmatprep.subr.bf16.mxu0 0
      %226 = vmatpush1.bf16.msra.mxu0 0
      %227 = vmatprep.mubr.bf16.mxu0 0
      %228 = vmatmul.mubr.bf16.gmra.mrb[0].mxu0 %v193
      %v229 = vpop.f32.mrb[0].mxu0
      %v230 = vadd.f32 0.0, %v229
      %v231 = vpop.f32.mrb[0].mxu0
      %v232 = vpop.f32.mrb[0].mxu0
      %v233 = vadd.f32 0.0, %v232
      %v234 = vpop.f32.mrb[0].mxu0
      %235 = vdwg.mxu0
      %v236 = vmax.f32 %v230, 0.0
      %v237 = vmax.f32 %v233, 0.0
      %v238 = vpack.c.bf16 %v237, %v236
      %v239 = vld [vmem:[%s2] sm:$0xf]
      %v240 = vld [vmem:[%s2 + $0x4] sm:$0xf]
      %v241 = vld [vmem:[%s2 + $0x8] sm:$0xf]
      %v242 = vld [vmem:[%s2 + $0xc] sm:$0xf]
      %v243 = vld [vmem:[%s2 + $0x10] sm:$0xf]
      %v244 = vld [vmem:[%s2 + $0x14] sm:$0xf]
      %v245 = vld [vmem:[%s2 + $0x18] sm:$0xf]
      %v246 = vld [vmem:[%s2 + $0x1c] sm:$0xf]
      %v255 = vunpack.c.l.b16 %v239
      %v256 = vunpack.c.l.b16 %v240
      %v257 = vunpack.c.l.b16 %v241
      %v258 = vunpack.c.l.b16 %v242
      %v259 = vunpack.c.l.b16 %v243
      %v260 = vunpack.c.l.b16 %v244
      %v261 = vunpack.c.l.b16 %v245
      %v262 = vunpack.c.l.b16 %v246
      %v263 = vpack.c.b16 %v256, %v255
      %v264 = vpack.c.b16 %v258, %v257
      %v265 = vpack.c.b16 %v260, %v259
      %v266 = vpack.c.b16 %v262, %v261
      %vm271 = vcmask 523264
      %v273 = vsel %vm271, %v238, 0
      %275 = vmatprep.subr.bf16.mxu0 0
      %276 = vmatpush1.bf16.msra.mxu0 %v263
      %277 = vmatprep.subr.bf16.mxu0 0
      %278 = vmatpush1.bf16.msra.mxu0 %v264
      %279 = vmatprep.subr.bf16.mxu0 0
      %280 = vmatpush1.bf16.msra.mxu0 %v265
      %281 = vmatprep.subr.bf16.mxu0 0
      %282 = vmatpush1.bf16.msra.mxu0 %v266
      %283 = vmatprep.subr.bf16.mxu0 0
      %284 = vmatpush1.bf16.msra.mxu0 0
      %285 = vmatprep.subr.bf16.mxu0 0
      %286 = vmatpush1.bf16.msra.mxu0 0
      %287 = vmatprep.subr.bf16.mxu0 0
      %288 = vmatpush1.bf16.msra.mxu0 0
      %289 = vmatprep.subr.bf16.mxu0 0
      %290 = vmatpush1.bf16.msra.mxu0 0
      %291 = vmatprep.subr.bf16.mxu0 0
      %292 = vmatpush1.bf16.msra.mxu0 0
      %293 = vmatprep.subr.bf16.mxu0 0
      %294 = vmatpush1.bf16.msra.mxu0 0
      %295 = vmatprep.subr.bf16.mxu0 0
      %296 = vmatpush1.bf16.msra.mxu0 0
      %297 = vmatprep.subr.bf16.mxu0 0
      %298 = vmatpush1.bf16.msra.mxu0 0
      %299 = vmatprep.subr.bf16.mxu0 0
      %300 = vmatpush1.bf16.msra.mxu0 0
      %301 = vmatprep.subr.bf16.mxu0 0
      %302 = vmatpush1.bf16.msra.mxu0 0
      %303 = vmatprep.subr.bf16.mxu0 0
      %304 = vmatpush1.bf16.msra.mxu0 0
      %305 = vmatprep.subr.bf16.mxu0 0
      %306 = vmatpush1.bf16.msra.mxu0 0
      %307 = vmatprep.mubr.bf16.mxu0 0
      %308 = vmatmul.mubr.bf16.gmra.mrb[0].mxu0 %v273
      %v309 = vpop.f32.mrb[0].mxu0
      %v310 = vadd.f32 0.0, %v309
      %v311 = vpop.f32.mrb[0].mxu0
      %v312 = vpop.f32.mrb[0].mxu0
      %v313 = vadd.f32 0.0, %v312
      %v314 = vpop.f32.mrb[0].mxu0
      %315 = vdwg.mxu0
      %v316 = vadd.f32 %v172, %v310
      %v317 = vadd.f32 %v173, %v313
      %v319 = vrot.slane %v316, 7
      %vm322 = vcmask 1041408
      %v323 = vrot.slane %v316, 6
      %v324 = vrot.slane %v317, 6
      %v325 = vsel %vm322, %v323, %v324
      %vm328 = vcmask 1040384
      %v329 = vsel %vm328, %v316, %v319
      %v330 = vsel %vm322, %v329, %v323
      %v331 = vrot.slane %v317, 7
      %v332 = vsel %vm328, %v319, %v331
      %v334 = vadd.f32 %v330, %v329
      %v335 = vadd.f32 %v325, %v332
      %v336 = vadd.f32 %v334, %v316
      %v337 = vadd.f32 %v335, %v317
      %vm338 = vcmask 1046528
      %v339 = vrot.slane %v316, 1
      %v340 = vrot.slane %v317, 1
      %v341 = vsel %vm338, %v339, %v340
      %v344 = vsel %vm338, %v340, %v317
      %v345 = vadd.f32 %v336, %v341
      %v346 = vadd.f32 %v337, %v344
      %vm347 = vcmask 1045504
      %v348 = vrot.slane %v316, 2
      %v349 = vrot.slane %v317, 2
      %v350 = vsel %vm347, %v348, %v349
      %v353 = vsel %vm347, %v349, %v340
      %v354 = vsel %vm338, %v353, %v317
      %v355 = vadd.f32 %v345, %v350
      %v356 = vadd.f32 %v346, %v354
      %v357 = vmul.f32 %v355, 0.2
      %v358 = vmul.f32 %v356, 0.2
      %v359 = vsub.f32 %v316, %v357
      %v360 = vsub.f32 %v317, %v358
      %361 = vst.msk [vmem:[%s170] sm:$0xff] %vm191, %v359
      %362 = vst.msk [vmem:[%s170 + $0x8] sm:$0xff] %vm191, %v360
      %p363 = scmp.lt.s32.totalorder %s14, 1
      %s364 = scalar_select %p363, %s14, 1
      %s365 = smul.addr %s364, 2
      %s366 = smul.addr %s365, 8
      %s367 = scalar_lea.vmem %s3, %s366
      // Predicated region
      $region33: #{_lambda_.17} parent=31 // pred_check
        %p368 = pneg %p100
      $region34: #{_lambda_.17} parent=31 // pred_check_branch
        %370 = sbr.rel (%p368) target = $region36
      $region35: #{_lambda_.17} parent=31 // pred_region
        _
      $region36: #{_lambda_.17} parent=31 // pred_fallthru
        _
    $region32: #{_lambda_.17} parent=5 // pred_fallthru
      _
    %p371 = scmp.le.s32.totalorder 2, %s9
    // Predicated region
    $region37: #{_lambda_.17} parent=5 // pred_check
      %p372 = pneg %p371
    $region38: #{_lambda_.17} parent=5 // pred_check_branch
      %374 = sbr.rel (%p372) target = $region40
    $region39: #{_lambda_.17} parent=5 // pred_region
      %s375 = ssub.s32 %s9, 2
      // Predicated region
      $region41: #{_lambda_.17} parent=39 // pred_check
        %p376 = pneg %p106
      $region42: #{_lambda_.17} parent=39 // pred_check_branch
        %378 = sbr.rel (%p376) target = $region44
      $region43: #{_lambda_.17} parent=39 // pred_region
        %p379 = scmp.lt.s32.totalorder %s15, 1
        %s380 = scalar_select %p379, %s15, 1
        %s381 = smul.addr %s380, 2
        %s382 = smul.addr %s381, 8
        %s383 = scalar_lea.vmem %s3, %s382
      $region44: #{_lambda_.17} parent=39 // pred_fallthru
        _
    $region40: #{_lambda_.17} parent=5 // pred_fallthru
      _
  $region6: #{_lambda_.17} parent=0 // loop_footer
    %s13 = sadd.s32 1, %s9
  $region7: #{_lambda_.17} parent=0 // loop_footer_branch
    %8 = sbr.rel target = $region3
  $region8: #{_lambda_.17} parent=0 // loop_exit
    _

// kernel: _lambda_.23
$region0: #{_lambda_.23}
  #allocation0 [shape = 'u32[]', space=smem, size = 0x4, offset = 0x4, fixed_abs, tag = 'smem constant byte address 0x4 - core index']
  #allocation1 [shape = 'u32[144,128]{1,0:T(1,128)}', space=vmem, size = 0x12000, scoped, tag = 'internal scratch']
  #allocation2 [shape = 'f32[32,32]{1,0:T(8,128)}', space=vmem, size = 0x4000, scoped, tag = 'scratch operand']
  #allocation3 [shape = 's32[1]{0}', space=sflag, size = 0x4, scoped, tag = 'scoped memory for _lambda_.23']
  #allocation4 [shape = 'u8[1024]{0}', space=smem, size = 0x400, scoped, tag = 'prefetched SMEM operand 0']
  #allocation5 [shape = 'u8[1024]{0}', space=smem, size = 0x400, scoped, tag = 'prefetched SMEM operand 1']
  %s0 = inlined_call_operand.vmem [shape: s32[2,2], index: 0, kind: input, shape index: {}]
  %s1 = inlined_call_operand.vmem [shape: f32[2,2], index: 1, kind: input, shape index: {}]
  %s2 = inlined_call_operand.vmem [shape: f32[2,16,32], index: 2, kind: input, shape index: {}]
  %s3 = inlined_call_operand.vmem [shape: f32[2,16,32], index: 3, kind: input, shape index: {}]
  %s4 = inlined_call_operand.vmem [shape: bf16[32,32], index: 4, kind: input, shape index: {}]
  %s5 = inlined_call_operand.vmem [shape: f32[1,32], index: 5, kind: input, shape index: {}]
  %s6 = inlined_call_operand.vmem [shape: f32[2,16,32], index: 6, kind: input, shape index: {}]
  %s7 = inlined_call_operand.vmem [shape: f32[2,16,32], index: 7, kind: output, shape index: {0}]
  %s8 = inlined_call_operand.vmem [shape: f32[2,16,32], index: 8, kind: output, shape index: {1}]
  %9 = xla_tuple %s7, %s8
  %s10 = sld [smem:[#allocation0]]
  $region61: #{_lambda_.23} parent=0
    _
  %s12 = ssub.s32 1, %s10
  %s13 = scalar_select 0, %s12, %s10
  %s14 = sshll.u32 %s0, 4
  %s15 = int_to_ptr.vmem [resolvable:$true] %s14
  %17 = dma.vmem_to_smem %s15, 32, [#allocation4], [#allocation3]
  %s18 = sshll.u32 %s1, 4
  %s19 = int_to_ptr.vmem [resolvable:$true] %s18
  %21 = dma.vmem_to_smem %s19, 32, [#allocation5], [#allocation3]
  %22 = dma.done [#allocation3], 64
  %23 = sfence
  loop: start=0, step=1, limit=4
  $region2: #{_lambda_.23} parent=0 // loop_pre_header
    _
  $region3: #{_lambda_.23} parent=0 // loop_header
    %s25 = sphi 0, %s29
    %p26 = scmp.ge.s32.totalorder %s25, 4
    %s35 = sphi 0, %s37
    %s38 = sphi 0, %s35
    %s39 = sphi 0, %s38
    %s55 = sphi 0, %s39
    %s61 = sphi 0, %s63
    %s64 = sphi 0, %s61
    %s65 = sphi 0, %s64
    %s81 = sphi 0, %s65
    %s85 = sphi 0, %s85
    %s87 = sphi 0, %s85
    %s88 = sphi 0, %s87
    %s102 = sphi 0, %s88
    %s106 = sphi 0, %s106
    %s108 = sphi 0, %s106
    %s109 = sphi 0, %s108
    %s123 = sphi 0, %s109
    %s129 = sphi 0, %s131
    %s132 = sphi 0, %s129
    %s133 = sphi 0, %s132
    %s149 = sphi 0, %s133
    %s155 = sphi 0, %s157
    %s158 = sphi 0, %s155
    %s159 = sphi 0, %s158
    %s175 = sphi 0, %s159
    %s181 = sphi 0, %s183
    %s184 = sphi 0, %s181
    %s185 = sphi 0, %s184
    %s201 = sphi 0, %s185
  $region4: #{_lambda_.23} parent=0 // loop_header_branch
    %28 = sbr.rel (%p26) target = $region8
  $region5: #{_lambda_.23} parent=0 // loop_body
    %s30 = ssub.s32 %s25, 1
    %s31 = ssub.s32 %s25, 2
    %s32 = sadd.s32 %s25, 1
    %s33 = ssub.s32 %s25, %s32
    %p34 = scmp.eq.s32.totalorder %s33, 0
    %s36 = sadd.s32 %s35, 1
    %s37 = scalar_select %p34, %s35, %s36
    %p40 = pneg %p34
    %p41 = scmp.eq.s32.totalorder %s25, 1
    %p42 = por %p40, %p41
    %p43 = scmp.ne.s32.totalorder %s35, %s38
    %p44 = scmp.eq.s32.totalorder %s25, 0
    %p45 = por %p43, %p44
    %p46 = scmp.ne.s32.totalorder %s35, %s38
    %p47 = scmp.eq.s32.totalorder %s30, 1
    %p48 = por %p46, %p47
    %p49 = scmp.ne.s32.totalorder %s38, %s39
    %p50 = scmp.eq.s32.totalorder %s30, 0
    %p51 = por %p49, %p50
    %p52 = scmp.ne.s32.totalorder %s38, %s39
    %p53 = scmp.eq.s32.totalorder %s31, 1
    %p54 = por %p52, %p53
    %p56 = scmp.ne.s32.totalorder %s39, %s55
    %p57 = scmp.eq.s32.totalorder %s31, 0
    %p58 = por %p56, %p57
    %s59 = ssub.s32 %s25, %s32
    %p60 = scmp.eq.s32.totalorder %s59, 0
    %s62 = sadd.s32 %s61, 1
    %s63 = scalar_select %p60, %s61, %s62
    %p66 = pneg %p60
    %p67 = scmp.eq.s32.totalorder %s25, 1
    %p68 = por %p66, %p67
    %p69 = scmp.ne.s32.totalorder %s61, %s64
    %p70 = scmp.eq.s32.totalorder %s25, 0
    %p71 = por %p69, %p70
    %p72 = scmp.ne.s32.totalorder %s61, %s64
    %p73 = scmp.eq.s32.totalorder %s30, 1
    %p74 = por %p72, %p73
    %p75 = scmp.ne.s32.totalorder %s64, %s65
    %p76 = scmp.eq.s32.totalorder %s30, 0
    %p77 = por %p75, %p76
    %p78 = scmp.ne.s32.totalorder %s64, %s65
    %p79 = scmp.eq.s32.totalorder %s31, 1
    %p80 = por %p78, %p79
    %p82 = scmp.ne.s32.totalorder %s65, %s81
    %p83 = scmp.eq.s32.totalorder %s31, 0
    %p84 = por %p82, %p83
    %s86 = sadd.s32 %s85, 1
    %p89 = scmp.eq.s32.totalorder %s25, 1
    %p90 = scmp.ne.s32.totalorder %s85, %s87
    %p91 = scmp.eq.s32.totalorder %s25, 0
    %p92 = por %p90, %p91
    %p93 = scmp.ne.s32.totalorder %s85, %s87
    %p94 = scmp.eq.s32.totalorder %s30, 1
    %p95 = por %p93, %p94
    %p96 = scmp.ne.s32.totalorder %s87, %s88
    %p97 = scmp.eq.s32.totalorder %s30, 0
    %p98 = por %p96, %p97
    %p99 = scmp.ne.s32.totalorder %s87, %s88
    %p100 = scmp.eq.s32.totalorder %s31, 1
    %p101 = por %p99, %p100
    %p103 = scmp.ne.s32.totalorder %s88, %s102
    %p104 = scmp.eq.s32.totalorder %s31, 0
    %p105 = por %p103, %p104
    %s107 = sadd.s32 %s106, 1
    %p110 = scmp.eq.s32.totalorder %s25, 1
    %p111 = scmp.ne.s32.totalorder %s106, %s108
    %p112 = scmp.eq.s32.totalorder %s25, 0
    %p113 = por %p111, %p112
    %p114 = scmp.ne.s32.totalorder %s106, %s108
    %p115 = scmp.eq.s32.totalorder %s30, 1
    %p116 = por %p114, %p115
    %p117 = scmp.ne.s32.totalorder %s108, %s109
    %p118 = scmp.eq.s32.totalorder %s30, 0
    %p119 = por %p117, %p118
    %p120 = scmp.ne.s32.totalorder %s108, %s109
    %p121 = scmp.eq.s32.totalorder %s31, 1
    %p122 = por %p120, %p121
    %p124 = scmp.ne.s32.totalorder %s109, %s123
    %p125 = scmp.eq.s32.totalorder %s31, 0
    %p126 = por %p124, %p125
    %s127 = ssub.s32 %s25, %s32
    %p128 = scmp.eq.s32.totalorder %s127, 0
    %s130 = sadd.s32 %s129, 1
    %s131 = scalar_select %p128, %s129, %s130
    %p134 = pneg %p128
    %p135 = scmp.eq.s32.totalorder %s25, 1
    %p136 = por %p134, %p135
    %p137 = scmp.ne.s32.totalorder %s129, %s132
    %p138 = scmp.eq.s32.totalorder %s25, 0
    %p139 = por %p137, %p138
    %p140 = scmp.ne.s32.totalorder %s129, %s132
    %p141 = scmp.eq.s32.totalorder %s30, 1
    %p142 = por %p140, %p141
    %p143 = scmp.ne.s32.totalorder %s132, %s133
    %p144 = scmp.eq.s32.totalorder %s30, 0
    %p145 = por %p143, %p144
    %p146 = scmp.ne.s32.totalorder %s132, %s133
    %p147 = scmp.eq.s32.totalorder %s31, 1
    %p148 = por %p146, %p147
    %p150 = scmp.ne.s32.totalorder %s133, %s149
    %p151 = scmp.eq.s32.totalorder %s31, 0
    %p152 = por %p150, %p151
    %s153 = ssub.s32 %s25, %s32
    %p154 = scmp.eq.s32.totalorder %s153, 0
    %s156 = sadd.s32 %s155, 1
    %s157 = scalar_select %p154, %s155, %s156
    %p160 = pneg %p154
    %p161 = scmp.eq.s32.totalorder %s25, 1
    %p162 = por %p160, %p161
    %p163 = scmp.ne.s32.totalorder %s155, %s158
    %p164 = scmp.eq.s32.totalorder %s25, 0
    %p165 = por %p163, %p164
    %p166 = scmp.ne.s32.totalorder %s155, %s158
    %p167 = scmp.eq.s32.totalorder %s30, 1
    %p168 = por %p166, %p167
    %p169 = scmp.ne.s32.totalorder %s158, %s159
    %p170 = scmp.eq.s32.totalorder %s30, 0
    %p171 = por %p169, %p170
    %p172 = scmp.ne.s32.totalorder %s158, %s159
    %p173 = scmp.eq.s32.totalorder %s31, 1
    %p174 = por %p172, %p173
    %p176 = scmp.ne.s32.totalorder %s159, %s175
    %p177 = scmp.eq.s32.totalorder %s31, 0
    %p178 = por %p176, %p177
    %s179 = ssub.s32 %s25, %s32
    %p180 = scmp.eq.s32.totalorder %s179, 0
    %s182 = sadd.s32 %s181, 1
    %s183 = scalar_select %p180, %s181, %s182
    %p186 = pneg %p180
    %p187 = scmp.eq.s32.totalorder %s25, 1
    %p188 = por %p186, %p187
    %p189 = scmp.ne.s32.totalorder %s181, %s184
    %p190 = scmp.eq.s32.totalorder %s25, 0
    %p191 = por %p189, %p190
    %p192 = scmp.ne.s32.totalorder %s181, %s184
    %p193 = scmp.eq.s32.totalorder %s30, 1
    %p194 = por %p192, %p193
    %p195 = scmp.ne.s32.totalorder %s184, %s185
    %p196 = scmp.eq.s32.totalorder %s30, 0
    %p197 = por %p195, %p196
    %p198 = scmp.ne.s32.totalorder %s184, %s185
    %p199 = scmp.eq.s32.totalorder %s31, 1
    %p200 = por %p198, %p199
    %p202 = scmp.ne.s32.totalorder %s185, %s201
    %p203 = scmp.eq.s32.totalorder %s31, 0
    %p204 = por %p202, %p203
    %p205 = scmp.le.s32.totalorder 1, %s25
    %p206 = scmp.lt.s32.totalorder %s25, 3
    %p207 = pnand %p205, %p206
    %p208 = pneg %p207
    // Predicated region
    $region9: #{_lambda_.23} parent=5 // pred_check
      _
    $region10: #{_lambda_.23} parent=5 // pred_check_branch
      %210 = sbr.rel (%p207) target = $region12
    $region11: #{_lambda_.23} parent=5 // pred_region
      %s211 = ssub.s32 %s25, 1
      // Predicated region
      $region13: #{_lambda_.23} parent=11 // pred_check
        %p212 = pneg %p98
      $region14: #{_lambda_.23} parent=11 // pred_check_branch
        %214 = sbr.rel (%p212) target = $region16
      $region15: #{_lambda_.23} parent=11 // pred_region
        _
      $region16: #{_lambda_.23} parent=11 // pred_fallthru
        _
      // Predicated region
      $region17: #{_lambda_.23} parent=11 // pred_check
        %p215 = pneg %p119
      $region18: #{_lambda_.23} parent=11 // pred_check_branch
        %217 = sbr.rel (%p215) target = $region20
      $region19: #{_lambda_.23} parent=11 // pred_region
        _
      $region20: #{_lambda_.23} parent=11 // pred_fallthru
        _
    $region12: #{_lambda_.23} parent=5 // pred_fallthru
      _
    %p218 = scmp.lt.s32.totalorder %s25, 2
    // Predicated region
    $region21: #{_lambda_.23} parent=5 // pred_check
      %p219 = pneg %p218
    $region22: #{_lambda_.23} parent=5 // pred_check_branch
      %221 = sbr.rel (%p219) target = $region24
    $region23: #{_lambda_.23} parent=5 // pred_region
      // Predicated region
      $region25: #{_lambda_.23} parent=23 // pred_check
        %p222 = pneg %p45
      $region26: #{_lambda_.23} parent=23 // pred_check_branch
        %224 = sbr.rel (%p222) target = $region28
      $region27: #{_lambda_.23} parent=23 // pred_region
        %p225 = scmp.lt.s32.totalorder %s25, 1
        %s226 = scalar_select %p225, %s25, 1
        %s227 = smul.addr %s226, 2
        %s228 = smul.addr %s227, 8
        %s229 = scalar_lea.vmem %s2, %s228
      $region28: #{_lambda_.23} parent=23 // pred_fallthru
        _
      // Predicated region
      $region29: #{_lambda_.23} parent=23 // pred_check
        %p230 = pneg %p71
      $region30: #{_lambda_.23} parent=23 // pred_check_branch
        %232 = sbr.rel (%p230) target = $region32
      $region31: #{_lambda_.23} parent=23 // pred_region
        %p233 = scmp.lt.s32.totalorder %s25, 1
        %s234 = scalar_select %p233, %s25, 1
        %s235 = smul.addr %s234, 2
        %s236 = smul.addr %s235, 8
        %s237 = scalar_lea.vmem %s3, %s236
      $region32: #{_lambda_.23} parent=23 // pred_fallthru
        _
      // Predicated region
      $region33: #{_lambda_.23} parent=23 // pred_check
        %p238 = pneg %p139
      $region34: #{_lambda_.23} parent=23 // pred_check_branch
        %240 = sbr.rel (%p238) target = $region36
      $region35: #{_lambda_.23} parent=23 // pred_region
        %p241 = scmp.lt.s32.totalorder %s25, 1
        %s242 = scalar_select %p241, %s25, 1
        %s243 = smul.addr %s242, 2
        %s244 = smul.addr %s243, 8
        %s245 = scalar_lea.vmem %s6, %s244
      $region36: #{_lambda_.23} parent=23 // pred_fallthru
        _
    $region24: #{_lambda_.23} parent=5 // pred_fallthru
      _
    %p246 = scmp.le.s32.totalorder 1, %s25
    %p247 = scmp.lt.s32.totalorder %s25, 3
    %p248 = pnand %p246, %p247
    %p249 = pneg %p248
    // Predicated region
    $region37: #{_lambda_.23} parent=5 // pred_check
      _
    $region38: #{_lambda_.23} parent=5 // pred_check_branch
      %251 = sbr.rel (%p248) target = $region40
    $region39: #{_lambda_.23} parent=5 // pred_region
      %s252 = ssub.s32 %s25, 1
      %p253 = scmp.lt.s32.totalorder %s30, 1
      %s254 = scalar_select %p253, %s30, 1
      %s255 = smul.addr %s254, 2
      %s256 = smul.addr %s255, 8
      %s257 = scalar_lea.vmem %s2, %s256
      %p258 = pneg %p51
      %p259 = pneg %p48
      %p260 = scmp.lt.s32.totalorder %s30, 1
      %s261 = scalar_select %p260, %s30, 1
      %s262 = smul.addr %s261, 2
      %s263 = smul.addr %s262, 8
      %s264 = scalar_lea.vmem %s3, %s263
      %p265 = pneg %p77
      %p266 = pneg %p74
      %p267 = pneg %p98
      %p268 = pneg %p95
      %p269 = pneg %p119
      %p270 = pneg %p116
      %p271 = scmp.lt.s32.totalorder %s30, 1
      %s272 = scalar_select %p271, %s30, 1
      %s273 = smul.addr %s272, 2
      %s274 = smul.addr %s273, 8
      %s275 = scalar_lea.vmem %s6, %s274
      %p276 = pneg %p145
      %p277 = pneg %p142
      %p278 = pneg %p171
      %p279 = pneg %p168
      %p280 = scmp.lt.s32.totalorder %s30, 1
      %s281 = scalar_select %p280, %s30, 1
      %s282 = smul.addr %s281, 2
      %s283 = smul.addr %s282, 8
      %s284 = scalar_lea.vmem %s7, %s283
      %p285 = pneg %p197
      %p286 = pneg %p194
      %p287 = scmp.lt.s32.totalorder %s30, 1
      %s288 = scalar_select %p287, %s30, 1
      %s289 = smul.addr %s288, 2
      %s290 = smul.addr %s289, 8
      %s291 = scalar_lea.vmem %s8, %s290
      %p292 = scmp.lt.s32.totalorder %s30, 1
      %s293 = scalar_select %p292, %s30, 1
      %s294 = smul.addr %s293, 2
      %s295 = smul.addr %s294, 8
      %s296 = scalar_lea.vmem %s2, %s295
      %p297 = scmp.lt.s32.totalorder %s30, 1
      %s298 = scalar_select %p297, %s30, 1
      %s299 = smul.addr %s298, 2
      %s300 = smul.addr %s299, 8
      %s301 = scalar_lea.vmem %s3, %s300
      %p302 = scmp.lt.s32.totalorder %s30, 1
      %s303 = scalar_select %p302, %s30, 1
      %s304 = smul.addr %s303, 2
      %s305 = smul.addr %s304, 8
      %s306 = scalar_lea.vmem %s6, %s305
      %p307 = scmp.lt.s32.totalorder %s30, 1
      %s308 = scalar_select %p307, %s30, 1
      %s309 = smul.addr %s308, 2
      %s310 = smul.addr %s309, 8
      %s311 = scalar_lea.vmem %s7, %s310
      %p312 = scmp.lt.s32.totalorder %s30, 1
      %s313 = scalar_select %p312, %s30, 1
      %s314 = smul.addr %s313, 2
      %s315 = smul.addr %s314, 8
      %s316 = scalar_lea.vmem %s8, %s315
      %v318 = vld [vmem:[%s306] sm:$0xff]
      %v319 = vld [vmem:[%s306 + $0x8] sm:$0xff]
      %v320 = vld [vmem:[%s296] sm:$0xff]
      %v321 = vld [vmem:[%s296 + $0x8] sm:$0xff]
      %vm322 = vcmask 261120
      %323 = vst.msk [vmem:[#allocation2] sm:$0xff] %vm322, %v320
      %324 = vst.msk [vmem:[#allocation2 + $0x8] sm:$0xff] %vm322, %v321
      %325 = vst.msk [vmem:[#allocation2 + $0x10] sm:$0xff] %vm322, %v320
      %326 = vst.msk [vmem:[#allocation2 + $0x18] sm:$0xff] %vm322, %v321
      %s327 = smul.u32 %s30, 128
      %s328 = sld [smem:[#allocation4 + %s327]]
      %s329 = scalar_lea.vmem [#allocation2], %s328
      %v330 = vld [vmem:[%s329] sm:$0xff]
      %v331 = vld [vmem:[%s329 + $0x8] sm:$0xff]
      %s332 = sld [smem:[#allocation5 + %s327]]
      %v333 = vstv %s332
      %v334 = vmul.f32 %v330, %v333
      %v335 = vmul.f32 %v331, %v333
      %v336 = vadd.f32 %v334, 0.0
      %v337 = vadd.f32 %v335, 0.0
      %s338 = sadd.s32 %s327, 1
      %s339 = sld [smem:[#allocation4 + %s338]]
      %s340 = scalar_lea.vmem [#allocation2], %s339
      %v341 = vld [vmem:[%s340] sm:$0xff]
      %v342 = vld [vmem:[%s340 + $0x8] sm:$0xff]
      %s343 = sld [smem:[#allocation5 + %s338]]
      %v344 = vstv %s343
      %v345 = vmul.f32 %v341, %v344
      %v346 = vmul.f32 %v342, %v344
      %v347 = vadd.f32 %v336, %v345
      %v348 = vadd.f32 %v337, %v346
      %v349 = vpack.c.bf16 %v348, %v347
      %v350 = vld [vmem:[%s4] sm:$0xf]
      %v351 = vld [vmem:[%s4 + $0x4] sm:$0xf]
      %v352 = vld [vmem:[%s4 + $0x8] sm:$0xf]
      %v353 = vld [vmem:[%s4 + $0xc] sm:$0xf]
      %v354 = vld [vmem:[%s5] sm:$0x1]
      %v356 = vlaneseq
      %v357 = vshrl.u32 %v356, 7
      %v358 = vsub.s32 0, %v357
      %v359 = vrot.slane %v354, %v358
      %v365 = vunpack.c.l.b16 %v350
      %v366 = vunpack.c.l.b16 %v351
      %v367 = vunpack.c.l.b16 %v352
      %v368 = vunpack.c.l.b16 %v353
      %v369 = vpack.c.b16 %v366, %v365
      %v370 = vpack.c.b16 %v368, %v367
      %v374 = vsel %vm322, %v349, 0
      %376 = vmatprep.subr.bf16.mxu0 0
      %377 = vmatpush1.bf16.msra.mxu0 %v369
      %378 = vmatprep.subr.bf16.mxu0 0
      %379 = vmatpush1.bf16.msra.mxu0 %v370
      %380 = vmatprep.subr.bf16.mxu0 0
      %381 = vmatpush1.bf16.msra.mxu0 0
      %382 = vmatprep.subr.bf16.mxu0 0
      %383 = vmatpush1.bf16.msra.mxu0 0
      %384 = vmatprep.subr.bf16.mxu0 0
      %385 = vmatpush1.bf16.msra.mxu0 0
      %386 = vmatprep.subr.bf16.mxu0 0
      %387 = vmatpush1.bf16.msra.mxu0 0
      %388 = vmatprep.subr.bf16.mxu0 0
      %389 = vmatpush1.bf16.msra.mxu0 0
      %390 = vmatprep.subr.bf16.mxu0 0
      %391 = vmatpush1.bf16.msra.mxu0 0
      %392 = vmatprep.subr.bf16.mxu0 0
      %393 = vmatpush1.bf16.msra.mxu0 0
      %394 = vmatprep.subr.bf16.mxu0 0
      %395 = vmatpush1.bf16.msra.mxu0 0
      %396 = vmatprep.subr.bf16.mxu0 0
      %397 = vmatpush1.bf16.msra.mxu0 0
      %398 = vmatprep.subr.bf16.mxu0 0
      %399 = vmatpush1.bf16.msra.mxu0 0
      %400 = vmatprep.subr.bf16.mxu0 0
      %401 = vmatpush1.bf16.msra.mxu0 0
      %402 = vmatprep.subr.bf16.mxu0 0
      %403 = vmatpush1.bf16.msra.mxu0 0
      %404 = vmatprep.subr.bf16.mxu0 0
      %405 = vmatpush1.bf16.msra.mxu0 0
      %406 = vmatprep.subr.bf16.mxu0 0
      %407 = vmatpush1.bf16.msra.mxu0 0
      %408 = vmatprep.mubr.bf16.mxu0 0
      %409 = vmatmul.mubr.bf16.gmra.mrb[0].mxu0 %v374
      %v410 = vpop.f32.mrb[0].mxu0
      %v411 = vadd.f32 %v359, %v410
      %v412 = vpop.f32.mrb[0].mxu0
      %v413 = vpop.f32.mrb[0].mxu0
      %v414 = vadd.f32 %v359, %v413
      %v415 = vpop.f32.mrb[0].mxu0
      %416 = vdwg.mxu0
      %v417 = vld [vmem:[%s301] sm:$0xff]
      %v418 = vld [vmem:[%s301 + $0x8] sm:$0xff]
      %v419 = vadd.f32 %v417, %v411
      %v420 = vadd.f32 %v418, %v414
      %v422 = vrot.slane %v419, 7
      %vm425 = vcmask 1041408
      %v426 = vrot.slane %v419, 6
      %v427 = vrot.slane %v420, 6
      %v428 = vsel %vm425, %v426, %v427
      %vm431 = vcmask 1040384
      %v432 = vsel %vm431, %v419, %v422
      %v433 = vsel %vm425, %v432, %v426
      %v434 = vrot.slane %v420, 7
      %v435 = vsel %vm431, %v422, %v434
      %v437 = vadd.f32 %v433, %v432
      %v438 = vadd.f32 %v428, %v435
      %v439 = vadd.f32 %v437, %v419
      %v440 = vadd.f32 %v438, %v420
      %vm441 = vcmask 1046528
      %v442 = vrot.slane %v419, 1
      %v443 = vrot.slane %v420, 1
      %v444 = vsel %vm441, %v442, %v443
      %v447 = vsel %vm441, %v443, %v420
      %v448 = vadd.f32 %v439, %v444
      %v449 = vadd.f32 %v440, %v447
      %vm450 = vcmask 1045504
      %v451 = vrot.slane %v419, 2
      %v452 = vrot.slane %v420, 2
      %v453 = vsel %vm450, %v451, %v452
      %v456 = vsel %vm450, %v452, %v443
      %v457 = vsel %vm441, %v456, %v420
      %v458 = vadd.f32 %v448, %v453
      %v459 = vadd.f32 %v449, %v457
      %v460 = vmul.f32 %v458, 0.2
      %v461 = vmul.f32 %v459, 0.2
      %v462 = vsub.f32 %v419, %v460
      %v463 = vsub.f32 %v420, %v461
      %464 = vst.msk [vmem:[%s311] sm:$0xff] %vm322, %v462
      %465 = vst.msk [vmem:[%s311 + $0x8] sm:$0xff] %vm322, %v463
      %v466 = vadd.f32 %v460, %v318
      %v467 = vadd.f32 %v461, %v319
      %468 = vst.msk [vmem:[%s316] sm:$0xff] %vm322, %v466
      %469 = vst.msk [vmem:[%s316 + $0x8] sm:$0xff] %vm322, %v467
      %p470 = scmp.lt.s32.totalorder %s30, 1
      %s471 = scalar_select %p470, %s30, 1
      %s472 = smul.addr %s471, 2
      %s473 = smul.addr %s472, 8
      %s474 = scalar_lea.vmem %s7, %s473
      %p475 = scmp.lt.s32.totalorder %s30, 1
      %s476 = scalar_select %p475, %s30, 1
      %s477 = smul.addr %s476, 2
      %s478 = smul.addr %s477, 8
      %s479 = scalar_lea.vmem %s8, %s478
      // Predicated region
      $region41: #{_lambda_.23} parent=39 // pred_check
        %p480 = pneg %p168
      $region42: #{_lambda_.23} parent=39 // pred_check_branch
        %482 = sbr.rel (%p480) target = $region44
      $region43: #{_lambda_.23} parent=39 // pred_region
        _
      $region44: #{_lambda_.23} parent=39 // pred_fallthru
        _
      // Predicated region
      $region45: #{_lambda_.23} parent=39 // pred_check
        %p483 = pneg %p194
      $region46: #{_lambda_.23} parent=39 // pred_check_branch
        %485 = sbr.rel (%p483) target = $region48
      $region47: #{_lambda_.23} parent=39 // pred_region
        _
      $region48: #{_lambda_.23} parent=39 // pred_fallthru
        _
    $region40: #{_lambda_.23} parent=5 // pred_fallthru
      _
    %p486 = scmp.le.s32.totalorder 2, %s25
    // Predicated region
    $region49: #{_lambda_.23} parent=5 // pred_check
      %p487 = pneg %p486
    $region50: #{_lambda_.23} parent=5 // pred_check_branch
      %489 = sbr.rel (%p487) target = $region52
    $region51: #{_lambda_.23} parent=5 // pred_region
      %s490 = ssub.s32 %s25, 2
      // Predicated region
      $region53: #{_lambda_.23} parent=51 // pred_check
        %p491 = pneg %p174
      $region54: #{_lambda_.23} parent=51 // pred_check_branch
        %493 = sbr.rel (%p491) target = $region56
      $region55: #{_lambda_.23} parent=51 // pred_region
        %p494 = scmp.lt.s32.totalorder %s31, 1
        %s495 = scalar_select %p494, %s31, 1
        %s496 = smul.addr %s495, 2
        %s497 = smul.addr %s496, 8
        %s498 = scalar_lea.vmem %s7, %s497
      $region56: #{_lambda_.23} parent=51 // pred_fallthru
        _
      // Predicated region
      $region57: #{_lambda_.23} parent=51 // pred_check
        %p499 = pneg %p200
      $region58: #{_lambda_.23} parent=51 // pred_check_branch
        %501 = sbr.rel (%p499) target = $region60
      $region59: #{_lambda_.23} parent=51 // pred_region
        %p502 = scmp.lt.s32.totalorder %s31, 1
        %s503 = scalar_select %p502, %s31, 1
        %s504 = smul.addr %s503, 2
        %s505 = smul.addr %s504, 8
        %s506 = scalar_lea.vmem %s8, %s505
      $region60: #{_lambda_.23} parent=51 // pred_fallthru
        _
    $region52: #{_lambda_.23} parent=5 // pred_fallthru
      _
  $region6: #{_lambda_.23} parent=0 // loop_footer
    %s29 = sadd.s32 1, %s25
  $region7: #{_lambda_.23} parent=0 // loop_footer_branch
    %24 = sbr.rel target = $region3
  $region8: #{_lambda_.23} parent=0 // loop_exit
    _

// kernel: _lambda_.22
$region0: #{_lambda_.22}
  #allocation0 [shape = 'u32[]', space=smem, size = 0x4, offset = 0x4, fixed_abs, tag = 'smem constant byte address 0x4 - core index']
  #allocation1 [shape = 'u32[144,128]{1,0:T(1,128)}', space=vmem, size = 0x12000, scoped, tag = 'internal scratch']
  %s0 = inlined_call_operand.vmem [shape: f32[2,16,32], index: 0, kind: input, shape index: {}]
  %s1 = inlined_call_operand.vmem [shape: f32[2,16,32], index: 1, kind: input, shape index: {}]
  %s2 = inlined_call_operand.vmem [shape: bf16[32,32], index: 2, kind: input, shape index: {}]
  %s3 = inlined_call_operand.vmem [shape: f32[1,32], index: 3, kind: input, shape index: {}]
  %s4 = inlined_call_operand.vmem [shape: bf16[32,64], index: 4, kind: input, shape index: {}]
  %s5 = inlined_call_operand.vmem [shape: f32[1,64], index: 5, kind: input, shape index: {}]
  %s6 = inlined_call_operand.vmem [shape: f32[2,1,16], index: 6, kind: output, shape index: {0}]
  %s7 = inlined_call_operand.vmem [shape: f32[2,16,32], index: 7, kind: output, shape index: {1}]
  %8 = xla_tuple %s6, %s7
  %s9 = sld [smem:[#allocation0]]
  $region65: #{_lambda_.22} parent=0
    _
  %s11 = ssub.s32 1, %s9
  %s12 = scalar_select 0, %s11, %s9
  loop: start=0, step=1, limit=4
  $region2: #{_lambda_.22} parent=0 // loop_pre_header
    _
  $region3: #{_lambda_.22} parent=0 // loop_header
    %s14 = sphi 0, %s18
    %p15 = scmp.ge.s32.totalorder %s14, 4
    %s24 = sphi 0, %s26
    %s27 = sphi 0, %s24
    %s28 = sphi 0, %s27
    %s44 = sphi 0, %s28
    %s50 = sphi 0, %s52
    %s53 = sphi 0, %s50
    %s54 = sphi 0, %s53
    %s70 = sphi 0, %s54
    %s74 = sphi 0, %s74
    %s76 = sphi 0, %s74
    %s77 = sphi 0, %s76
    %s91 = sphi 0, %s77
    %s95 = sphi 0, %s95
    %s97 = sphi 0, %s95
    %s98 = sphi 0, %s97
    %s112 = sphi 0, %s98
    %s116 = sphi 0, %s116
    %s118 = sphi 0, %s116
    %s119 = sphi 0, %s118
    %s133 = sphi 0, %s119
    %s137 = sphi 0, %s137
    %s139 = sphi 0, %s137
    %s140 = sphi 0, %s139
    %s154 = sphi 0, %s140
    %s160 = sphi 0, %s162
    %s163 = sphi 0, %s160
    %s164 = sphi 0, %s163
    %s180 = sphi 0, %s164
    %s186 = sphi 0, %s188
    %s189 = sphi 0, %s186
    %s190 = sphi 0, %s189
    %s206 = sphi 0, %s190
  $region4: #{_lambda_.22} parent=0 // loop_header_branch
    %17 = sbr.rel (%p15) target = $region8
  $region5: #{_lambda_.22} parent=0 // loop_body
    %s19 = ssub.s32 %s14, 1
    %s20 = ssub.s32 %s14, 2
    %s21 = sadd.s32 %s14, 1
    %s22 = ssub.s32 %s14, %s21
    %p23 = scmp.eq.s32.totalorder %s22, 0
    %s25 = sadd.s32 %s24, 1
    %s26 = scalar_select %p23, %s24, %s25
    %p29 = pneg %p23
    %p30 = scmp.eq.s32.totalorder %s14, 1
    %p31 = por %p29, %p30
    %p32 = scmp.ne.s32.totalorder %s24, %s27
    %p33 = scmp.eq.s32.totalorder %s14, 0
    %p34 = por %p32, %p33
    %p35 = scmp.ne.s32.totalorder %s24, %s27
    %p36 = scmp.eq.s32.totalorder %s19, 1
    %p37 = por %p35, %p36
    %p38 = scmp.ne.s32.totalorder %s27, %s28
    %p39 = scmp.eq.s32.totalorder %s19, 0
    %p40 = por %p38, %p39
    %p41 = scmp.ne.s32.totalorder %s27, %s28
    %p42 = scmp.eq.s32.totalorder %s20, 1
    %p43 = por %p41, %p42
    %p45 = scmp.ne.s32.totalorder %s28, %s44
    %p46 = scmp.eq.s32.totalorder %s20, 0
    %p47 = por %p45, %p46
    %s48 = ssub.s32 %s14, %s21
    %p49 = scmp.eq.s32.totalorder %s48, 0
    %s51 = sadd.s32 %s50, 1
    %s52 = scalar_select %p49, %s50, %s51
    %p55 = pneg %p49
    %p56 = scmp.eq.s32.totalorder %s14, 1
    %p57 = por %p55, %p56
    %p58 = scmp.ne.s32.totalorder %s50, %s53
    %p59 = scmp.eq.s32.totalorder %s14, 0
    %p60 = por %p58, %p59
    %p61 = scmp.ne.s32.totalorder %s50, %s53
    %p62 = scmp.eq.s32.totalorder %s19, 1
    %p63 = por %p61, %p62
    %p64 = scmp.ne.s32.totalorder %s53, %s54
    %p65 = scmp.eq.s32.totalorder %s19, 0
    %p66 = por %p64, %p65
    %p67 = scmp.ne.s32.totalorder %s53, %s54
    %p68 = scmp.eq.s32.totalorder %s20, 1
    %p69 = por %p67, %p68
    %p71 = scmp.ne.s32.totalorder %s54, %s70
    %p72 = scmp.eq.s32.totalorder %s20, 0
    %p73 = por %p71, %p72
    %s75 = sadd.s32 %s74, 1
    %p78 = scmp.eq.s32.totalorder %s14, 1
    %p79 = scmp.ne.s32.totalorder %s74, %s76
    %p80 = scmp.eq.s32.totalorder %s14, 0
    %p81 = por %p79, %p80
    %p82 = scmp.ne.s32.totalorder %s74, %s76
    %p83 = scmp.eq.s32.totalorder %s19, 1
    %p84 = por %p82, %p83
    %p85 = scmp.ne.s32.totalorder %s76, %s77
    %p86 = scmp.eq.s32.totalorder %s19, 0
    %p87 = por %p85, %p86
    %p88 = scmp.ne.s32.totalorder %s76, %s77
    %p89 = scmp.eq.s32.totalorder %s20, 1
    %p90 = por %p88, %p89
    %p92 = scmp.ne.s32.totalorder %s77, %s91
    %p93 = scmp.eq.s32.totalorder %s20, 0
    %p94 = por %p92, %p93
    %s96 = sadd.s32 %s95, 1
    %p99 = scmp.eq.s32.totalorder %s14, 1
    %p100 = scmp.ne.s32.totalorder %s95, %s97
    %p101 = scmp.eq.s32.totalorder %s14, 0
    %p102 = por %p100, %p101
    %p103 = scmp.ne.s32.totalorder %s95, %s97
    %p104 = scmp.eq.s32.totalorder %s19, 1
    %p105 = por %p103, %p104
    %p106 = scmp.ne.s32.totalorder %s97, %s98
    %p107 = scmp.eq.s32.totalorder %s19, 0
    %p108 = por %p106, %p107
    %p109 = scmp.ne.s32.totalorder %s97, %s98
    %p110 = scmp.eq.s32.totalorder %s20, 1
    %p111 = por %p109, %p110
    %p113 = scmp.ne.s32.totalorder %s98, %s112
    %p114 = scmp.eq.s32.totalorder %s20, 0
    %p115 = por %p113, %p114
    %s117 = sadd.s32 %s116, 1
    %p120 = scmp.eq.s32.totalorder %s14, 1
    %p121 = scmp.ne.s32.totalorder %s116, %s118
    %p122 = scmp.eq.s32.totalorder %s14, 0
    %p123 = por %p121, %p122
    %p124 = scmp.ne.s32.totalorder %s116, %s118
    %p125 = scmp.eq.s32.totalorder %s19, 1
    %p126 = por %p124, %p125
    %p127 = scmp.ne.s32.totalorder %s118, %s119
    %p128 = scmp.eq.s32.totalorder %s19, 0
    %p129 = por %p127, %p128
    %p130 = scmp.ne.s32.totalorder %s118, %s119
    %p131 = scmp.eq.s32.totalorder %s20, 1
    %p132 = por %p130, %p131
    %p134 = scmp.ne.s32.totalorder %s119, %s133
    %p135 = scmp.eq.s32.totalorder %s20, 0
    %p136 = por %p134, %p135
    %s138 = sadd.s32 %s137, 1
    %p141 = scmp.eq.s32.totalorder %s14, 1
    %p142 = scmp.ne.s32.totalorder %s137, %s139
    %p143 = scmp.eq.s32.totalorder %s14, 0
    %p144 = por %p142, %p143
    %p145 = scmp.ne.s32.totalorder %s137, %s139
    %p146 = scmp.eq.s32.totalorder %s19, 1
    %p147 = por %p145, %p146
    %p148 = scmp.ne.s32.totalorder %s139, %s140
    %p149 = scmp.eq.s32.totalorder %s19, 0
    %p150 = por %p148, %p149
    %p151 = scmp.ne.s32.totalorder %s139, %s140
    %p152 = scmp.eq.s32.totalorder %s20, 1
    %p153 = por %p151, %p152
    %p155 = scmp.ne.s32.totalorder %s140, %s154
    %p156 = scmp.eq.s32.totalorder %s20, 0
    %p157 = por %p155, %p156
    %s158 = ssub.s32 %s14, %s21
    %p159 = scmp.eq.s32.totalorder %s158, 0
    %s161 = sadd.s32 %s160, 1
    %s162 = scalar_select %p159, %s160, %s161
    %p165 = pneg %p159
    %p166 = scmp.eq.s32.totalorder %s14, 1
    %p167 = por %p165, %p166
    %p168 = scmp.ne.s32.totalorder %s160, %s163
    %p169 = scmp.eq.s32.totalorder %s14, 0
    %p170 = por %p168, %p169
    %p171 = scmp.ne.s32.totalorder %s160, %s163
    %p172 = scmp.eq.s32.totalorder %s19, 1
    %p173 = por %p171, %p172
    %p174 = scmp.ne.s32.totalorder %s163, %s164
    %p175 = scmp.eq.s32.totalorder %s19, 0
    %p176 = por %p174, %p175
    %p177 = scmp.ne.s32.totalorder %s163, %s164
    %p178 = scmp.eq.s32.totalorder %s20, 1
    %p179 = por %p177, %p178
    %p181 = scmp.ne.s32.totalorder %s164, %s180
    %p182 = scmp.eq.s32.totalorder %s20, 0
    %p183 = por %p181, %p182
    %s184 = ssub.s32 %s14, %s21
    %p185 = scmp.eq.s32.totalorder %s184, 0
    %s187 = sadd.s32 %s186, 1
    %s188 = scalar_select %p185, %s186, %s187
    %p191 = pneg %p185
    %p192 = scmp.eq.s32.totalorder %s14, 1
    %p193 = por %p191, %p192
    %p194 = scmp.ne.s32.totalorder %s186, %s189
    %p195 = scmp.eq.s32.totalorder %s14, 0
    %p196 = por %p194, %p195
    %p197 = scmp.ne.s32.totalorder %s186, %s189
    %p198 = scmp.eq.s32.totalorder %s19, 1
    %p199 = por %p197, %p198
    %p200 = scmp.ne.s32.totalorder %s189, %s190
    %p201 = scmp.eq.s32.totalorder %s19, 0
    %p202 = por %p200, %p201
    %p203 = scmp.ne.s32.totalorder %s189, %s190
    %p204 = scmp.eq.s32.totalorder %s20, 1
    %p205 = por %p203, %p204
    %p207 = scmp.ne.s32.totalorder %s190, %s206
    %p208 = scmp.eq.s32.totalorder %s20, 0
    %p209 = por %p207, %p208
    %p210 = scmp.le.s32.totalorder 1, %s14
    %p211 = scmp.lt.s32.totalorder %s14, 3
    %p212 = pnand %p210, %p211
    %p213 = pneg %p212
    // Predicated region
    $region9: #{_lambda_.22} parent=5 // pred_check
      _
    $region10: #{_lambda_.22} parent=5 // pred_check_branch
      %215 = sbr.rel (%p212) target = $region12
    $region11: #{_lambda_.22} parent=5 // pred_region
      %s216 = ssub.s32 %s14, 1
      // Predicated region
      $region13: #{_lambda_.22} parent=11 // pred_check
        %p217 = pneg %p87
      $region14: #{_lambda_.22} parent=11 // pred_check_branch
        %219 = sbr.rel (%p217) target = $region16
      $region15: #{_lambda_.22} parent=11 // pred_region
        _
      $region16: #{_lambda_.22} parent=11 // pred_fallthru
        _
      // Predicated region
      $region17: #{_lambda_.22} parent=11 // pred_check
        %p220 = pneg %p108
      $region18: #{_lambda_.22} parent=11 // pred_check_branch
        %222 = sbr.rel (%p220) target = $region20
      $region19: #{_lambda_.22} parent=11 // pred_region
        _
      $region20: #{_lambda_.22} parent=11 // pred_fallthru
        _
      // Predicated region
      $region21: #{_lambda_.22} parent=11 // pred_check
        %p223 = pneg %p129
      $region22: #{_lambda_.22} parent=11 // pred_check_branch
        %225 = sbr.rel (%p223) target = $region24
      $region23: #{_lambda_.22} parent=11 // pred_region
        _
      $region24: #{_lambda_.22} parent=11 // pred_fallthru
        _
      // Predicated region
      $region25: #{_lambda_.22} parent=11 // pred_check
        %p226 = pneg %p150
      $region26: #{_lambda_.22} parent=11 // pred_check_branch
        %228 = sbr.rel (%p226) target = $region28
      $region27: #{_lambda_.22} parent=11 // pred_region
        _
      $region28: #{_lambda_.22} parent=11 // pred_fallthru
        _
    $region12: #{_lambda_.22} parent=5 // pred_fallthru
      _
    %p229 = scmp.lt.s32.totalorder %s14, 2
    // Predicated region
    $region29: #{_lambda_.22} parent=5 // pred_check
      %p230 = pneg %p229
    $region30: #{_lambda_.22} parent=5 // pred_check_branch
      %232 = sbr.rel (%p230) target = $region32
    $region31: #{_lambda_.22} parent=5 // pred_region
      // Predicated region
      $region33: #{_lambda_.22} parent=31 // pred_check
        %p233 = pneg %p34
      $region34: #{_lambda_.22} parent=31 // pred_check_branch
        %235 = sbr.rel (%p233) target = $region36
      $region35: #{_lambda_.22} parent=31 // pred_region
        %p236 = scmp.lt.s32.totalorder %s14, 1
        %s237 = scalar_select %p236, %s14, 1
        %s238 = smul.addr %s237, 2
        %s239 = smul.addr %s238, 8
        %s240 = scalar_lea.vmem %s0, %s239
      $region36: #{_lambda_.22} parent=31 // pred_fallthru
        _
      // Predicated region
      $region37: #{_lambda_.22} parent=31 // pred_check
        %p241 = pneg %p60
      $region38: #{_lambda_.22} parent=31 // pred_check_branch
        %243 = sbr.rel (%p241) target = $region40
      $region39: #{_lambda_.22} parent=31 // pred_region
        %p244 = scmp.lt.s32.totalorder %s14, 1
        %s245 = scalar_select %p244, %s14, 1
        %s246 = smul.addr %s245, 2
        %s247 = smul.addr %s246, 8
        %s248 = scalar_lea.vmem %s1, %s247
      $region40: #{_lambda_.22} parent=31 // pred_fallthru
        _
    $region32: #{_lambda_.22} parent=5 // pred_fallthru
      _
    %p249 = scmp.le.s32.totalorder 1, %s14
    %p250 = scmp.lt.s32.totalorder %s14, 3
    %p251 = pnand %p249, %p250
    %p252 = pneg %p251
    // Predicated region
    $region41: #{_lambda_.22} parent=5 // pred_check
      _
    $region42: #{_lambda_.22} parent=5 // pred_check_branch
      %254 = sbr.rel (%p251) target = $region44
    $region43: #{_lambda_.22} parent=5 // pred_region
      %s255 = ssub.s32 %s14, 1
      %p256 = scmp.lt.s32.totalorder %s19, 1
      %s257 = scalar_select %p256, %s19, 1
      %s258 = smul.addr %s257, 2
      %s259 = smul.addr %s258, 8
      %s260 = scalar_lea.vmem %s0, %s259
      %p261 = pneg %p40
      %p262 = pneg %p37
      %p263 = scmp.lt.s32.totalorder %s19, 1
      %s264 = scalar_select %p263, %s19, 1
      %s265 = smul.addr %s264, 2
      %s266 = smul.addr %s265, 8
      %s267 = scalar_lea.vmem %s1, %s266
      %p268 = pneg %p66
      %p269 = pneg %p63
      %p270 = pneg %p87
      %p271 = pneg %p84
      %p272 = pneg %p108
      %p273 = pneg %p105
      %p274 = pneg %p129
      %p275 = pneg %p126
      %p276 = pneg %p150
      %p277 = pneg %p147
      %p278 = pneg %p176
      %p279 = pneg %p173
      %p280 = scmp.lt.s32.totalorder %s19, 1
      %s281 = scalar_select %p280, %s19, 1
      %s282 = scalar_lea.vmem %s6, %s281
      %p283 = pneg %p202
      %p284 = pneg %p199
      %p285 = scmp.lt.s32.totalorder %s19, 1
      %s286 = scalar_select %p285, %s19, 1
      %s287 = smul.addr %s286, 2
      %s288 = smul.addr %s287, 8
      %s289 = scalar_lea.vmem %s7, %s288
      %p290 = scmp.lt.s32.totalorder %s19, 1
      %s291 = scalar_select %p290, %s19, 1
      %s292 = smul.addr %s291, 2
      %s293 = smul.addr %s292, 8
      %s294 = scalar_lea.vmem %s0, %s293
      %p295 = scmp.lt.s32.totalorder %s19, 1
      %s296 = scalar_select %p295, %s19, 1
      %s297 = smul.addr %s296, 2
      %s298 = smul.addr %s297, 8
      %s299 = scalar_lea.vmem %s1, %s298
      %p300 = scmp.lt.s32.totalorder %s19, 1
      %s301 = scalar_select %p300, %s19, 1
      %s302 = scalar_lea.vmem %s6, %s301
      %p303 = scmp.lt.s32.totalorder %s19, 1
      %s304 = scalar_select %p303, %s19, 1
      %s305 = smul.addr %s304, 2
      %s306 = smul.addr %s305, 8
      %s307 = scalar_lea.vmem %s7, %s306
      %v309 = vld [vmem:[%s294] sm:$0xff]
      %v310 = vld [vmem:[%s294 + $0x8] sm:$0xff]
      %v311 = vpack.c.bf16 %v310, %v309
      %v312 = vld [vmem:[%s2] sm:$0xf]
      %v313 = vld [vmem:[%s2 + $0x4] sm:$0xf]
      %v314 = vld [vmem:[%s2 + $0x8] sm:$0xf]
      %v315 = vld [vmem:[%s2 + $0xc] sm:$0xf]
      %v316 = vld [vmem:[%s3] sm:$0x1]
      %v318 = vlaneseq
      %v319 = vshrl.u32 %v318, 7
      %v320 = vsub.s32 0, %v319
      %v321 = vrot.slane %v316, %v320
      %v327 = vunpack.c.l.b16 %v312
      %v328 = vunpack.c.l.b16 %v313
      %v329 = vunpack.c.l.b16 %v314
      %v330 = vunpack.c.l.b16 %v315
      %v331 = vpack.c.b16 %v328, %v327
      %v332 = vpack.c.b16 %v330, %v329
      %vm335 = vcmask 261120
      %v337 = vsel %vm335, %v311, 0
      %339 = vmatprep.subr.bf16.mxu0 0
      %340 = vmatpush1.bf16.msra.mxu0 %v331
      %341 = vmatprep.subr.bf16.mxu0 0
      %342 = vmatpush1.bf16.msra.mxu0 %v332
      %343 = vmatprep.subr.bf16.mxu0 0
      %344 = vmatpush1.bf16.msra.mxu0 0
      %345 = vmatprep.subr.bf16.mxu0 0
      %346 = vmatpush1.bf16.msra.mxu0 0
      %347 = vmatprep.subr.bf16.mxu0 0
      %348 = vmatpush1.bf16.msra.mxu0 0
      %349 = vmatprep.subr.bf16.mxu0 0
      %350 = vmatpush1.bf16.msra.mxu0 0
      %351 = vmatprep.subr.bf16.mxu0 0
      %352 = vmatpush1.bf16.msra.mxu0 0
      %353 = vmatprep.subr.bf16.mxu0 0
      %354 = vmatpush1.bf16.msra.mxu0 0
      %355 = vmatprep.subr.bf16.mxu0 0
      %356 = vmatpush1.bf16.msra.mxu0 0
      %357 = vmatprep.subr.bf16.mxu0 0
      %358 = vmatpush1.bf16.msra.mxu0 0
      %359 = vmatprep.subr.bf16.mxu0 0
      %360 = vmatpush1.bf16.msra.mxu0 0
      %361 = vmatprep.subr.bf16.mxu0 0
      %362 = vmatpush1.bf16.msra.mxu0 0
      %363 = vmatprep.subr.bf16.mxu0 0
      %364 = vmatpush1.bf16.msra.mxu0 0
      %365 = vmatprep.subr.bf16.mxu0 0
      %366 = vmatpush1.bf16.msra.mxu0 0
      %367 = vmatprep.subr.bf16.mxu0 0
      %368 = vmatpush1.bf16.msra.mxu0 0
      %369 = vmatprep.subr.bf16.mxu0 0
      %370 = vmatpush1.bf16.msra.mxu0 0
      %371 = vmatprep.mubr.bf16.mxu0 0
      %372 = vmatmul.mubr.bf16.gmra.mrb[0].mxu0 %v337
      %v373 = vpop.f32.mrb[0].mxu0
      %v374 = vadd.f32 %v321, %v373
      %v375 = vpop.f32.mrb[0].mxu0
      %v376 = vpop.f32.mrb[0].mxu0
      %v377 = vadd.f32 %v321, %v376
      %v378 = vpop.f32.mrb[0].mxu0
      %379 = vdwg.mxu0
      %v380 = vld [vmem:[%s299] sm:$0xff]
      %v381 = vld [vmem:[%s299 + $0x8] sm:$0xff]
      %v382 = vpack.c.bf16 %v381, %v380
      %v383 = vld [vmem:[%s4] sm:$0xf]
      %v384 = vld [vmem:[%s4 + $0x4] sm:$0xf]
      %v385 = vld [vmem:[%s4 + $0x8] sm:$0xf]
      %v386 = vld [vmem:[%s4 + $0xc] sm:$0xf]
      %v387 = vld [vmem:[%s5] sm:$0x1]
      %v389 = vlaneseq
      %v390 = vshrl.u32 %v389, 7
      %v391 = vsub.s32 0, %v390
      %v392 = vrot.slane %v387, %v391
      %v398 = vunpack.c.l.b16 %v383
      %v399 = vunpack.c.l.b16 %v384
      %v400 = vunpack.c.l.b16 %v385
      %v401 = vunpack.c.l.b16 %v386
      %v402 = vpack.c.b16 %v399, %v398
      %v403 = vpack.c.b16 %v401, %v400
      %v407 = vsel %vm335, %v382, 0
      %409 = vmatprep.subr.bf16.mxu0 0
      %410 = vmatpush1.bf16.msra.mxu0 %v402
      %411 = vmatprep.subr.bf16.mxu0 0
      %412 = vmatpush1.bf16.msra.mxu0 %v403
      %413 = vmatprep.subr.bf16.mxu0 0
      %414 = vmatpush1.bf16.msra.mxu0 0
      %415 = vmatprep.subr.bf16.mxu0 0
      %416 = vmatpush1.bf16.msra.mxu0 0
      %417 = vmatprep.subr.bf16.mxu0 0
      %418 = vmatpush1.bf16.msra.mxu0 0
      %419 = vmatprep.subr.bf16.mxu0 0
      %420 = vmatpush1.bf16.msra.mxu0 0
      %421 = vmatprep.subr.bf16.mxu0 0
      %422 = vmatpush1.bf16.msra.mxu0 0
      %423 = vmatprep.subr.bf16.mxu0 0
      %424 = vmatpush1.bf16.msra.mxu0 0
      %425 = vmatprep.subr.bf16.mxu0 0
      %426 = vmatpush1.bf16.msra.mxu0 0
      %427 = vmatprep.subr.bf16.mxu0 0
      %428 = vmatpush1.bf16.msra.mxu0 0
      %429 = vmatprep.subr.bf16.mxu0 0
      %430 = vmatpush1.bf16.msra.mxu0 0
      %431 = vmatprep.subr.bf16.mxu0 0
      %432 = vmatpush1.bf16.msra.mxu0 0
      %433 = vmatprep.subr.bf16.mxu0 0
      %434 = vmatpush1.bf16.msra.mxu0 0
      %435 = vmatprep.subr.bf16.mxu0 0
      %436 = vmatpush1.bf16.msra.mxu0 0
      %437 = vmatprep.subr.bf16.mxu0 0
      %438 = vmatpush1.bf16.msra.mxu0 0
      %439 = vmatprep.subr.bf16.mxu0 0
      %440 = vmatpush1.bf16.msra.mxu0 0
      %441 = vmatprep.mubr.bf16.mxu0 0
      %442 = vmatmul.mubr.bf16.gmra.mrb[0].mxu0 %v407
      %v443 = vpop.f32.mrb[0].mxu0
      %v444 = vadd.f32 %v392, %v443
      %v445 = vpop.f32.mrb[0].mxu0
      %v446 = vpop.f32.mrb[0].mxu0
      %v447 = vadd.f32 %v392, %v446
      %v448 = vpop.f32.mrb[0].mxu0
      %449 = vdwg.mxu0
      %452 = vrot.lane.b32.xlu0 %v444, 96
      %v453 = vpop.permute.xlu0 %452
      %454 = vrot.lane.b32.xlu0 %v447, 96
      %v455 = vpop.permute.xlu0 %454
      %458 = vst.msk [vmem:[%s307] sm:$0xff] %vm335, %v453
      %459 = vst.msk [vmem:[%s307 + $0x8] sm:$0xff] %vm335, %v455
      %v460 = vpack.c.bf16 %v447, %v444
      %v461 = vpack.c.bf16 %v377, %v374
      %v463 = vsel %vm335, %v460, 0
      %v466 = vsel %vm335, %v461, 0
      %468 = vmatprep.subr.bf16.mxu0 0
      %469 = vmatpush1.bf16.xpose.msra.mxu0 %v466
      %470 = vmatprep.subr.bf16.mxu0 0
      %471 = vmatpush1.bf16.xpose.msra.mxu0 0
      %472 = vmatprep.subr.bf16.mxu0 0
      %473 = vmatpush1.bf16.xpose.msra.mxu0 0
      %474 = vmatprep.subr.bf16.mxu0 0
      %475 = vmatpush1.bf16.xpose.msra.mxu0 0
      %476 = vmatprep.subr.bf16.mxu0 0
      %477 = vmatpush1.bf16.xpose.msra.mxu0 0
      %478 = vmatprep.subr.bf16.mxu0 0
      %479 = vmatpush1.bf16.xpose.msra.mxu0 0
      %480 = vmatprep.subr.bf16.mxu0 0
      %481 = vmatpush1.bf16.xpose.msra.mxu0 0
      %482 = vmatprep.subr.bf16.mxu0 0
      %483 = vmatpush1.bf16.xpose.msra.mxu0 0
      %484 = vmatprep.subr.bf16.mxu0 0
      %485 = vmatpush1.bf16.xpose.msra.mxu0 0
      %486 = vmatprep.subr.bf16.mxu0 0
      %487 = vmatpush1.bf16.xpose.msra.mxu0 0
      %488 = vmatprep.subr.bf16.mxu0 0
      %489 = vmatpush1.bf16.xpose.msra.mxu0 0
      %490 = vmatprep.subr.bf16.mxu0 0
      %491 = vmatpush1.bf16.xpose.msra.mxu0 0
      %492 = vmatprep.subr.bf16.mxu0 0
      %493 = vmatpush1.bf16.xpose.msra.mxu0 0
      %494 = vmatprep.subr.bf16.mxu0 0
      %495 = vmatpush1.bf16.xpose.msra.mxu0 0
      %496 = vmatprep.subr.bf16.mxu0 0
      %497 = vmatpush1.bf16.xpose.msra.mxu0 0
      %498 = vmatprep.subr.bf16.mxu0 0
      %499 = vmatpush1.bf16.xpose.msra.mxu0 0
      %500 = vmatprep.mubr.bf16.mxu0 0
      %501 = vmatmul.mubr.bf16.gmra.mrb[0].mxu0 %v463
      %v502 = vpop.f32.mrb[0].mxu0
      %v503 = vadd.f32 0.0, %v502
      %v504 = vpop.f32.mrb[0].mxu0
      %v505 = vpop.f32.mrb[0].mxu0
      %v506 = vadd.f32 0.0, %v505
      %v507 = vpop.f32.mrb[0].mxu0
      %508 = vdwg.mxu0
      %v509 = vlaneseq
      %v510 = vshrl.u32 %v509, 7
      %v511 = vadd.s32 %v510, 8
      %514 = vrot.lane.b32.xlu0 %v503, 127
      %v515 = vpop.permute.xlu0 %514
      %516 = vrot.lane.b32.xlu0 %v506, 127
      %v517 = vpop.permute.xlu0 %516
      %520 = vrot.lane.b32.xlu0 %v503, 15
      %v521 = vpop.permute.xlu0 %520
      %522 = vrot.lane.b32.xlu0 %v506, 15
      %v523 = vpop.permute.xlu0 %522
      %vm526 = vcmask 121856
      %v527 = vsel %vm526, %v515, %v521
      %v528 = vsel %vm526, %v517, %v523
      %v529 = vand.u32 %v510, 1
      %v530 = vand.u32 %v511, 1
      %vm531 = vcmp.ne.s32.totalorder %v529, 0
      %vm532 = vcmp.ne.s32.totalorder %v530, 0
      %v533 = vsel %vm531, %v527, %v503
      %v534 = vsel %vm532, %v528, %v506
      %537 = vrot.lane.b32.xlu0 %v533, 126
      %v538 = vpop.permute.xlu0 %537
      %539 = vrot.lane.b32.xlu0 %v534, 126
      %v540 = vpop.permute.xlu0 %539
      %543 = vrot.lane.b32.xlu0 %v533, 14
      %v544 = vpop.permute.xlu0 %543
      %545 = vrot.lane.b32.xlu0 %v534, 14
      %v546 = vpop.permute.xlu0 %545
      %vm549 = vcmask 113664
      %v550 = vsel %vm549, %v538, %v544
      %v551 = vsel %vm549, %v540, %v546
      %v552 = vand.u32 %v510, 2
      %v553 = vand.u32 %v511, 2
      %vm554 = vcmp.ne.s32.totalorder %v552, 0
      %vm555 = vcmp.ne.s32.totalorder %v553, 0
      %v556 = vsel %vm554, %v550, %v533
      %v557 = vsel %vm555, %v551, %v534
      %560 = vrot.lane.b32.xlu0 %v556, 124
      %v561 = vpop.permute.xlu0 %560
      %562 = vrot.lane.b32.xlu0 %v557, 124
      %v563 = vpop.permute.xlu0 %562
      %566 = vrot.lane.b32.xlu0 %v556, 12
      %v567 = vpop.permute.xlu0 %566
      %568 = vrot.lane.b32.xlu0 %v557, 12
      %v569 = vpop.permute.xlu0 %568
      %vm572 = vcmask 97280
      %v573 = vsel %vm572, %v561, %v567
      %v574 = vsel %vm572, %v563, %v569
      %v575 = vand.u32 %v510, 4
      %v576 = vand.u32 %v511, 4
      %vm577 = vcmp.ne.s32.totalorder %v575, 0
      %vm578 = vcmp.ne.s32.totalorder %v576, 0
      %v579 = vsel %vm577, %v573, %v556
      %v580 = vsel %vm578, %v574, %v557
      %583 = vrot.lane.b32.xlu0 %v579, 120
      %v584 = vpop.permute.xlu0 %583
      %585 = vrot.lane.b32.xlu0 %v580, 120
      %v586 = vpop.permute.xlu0 %585
      %589 = vrot.lane.b32.xlu0 %v579, 8
      %v590 = vpop.permute.xlu0 %589
      %591 = vrot.lane.b32.xlu0 %v580, 8
      %v592 = vpop.permute.xlu0 %591
      %vm595 = vcmask 64512
      %v596 = vsel %vm595, %v584, %v590
      %v597 = vsel %vm595, %v586, %v592
      %v598 = vand.u32 %v510, 8
      %v599 = vand.u32 %v511, 8
      %vm600 = vcmp.ne.s32.totalorder %v598, 0
      %vm601 = vcmp.ne.s32.totalorder %v599, 0
      %v602 = vsel %vm600, %v596, %v579
      %v603 = vsel %vm601, %v597, %v580
      %vm604 = vcmask 130048
      %v605 = vsel %vm604, %v602, 0.0
      %v606 = vsel %vm604, %v603, 0.0
      %v607 = vadd.f32 %v605, %v606
      %v608 = vrot.slane %v607, 4
      %v609 = vadd.f32 %v607, %v608
      %v610 = vrot.slane %v609, 2
      %v611 = vadd.f32 %v609, %v610
      %v612 = vrot.slane %v611, 1
      %v613 = vadd.f32 %v611, %v612
      %v614 = vmul.f32 %v613, 0.03125
      %vm615 = vcmask 122880
      %616 = vst.msk [vmem:[%s302] sm:$0x1] %vm615, %v614
      %p617 = scmp.lt.s32.totalorder %s19, 1
      %s618 = scalar_select %p617, %s19, 1
      %s619 = scalar_lea.vmem %s6, %s618
      %p620 = scmp.lt.s32.totalorder %s19, 1
      %s621 = scalar_select %p620, %s19, 1
      %s622 = smul.addr %s621, 2
      %s623 = smul.addr %s622, 8
      %s624 = scalar_lea.vmem %s7, %s623
      // Predicated region
      $region45: #{_lambda_.22} parent=43 // pred_check
        %p625 = pneg %p173
      $region46: #{_lambda_.22} parent=43 // pred_check_branch
        %627 = sbr.rel (%p625) target = $region48
      $region47: #{_lambda_.22} parent=43 // pred_region
        _
      $region48: #{_lambda_.22} parent=43 // pred_fallthru
        _
      // Predicated region
      $region49: #{_lambda_.22} parent=43 // pred_check
        %p628 = pneg %p199
      $region50: #{_lambda_.22} parent=43 // pred_check_branch
        %630 = sbr.rel (%p628) target = $region52
      $region51: #{_lambda_.22} parent=43 // pred_region
        _
      $region52: #{_lambda_.22} parent=43 // pred_fallthru
        _
    $region44: #{_lambda_.22} parent=5 // pred_fallthru
      _
    %p631 = scmp.le.s32.totalorder 2, %s14
    // Predicated region
    $region53: #{_lambda_.22} parent=5 // pred_check
      %p632 = pneg %p631
    $region54: #{_lambda_.22} parent=5 // pred_check_branch
      %634 = sbr.rel (%p632) target = $region56
    $region55: #{_lambda_.22} parent=5 // pred_region
      %s635 = ssub.s32 %s14, 2
      // Predicated region
      $region57: #{_lambda_.22} parent=55 // pred_check
        %p636 = pneg %p179
      $region58: #{_lambda_.22} parent=55 // pred_check_branch
        %638 = sbr.rel (%p636) target = $region60
      $region59: #{_lambda_.22} parent=55 // pred_region
        %p639 = scmp.lt.s32.totalorder %s20, 1
        %s640 = scalar_select %p639, %s20, 1
        %s641 = scalar_lea.vmem %s6, %s640
      $region60: #{_lambda_.22} parent=55 // pred_fallthru
        _
      // Predicated region
      $region61: #{_lambda_.22} parent=55 // pred_check
        %p642 = pneg %p205
      $region62: #{_lambda_.22} parent=55 // pred_check_branch
        %644 = sbr.rel (%p642) target = $region64
      $region63: #{_lambda_.22} parent=55 // pred_region
        %p645 = scmp.lt.s32.totalorder %s20, 1
        %s646 = scalar_select %p645, %s20, 1
        %s647 = smul.addr %s646, 2
        %s648 = smul.addr %s647, 8
        %s649 = scalar_lea.vmem %s7, %s648
      $region64: #{_lambda_.22} parent=55 // pred_fallthru
        _
    $region56: #{_lambda_.22} parent=5 // pred_fallthru
      _
  $region6: #{_lambda_.22} parent=0 // loop_footer
    %s18 = sadd.s32 1, %s14
  $region7: #{_lambda_.22} parent=0 // loop_footer_branch
    %13 = sbr.rel target = $region3
  $region8: #{_lambda_.22} parent=0 // loop_exit
    _

// kernel: _lambda_.24
$region0: #{_lambda_.24}
  #allocation0 [shape = 'u32[]', space=smem, size = 0x4, offset = 0x4, fixed_abs, tag = 'smem constant byte address 0x4 - core index']
  #allocation1 [shape = 'u32[144,128]{1,0:T(1,128)}', space=vmem, size = 0x12000, scoped, tag = 'internal scratch']
  %s0 = inlined_call_operand.vmem [shape: f32[2,16,32], index: 0, kind: input, shape index: {}]
  %s1 = inlined_call_operand.vmem [shape: bf16[32,64], index: 1, kind: input, shape index: {}]
  %s2 = inlined_call_operand.vmem [shape: bf16[64,32], index: 2, kind: input, shape index: {}]
  %s3 = inlined_call_operand.vmem [shape: f32[2,16,32], index: 3, kind: input, shape index: {}]
  %s4 = inlined_call_operand.vmem [shape: f32[2,16,32], index: 4, kind: output, shape index: {0}]
  %s5 = inlined_call_operand.vmem [shape: f32[2,16,32], index: 5, kind: output, shape index: {1}]
  %6 = xla_tuple %s4, %s5
  %s7 = sld [smem:[#allocation0]]
  $region57: #{_lambda_.24} parent=0
    _
  %s9 = ssub.s32 1, %s7
  %s10 = scalar_select 0, %s9, %s7
  loop: start=0, step=1, limit=4
  $region2: #{_lambda_.24} parent=0 // loop_pre_header
    _
  $region3: #{_lambda_.24} parent=0 // loop_header
    %s12 = sphi 0, %s16
    %p13 = scmp.ge.s32.totalorder %s12, 4
    %s22 = sphi 0, %s24
    %s25 = sphi 0, %s22
    %s26 = sphi 0, %s25
    %s42 = sphi 0, %s26
    %s46 = sphi 0, %s46
    %s48 = sphi 0, %s46
    %s49 = sphi 0, %s48
    %s63 = sphi 0, %s49
    %s67 = sphi 0, %s67
    %s69 = sphi 0, %s67
    %s70 = sphi 0, %s69
    %s84 = sphi 0, %s70
    %s90 = sphi 0, %s92
    %s93 = sphi 0, %s90
    %s94 = sphi 0, %s93
    %s110 = sphi 0, %s94
    %s116 = sphi 0, %s118
    %s119 = sphi 0, %s116
    %s120 = sphi 0, %s119
    %s136 = sphi 0, %s120
    %s142 = sphi 0, %s144
    %s145 = sphi 0, %s142
    %s146 = sphi 0, %s145
    %s162 = sphi 0, %s146
  $region4: #{_lambda_.24} parent=0 // loop_header_branch
    %15 = sbr.rel (%p13) target = $region8
  $region5: #{_lambda_.24} parent=0 // loop_body
    %s17 = ssub.s32 %s12, 1
    %s18 = ssub.s32 %s12, 2
    %s19 = sadd.s32 %s12, 1
    %s20 = ssub.s32 %s12, %s19
    %p21 = scmp.eq.s32.totalorder %s20, 0
    %s23 = sadd.s32 %s22, 1
    %s24 = scalar_select %p21, %s22, %s23
    %p27 = pneg %p21
    %p28 = scmp.eq.s32.totalorder %s12, 1
    %p29 = por %p27, %p28
    %p30 = scmp.ne.s32.totalorder %s22, %s25
    %p31 = scmp.eq.s32.totalorder %s12, 0
    %p32 = por %p30, %p31
    %p33 = scmp.ne.s32.totalorder %s22, %s25
    %p34 = scmp.eq.s32.totalorder %s17, 1
    %p35 = por %p33, %p34
    %p36 = scmp.ne.s32.totalorder %s25, %s26
    %p37 = scmp.eq.s32.totalorder %s17, 0
    %p38 = por %p36, %p37
    %p39 = scmp.ne.s32.totalorder %s25, %s26
    %p40 = scmp.eq.s32.totalorder %s18, 1
    %p41 = por %p39, %p40
    %p43 = scmp.ne.s32.totalorder %s26, %s42
    %p44 = scmp.eq.s32.totalorder %s18, 0
    %p45 = por %p43, %p44
    %s47 = sadd.s32 %s46, 1
    %p50 = scmp.eq.s32.totalorder %s12, 1
    %p51 = scmp.ne.s32.totalorder %s46, %s48
    %p52 = scmp.eq.s32.totalorder %s12, 0
    %p53 = por %p51, %p52
    %p54 = scmp.ne.s32.totalorder %s46, %s48
    %p55 = scmp.eq.s32.totalorder %s17, 1
    %p56 = por %p54, %p55
    %p57 = scmp.ne.s32.totalorder %s48, %s49
    %p58 = scmp.eq.s32.totalorder %s17, 0
    %p59 = por %p57, %p58
    %p60 = scmp.ne.s32.totalorder %s48, %s49
    %p61 = scmp.eq.s32.totalorder %s18, 1
    %p62 = por %p60, %p61
    %p64 = scmp.ne.s32.totalorder %s49, %s63
    %p65 = scmp.eq.s32.totalorder %s18, 0
    %p66 = por %p64, %p65
    %s68 = sadd.s32 %s67, 1
    %p71 = scmp.eq.s32.totalorder %s12, 1
    %p72 = scmp.ne.s32.totalorder %s67, %s69
    %p73 = scmp.eq.s32.totalorder %s12, 0
    %p74 = por %p72, %p73
    %p75 = scmp.ne.s32.totalorder %s67, %s69
    %p76 = scmp.eq.s32.totalorder %s17, 1
    %p77 = por %p75, %p76
    %p78 = scmp.ne.s32.totalorder %s69, %s70
    %p79 = scmp.eq.s32.totalorder %s17, 0
    %p80 = por %p78, %p79
    %p81 = scmp.ne.s32.totalorder %s69, %s70
    %p82 = scmp.eq.s32.totalorder %s18, 1
    %p83 = por %p81, %p82
    %p85 = scmp.ne.s32.totalorder %s70, %s84
    %p86 = scmp.eq.s32.totalorder %s18, 0
    %p87 = por %p85, %p86
    %s88 = ssub.s32 %s12, %s19
    %p89 = scmp.eq.s32.totalorder %s88, 0
    %s91 = sadd.s32 %s90, 1
    %s92 = scalar_select %p89, %s90, %s91
    %p95 = pneg %p89
    %p96 = scmp.eq.s32.totalorder %s12, 1
    %p97 = por %p95, %p96
    %p98 = scmp.ne.s32.totalorder %s90, %s93
    %p99 = scmp.eq.s32.totalorder %s12, 0
    %p100 = por %p98, %p99
    %p101 = scmp.ne.s32.totalorder %s90, %s93
    %p102 = scmp.eq.s32.totalorder %s17, 1
    %p103 = por %p101, %p102
    %p104 = scmp.ne.s32.totalorder %s93, %s94
    %p105 = scmp.eq.s32.totalorder %s17, 0
    %p106 = por %p104, %p105
    %p107 = scmp.ne.s32.totalorder %s93, %s94
    %p108 = scmp.eq.s32.totalorder %s18, 1
    %p109 = por %p107, %p108
    %p111 = scmp.ne.s32.totalorder %s94, %s110
    %p112 = scmp.eq.s32.totalorder %s18, 0
    %p113 = por %p111, %p112
    %s114 = ssub.s32 %s12, %s19
    %p115 = scmp.eq.s32.totalorder %s114, 0
    %s117 = sadd.s32 %s116, 1
    %s118 = scalar_select %p115, %s116, %s117
    %p121 = pneg %p115
    %p122 = scmp.eq.s32.totalorder %s12, 1
    %p123 = por %p121, %p122
    %p124 = scmp.ne.s32.totalorder %s116, %s119
    %p125 = scmp.eq.s32.totalorder %s12, 0
    %p126 = por %p124, %p125
    %p127 = scmp.ne.s32.totalorder %s116, %s119
    %p128 = scmp.eq.s32.totalorder %s17, 1
    %p129 = por %p127, %p128
    %p130 = scmp.ne.s32.totalorder %s119, %s120
    %p131 = scmp.eq.s32.totalorder %s17, 0
    %p132 = por %p130, %p131
    %p133 = scmp.ne.s32.totalorder %s119, %s120
    %p134 = scmp.eq.s32.totalorder %s18, 1
    %p135 = por %p133, %p134
    %p137 = scmp.ne.s32.totalorder %s120, %s136
    %p138 = scmp.eq.s32.totalorder %s18, 0
    %p139 = por %p137, %p138
    %s140 = ssub.s32 %s12, %s19
    %p141 = scmp.eq.s32.totalorder %s140, 0
    %s143 = sadd.s32 %s142, 1
    %s144 = scalar_select %p141, %s142, %s143
    %p147 = pneg %p141
    %p148 = scmp.eq.s32.totalorder %s12, 1
    %p149 = por %p147, %p148
    %p150 = scmp.ne.s32.totalorder %s142, %s145
    %p151 = scmp.eq.s32.totalorder %s12, 0
    %p152 = por %p150, %p151
    %p153 = scmp.ne.s32.totalorder %s142, %s145
    %p154 = scmp.eq.s32.totalorder %s17, 1
    %p155 = por %p153, %p154
    %p156 = scmp.ne.s32.totalorder %s145, %s146
    %p157 = scmp.eq.s32.totalorder %s17, 0
    %p158 = por %p156, %p157
    %p159 = scmp.ne.s32.totalorder %s145, %s146
    %p160 = scmp.eq.s32.totalorder %s18, 1
    %p161 = por %p159, %p160
    %p163 = scmp.ne.s32.totalorder %s146, %s162
    %p164 = scmp.eq.s32.totalorder %s18, 0
    %p165 = por %p163, %p164
    %p166 = scmp.le.s32.totalorder 1, %s12
    %p167 = scmp.lt.s32.totalorder %s12, 3
    %p168 = pnand %p166, %p167
    %p169 = pneg %p168
    // Predicated region
    $region9: #{_lambda_.24} parent=5 // pred_check
      _
    $region10: #{_lambda_.24} parent=5 // pred_check_branch
      %171 = sbr.rel (%p168) target = $region12
    $region11: #{_lambda_.24} parent=5 // pred_region
      %s172 = ssub.s32 %s12, 1
      // Predicated region
      $region13: #{_lambda_.24} parent=11 // pred_check
        %p173 = pneg %p59
      $region14: #{_lambda_.24} parent=11 // pred_check_branch
        %175 = sbr.rel (%p173) target = $region16
      $region15: #{_lambda_.24} parent=11 // pred_region
        _
      $region16: #{_lambda_.24} parent=11 // pred_fallthru
        _
      // Predicated region
      $region17: #{_lambda_.24} parent=11 // pred_check
        %p176 = pneg %p80
      $region18: #{_lambda_.24} parent=11 // pred_check_branch
        %178 = sbr.rel (%p176) target = $region20
      $region19: #{_lambda_.24} parent=11 // pred_region
        _
      $region20: #{_lambda_.24} parent=11 // pred_fallthru
        _
    $region12: #{_lambda_.24} parent=5 // pred_fallthru
      _
    %p179 = scmp.lt.s32.totalorder %s12, 2
    // Predicated region
    $region21: #{_lambda_.24} parent=5 // pred_check
      %p180 = pneg %p179
    $region22: #{_lambda_.24} parent=5 // pred_check_branch
      %182 = sbr.rel (%p180) target = $region24
    $region23: #{_lambda_.24} parent=5 // pred_region
      // Predicated region
      $region25: #{_lambda_.24} parent=23 // pred_check
        %p183 = pneg %p32
      $region26: #{_lambda_.24} parent=23 // pred_check_branch
        %185 = sbr.rel (%p183) target = $region28
      $region27: #{_lambda_.24} parent=23 // pred_region
        %p186 = scmp.lt.s32.totalorder %s12, 1
        %s187 = scalar_select %p186, %s12, 1
        %s188 = smul.addr %s187, 2
        %s189 = smul.addr %s188, 8
        %s190 = scalar_lea.vmem %s0, %s189
      $region28: #{_lambda_.24} parent=23 // pred_fallthru
        _
      // Predicated region
      $region29: #{_lambda_.24} parent=23 // pred_check
        %p191 = pneg %p100
      $region30: #{_lambda_.24} parent=23 // pred_check_branch
        %193 = sbr.rel (%p191) target = $region32
      $region31: #{_lambda_.24} parent=23 // pred_region
        %p194 = scmp.lt.s32.totalorder %s12, 1
        %s195 = scalar_select %p194, %s12, 1
        %s196 = smul.addr %s195, 2
        %s197 = smul.addr %s196, 8
        %s198 = scalar_lea.vmem %s3, %s197
      $region32: #{_lambda_.24} parent=23 // pred_fallthru
        _
    $region24: #{_lambda_.24} parent=5 // pred_fallthru
      _
    %p199 = scmp.le.s32.totalorder 1, %s12
    %p200 = scmp.lt.s32.totalorder %s12, 3
    %p201 = pnand %p199, %p200
    %p202 = pneg %p201
    // Predicated region
    $region33: #{_lambda_.24} parent=5 // pred_check
      _
    $region34: #{_lambda_.24} parent=5 // pred_check_branch
      %204 = sbr.rel (%p201) target = $region36
    $region35: #{_lambda_.24} parent=5 // pred_region
      %s205 = ssub.s32 %s12, 1
      %p206 = scmp.lt.s32.totalorder %s17, 1
      %s207 = scalar_select %p206, %s17, 1
      %s208 = smul.addr %s207, 2
      %s209 = smul.addr %s208, 8
      %s210 = scalar_lea.vmem %s0, %s209
      %p211 = pneg %p38
      %p212 = pneg %p35
      %p213 = pneg %p59
      %p214 = pneg %p56
      %p215 = pneg %p80
      %p216 = pneg %p77
      %p217 = scmp.lt.s32.totalorder %s17, 1
      %s218 = scalar_select %p217, %s17, 1
      %s219 = smul.addr %s218, 2
      %s220 = smul.addr %s219, 8
      %s221 = scalar_lea.vmem %s3, %s220
      %p222 = pneg %p106
      %p223 = pneg %p103
      %p224 = pneg %p132
      %p225 = pneg %p129
      %p226 = scmp.lt.s32.totalorder %s17, 1
      %s227 = scalar_select %p226, %s17, 1
      %s228 = smul.addr %s227, 2
      %s229 = smul.addr %s228, 8
      %s230 = scalar_lea.vmem %s4, %s229
      %p231 = pneg %p158
      %p232 = pneg %p155
      %p233 = scmp.lt.s32.totalorder %s17, 1
      %s234 = scalar_select %p233, %s17, 1
      %s235 = smul.addr %s234, 2
      %s236 = smul.addr %s235, 8
      %s237 = scalar_lea.vmem %s5, %s236
      %p238 = scmp.lt.s32.totalorder %s17, 1
      %s239 = scalar_select %p238, %s17, 1
      %s240 = smul.addr %s239, 2
      %s241 = smul.addr %s240, 8
      %s242 = scalar_lea.vmem %s0, %s241
      %p243 = scmp.lt.s32.totalorder %s17, 1
      %s244 = scalar_select %p243, %s17, 1
      %s245 = smul.addr %s244, 2
      %s246 = smul.addr %s245, 8
      %s247 = scalar_lea.vmem %s3, %s246
      %p248 = scmp.lt.s32.totalorder %s17, 1
      %s249 = scalar_select %p248, %s17, 1
      %s250 = smul.addr %s249, 2
      %s251 = smul.addr %s250, 8
      %s252 = scalar_lea.vmem %s4, %s251
      %p253 = scmp.lt.s32.totalorder %s17, 1
      %s254 = scalar_select %p253, %s17, 1
      %s255 = smul.addr %s254, 2
      %s256 = smul.addr %s255, 8
      %s257 = scalar_lea.vmem %s5, %s256
      %v259 = vld [vmem:[%s247] sm:$0xff]
      %v260 = vld [vmem:[%s247 + $0x8] sm:$0xff]
      %v261 = vld [vmem:[%s242] sm:$0xff]
      %v262 = vld [vmem:[%s242 + $0x8] sm:$0xff]
      %v263 = vpack.c.bf16 %v262, %v261
      %v264 = vld [vmem:[%s1] sm:$0xf]
      %v265 = vld [vmem:[%s1 + $0x4] sm:$0xf]
      %v266 = vld [vmem:[%s1 + $0x8] sm:$0xf]
      %v267 = vld [vmem:[%s1 + $0xc] sm:$0xf]
      %v272 = vunpack.c.l.b16 %v264
      %v273 = vunpack.c.l.b16 %v265
      %v274 = vunpack.c.l.b16 %v266
      %v275 = vunpack.c.l.b16 %v267
      %v276 = vpack.c.b16 %v273, %v272
      %v277 = vpack.c.b16 %v275, %v274
      %vm280 = vcmask 261120
      %v282 = vsel %vm280, %v263, 0
      %284 = vmatprep.subr.bf16.mxu0 0
      %285 = vmatpush1.bf16.msra.mxu0 %v276
      %286 = vmatprep.subr.bf16.mxu0 0
      %287 = vmatpush1.bf16.msra.mxu0 %v277
      %288 = vmatprep.subr.bf16.mxu0 0
      %289 = vmatpush1.bf16.msra.mxu0 0
      %290 = vmatprep.subr.bf16.mxu0 0
      %291 = vmatpush1.bf16.msra.mxu0 0
      %292 = vmatprep.subr.bf16.mxu0 0
      %293 = vmatpush1.bf16.msra.mxu0 0
      %294 = vmatprep.subr.bf16.mxu0 0
      %295 = vmatpush1.bf16.msra.mxu0 0
      %296 = vmatprep.subr.bf16.mxu0 0
      %297 = vmatpush1.bf16.msra.mxu0 0
      %298 = vmatprep.subr.bf16.mxu0 0
      %299 = vmatpush1.bf16.msra.mxu0 0
      %300 = vmatprep.subr.bf16.mxu0 0
      %301 = vmatpush1.bf16.msra.mxu0 0
      %302 = vmatprep.subr.bf16.mxu0 0
      %303 = vmatpush1.bf16.msra.mxu0 0
      %304 = vmatprep.subr.bf16.mxu0 0
      %305 = vmatpush1.bf16.msra.mxu0 0
      %306 = vmatprep.subr.bf16.mxu0 0
      %307 = vmatpush1.bf16.msra.mxu0 0
      %308 = vmatprep.subr.bf16.mxu0 0
      %309 = vmatpush1.bf16.msra.mxu0 0
      %310 = vmatprep.subr.bf16.mxu0 0
      %311 = vmatpush1.bf16.msra.mxu0 0
      %312 = vmatprep.subr.bf16.mxu0 0
      %313 = vmatpush1.bf16.msra.mxu0 0
      %314 = vmatprep.subr.bf16.mxu0 0
      %315 = vmatpush1.bf16.msra.mxu0 0
      %316 = vmatprep.mubr.bf16.mxu0 0
      %317 = vmatmul.mubr.bf16.gmra.mrb[0].mxu0 %v282
      %v318 = vpop.f32.mrb[0].mxu0
      %v319 = vadd.f32 0.0, %v318
      %v320 = vpop.f32.mrb[0].mxu0
      %v321 = vpop.f32.mrb[0].mxu0
      %v322 = vadd.f32 0.0, %v321
      %v323 = vpop.f32.mrb[0].mxu0
      %324 = vdwg.mxu0
      %v325 = vmax.f32 %v319, 0.0
      %v326 = vmax.f32 %v322, 0.0
      %v327 = vpack.c.bf16 %v326, %v325
      %v328 = vld [vmem:[%s2] sm:$0xf]
      %v329 = vld [vmem:[%s2 + $0x4] sm:$0xf]
      %v330 = vld [vmem:[%s2 + $0x8] sm:$0xf]
      %v331 = vld [vmem:[%s2 + $0xc] sm:$0xf]
      %v332 = vld [vmem:[%s2 + $0x10] sm:$0xf]
      %v333 = vld [vmem:[%s2 + $0x14] sm:$0xf]
      %v334 = vld [vmem:[%s2 + $0x18] sm:$0xf]
      %v335 = vld [vmem:[%s2 + $0x1c] sm:$0xf]
      %v344 = vunpack.c.l.b16 %v328
      %v345 = vunpack.c.l.b16 %v329
      %v346 = vunpack.c.l.b16 %v330
      %v347 = vunpack.c.l.b16 %v331
      %v348 = vunpack.c.l.b16 %v332
      %v349 = vunpack.c.l.b16 %v333
      %v350 = vunpack.c.l.b16 %v334
      %v351 = vunpack.c.l.b16 %v335
      %v352 = vpack.c.b16 %v345, %v344
      %v353 = vpack.c.b16 %v347, %v346
      %v354 = vpack.c.b16 %v349, %v348
      %v355 = vpack.c.b16 %v351, %v350
      %vm360 = vcmask 523264
      %v362 = vsel %vm360, %v327, 0
      %364 = vmatprep.subr.bf16.mxu0 0
      %365 = vmatpush1.bf16.msra.mxu0 %v352
      %366 = vmatprep.subr.bf16.mxu0 0
      %367 = vmatpush1.bf16.msra.mxu0 %v353
      %368 = vmatprep.subr.bf16.mxu0 0
      %369 = vmatpush1.bf16.msra.mxu0 %v354
      %370 = vmatprep.subr.bf16.mxu0 0
      %371 = vmatpush1.bf16.msra.mxu0 %v355
      %372 = vmatprep.subr.bf16.mxu0 0
      %373 = vmatpush1.bf16.msra.mxu0 0
      %374 = vmatprep.subr.bf16.mxu0 0
      %375 = vmatpush1.bf16.msra.mxu0 0
      %376 = vmatprep.subr.bf16.mxu0 0
      %377 = vmatpush1.bf16.msra.mxu0 0
      %378 = vmatprep.subr.bf16.mxu0 0
      %379 = vmatpush1.bf16.msra.mxu0 0
      %380 = vmatprep.subr.bf16.mxu0 0
      %381 = vmatpush1.bf16.msra.mxu0 0
      %382 = vmatprep.subr.bf16.mxu0 0
      %383 = vmatpush1.bf16.msra.mxu0 0
      %384 = vmatprep.subr.bf16.mxu0 0
      %385 = vmatpush1.bf16.msra.mxu0 0
      %386 = vmatprep.subr.bf16.mxu0 0
      %387 = vmatpush1.bf16.msra.mxu0 0
      %388 = vmatprep.subr.bf16.mxu0 0
      %389 = vmatpush1.bf16.msra.mxu0 0
      %390 = vmatprep.subr.bf16.mxu0 0
      %391 = vmatpush1.bf16.msra.mxu0 0
      %392 = vmatprep.subr.bf16.mxu0 0
      %393 = vmatpush1.bf16.msra.mxu0 0
      %394 = vmatprep.subr.bf16.mxu0 0
      %395 = vmatpush1.bf16.msra.mxu0 0
      %396 = vmatprep.mubr.bf16.mxu0 0
      %397 = vmatmul.mubr.bf16.gmra.mrb[0].mxu0 %v362
      %v398 = vpop.f32.mrb[0].mxu0
      %v399 = vadd.f32 0.0, %v398
      %v400 = vpop.f32.mrb[0].mxu0
      %v401 = vpop.f32.mrb[0].mxu0
      %v402 = vadd.f32 0.0, %v401
      %v403 = vpop.f32.mrb[0].mxu0
      %404 = vdwg.mxu0
      %v405 = vadd.f32 %v261, %v399
      %v406 = vadd.f32 %v262, %v402
      %v408 = vrot.slane %v405, 7
      %vm411 = vcmask 1041408
      %v412 = vrot.slane %v405, 6
      %v413 = vrot.slane %v406, 6
      %v414 = vsel %vm411, %v412, %v413
      %vm417 = vcmask 1040384
      %v418 = vsel %vm417, %v405, %v408
      %v419 = vsel %vm411, %v418, %v412
      %v420 = vrot.slane %v406, 7
      %v421 = vsel %vm417, %v408, %v420
      %v423 = vadd.f32 %v419, %v418
      %v424 = vadd.f32 %v414, %v421
      %v425 = vadd.f32 %v423, %v405
      %v426 = vadd.f32 %v424, %v406
      %vm427 = vcmask 1046528
      %v428 = vrot.slane %v405, 1
      %v429 = vrot.slane %v406, 1
      %v430 = vsel %vm427, %v428, %v429
      %v433 = vsel %vm427, %v429, %v406
      %v434 = vadd.f32 %v425, %v430
      %v435 = vadd.f32 %v426, %v433
      %vm436 = vcmask 1045504
      %v437 = vrot.slane %v405, 2
      %v438 = vrot.slane %v406, 2
      %v439 = vsel %vm436, %v437, %v438
      %v442 = vsel %vm436, %v438, %v429
      %v443 = vsel %vm427, %v442, %v406
      %v444 = vadd.f32 %v434, %v439
      %v445 = vadd.f32 %v435, %v443
      %v446 = vmul.f32 %v444, 0.2
      %v447 = vmul.f32 %v445, 0.2
      %v448 = vsub.f32 %v405, %v446
      %v449 = vsub.f32 %v406, %v447
      %450 = vst.msk [vmem:[%s252] sm:$0xff] %vm280, %v448
      %451 = vst.msk [vmem:[%s252 + $0x8] sm:$0xff] %vm280, %v449
      %v452 = vadd.f32 %v446, %v259
      %v453 = vadd.f32 %v447, %v260
      %454 = vst.msk [vmem:[%s257] sm:$0xff] %vm280, %v452
      %455 = vst.msk [vmem:[%s257 + $0x8] sm:$0xff] %vm280, %v453
      %p456 = scmp.lt.s32.totalorder %s17, 1
      %s457 = scalar_select %p456, %s17, 1
      %s458 = smul.addr %s457, 2
      %s459 = smul.addr %s458, 8
      %s460 = scalar_lea.vmem %s4, %s459
      %p461 = scmp.lt.s32.totalorder %s17, 1
      %s462 = scalar_select %p461, %s17, 1
      %s463 = smul.addr %s462, 2
      %s464 = smul.addr %s463, 8
      %s465 = scalar_lea.vmem %s5, %s464
      // Predicated region
      $region37: #{_lambda_.24} parent=35 // pred_check
        %p466 = pneg %p129
      $region38: #{_lambda_.24} parent=35 // pred_check_branch
        %468 = sbr.rel (%p466) target = $region40
      $region39: #{_lambda_.24} parent=35 // pred_region
        _
      $region40: #{_lambda_.24} parent=35 // pred_fallthru
        _
      // Predicated region
      $region41: #{_lambda_.24} parent=35 // pred_check
        %p469 = pneg %p155
      $region42: #{_lambda_.24} parent=35 // pred_check_branch
        %471 = sbr.rel (%p469) target = $region44
      $region43: #{_lambda_.24} parent=35 // pred_region
        _
      $region44: #{_lambda_.24} parent=35 // pred_fallthru
        _
    $region36: #{_lambda_.24} parent=5 // pred_fallthru
      _
    %p472 = scmp.le.s32.totalorder 2, %s12
    // Predicated region
    $region45: #{_lambda_.24} parent=5 // pred_check
      %p473 = pneg %p472
    $region46: #{_lambda_.24} parent=5 // pred_check_branch
      %475 = sbr.rel (%p473) target = $region48
    $region47: #{_lambda_.24} parent=5 // pred_region
      %s476 = ssub.s32 %s12, 2
      // Predicated region
      $region49: #{_lambda_.24} parent=47 // pred_check
        %p477 = pneg %p135
      $region50: #{_lambda_.24} parent=47 // pred_check_branch
        %479 = sbr.rel (%p477) target = $region52
      $region51: #{_lambda_.24} parent=47 // pred_region
        %p480 = scmp.lt.s32.totalorder %s18, 1
        %s481 = scalar_select %p480, %s18, 1
        %s482 = smul.addr %s481, 2
        %s483 = smul.addr %s482, 8
        %s484 = scalar_lea.vmem %s4, %s483
      $region52: #{_lambda_.24} parent=47 // pred_fallthru
        _
      // Predicated region
      $region53: #{_lambda_.24} parent=47 // pred_check
        %p485 = pneg %p161
      $region54: #{_lambda_.24} parent=47 // pred_check_branch
        %487 = sbr.rel (%p485) target = $region56
      $region55: #{_lambda_.24} parent=47 // pred_region
        %p488 = scmp.lt.s32.totalorder %s18, 1
        %s489 = scalar_select %p488, %s18, 1
        %s490 = smul.addr %s489, 2
        %s491 = smul.addr %s490, 8
        %s492 = scalar_lea.vmem %s5, %s491
      $region56: #{_lambda_.24} parent=47 // pred_fallthru
        _
    $region48: #{_lambda_.24} parent=5 // pred_fallthru
      _
  $region6: #{_lambda_.24} parent=0 // loop_footer
    %s16 = sadd.s32 1, %s12
  $region7: #{_lambda_.24} parent=0 // loop_footer_branch
    %11 = sbr.rel target = $region3
  $region8: #{_lambda_.24} parent=0 // loop_exit
    _

</llo_original>
